<compile_context>
chip_gen: v7x
topology: tpu7x:2x2x1
jax: 0.10.0
libtpu: 0.0.40
codegen_flags: <defaults>
</compile_context>

<pallas_src>
import jax
import jax.numpy as jnp
from jax import lax
from jax.experimental import pallas as pl
from jax.experimental.pallas import tpu as pltpu

EPS = 1e-5
_LANE = 128

# Errors that can signal "pl.Buffered(1) not supported by this jax/Mosaic";
# intentionally NOT a blanket `except Exception`. A genuine, unrelated compile
# failure will also fail the fallback call and propagate from there.
_BUFFERED_FALLBACK_ERRORS = (AttributeError, TypeError, ValueError,
                             NotImplementedError, RuntimeError,
                             pltpu.LoweringException)


# ----------------------------- kernel helpers -------------------------------
def _store_tap(slab_ref, col, img):
    """Store img (H, W, C) into slab columns [col, col+C) with height reflect-pad.

    slab rows 1..H get img rows 0..H-1; padded row 0 gets img row 1 and padded
    row H+1 gets img row H-2 (ReflectionPad2d(1) along H). Leading-axis offsets
    are untiled and the lane offset `col` is a multiple of 128, so all stores
    are layout-trivial.
    """
    H, _, C = img.shape
    slab_ref[1:H + 1, :, col:col + C] = img
    slab_ref[0:1, :, col:col + C] = img[1:2]
    slab_ref[H + 1:H + 2, :, col:col + C] = img[H - 2:H - 1]


def _build_slab(slab_ref, x):
    """Reflect-pad(1) and fuse the three kx taps of x (H, W, C) into slab_ref.

    slab[hp, w, kx*C:(kx+1)*C] = xpad[hp, w + kx] where xpad is x reflect-padded
    by 1 in both H and W (hp, w+kx are padded coordinates).
    """
    H, W, C = x.shape
    # center tap (kx = 1)
    _store_tap(slab_ref, C, x)
    # left-neighbour tap (kx = 0): value at w comes from w-1; w=0 reflects to w=1
    xl = jnp.concatenate([x[:, 1:2, :], x[:, :W - 1, :]], axis=1)
    _store_tap(slab_ref, 0, xl)
    # right-neighbour tap (kx = 2): value at w comes from w+1; w=W-1 reflects W-2
    xr = jnp.concatenate([x[:, 1:, :], x[:, W - 2:W - 1, :]], axis=1)
    _store_tap(slab_ref, 2 * C, xr)


def _conv3x3_in_from_slab(slab_ref, w_ref, b_ref, relu):
    """3x3 conv (+bias) from the prebuilt slab -> InstanceNorm (-> ReLU).

    slab_ref : (H+2, W, 3C) bf16 im2col slab (reflect-padded, kx-fused)
    w_ref    : (3, 3C, C) bf16 VMEM ref, tap-fused weights [ky, kx*Cin+cin, cout]
    b_ref    : (1, C) f32 VMEM ref
    returns (H, W, C) float32
    """
    Hp2, W, C3 = slab_ref.shape
    H, C = Hp2 - 2, C3 // 3
    dims = (((1,), (0,)), ((), ()))

    # 3 MXU matmuls with K = 3C (one per ky), bf16 x bf16 -> f32 accumulator.
    acc = lax.dot_general(slab_ref[0:H].reshape(H * W, C3), w_ref[0], dims,
                          preferred_element_type=jnp.float32)
    for ky in (1, 2):                                              # static unroll
        acc = acc + lax.dot_general(slab_ref[ky:ky + H].reshape(H * W, C3),
                                    w_ref[ky], dims,
                                    preferred_element_type=jnp.float32)
    y = acc + b_ref[...]                                           # (H*W, C) f32

    # Fused one-pass InstanceNorm (f32 stats): biased var = E[y^2] - E[y]^2,
    # matching nn.InstanceNorm2d(affine=False, eps=1e-5).
    inv_n = 1.0 / (H * W)
    mean = jnp.sum(y, axis=0, keepdims=True) * inv_n               # (1, C)
    var = jnp.sum(y * y, axis=0, keepdims=True) * inv_n - mean * mean
    var = jnp.maximum(var, 0.0)                                    # fp-cancellation guard
    y = (y - mean) * lax.rsqrt(var + EPS)
    if relu:
        y = jnp.maximum(y, 0.0)
    return y.reshape(H, W, C)


def resnet_block_kernel(x_ref, w1_ref, b1_ref, w2_ref, b2_ref, o_ref, slab_ref):
    # Cast the MXU operand to bf16; the residual/epilogue stays f32.
    x_bf = x_ref[0].astype(jnp.bfloat16)                           # (H, W, C)

    _build_slab(slab_ref, x_bf)
    y = _conv3x3_in_from_slab(slab_ref, w1_ref, b1_ref, relu=True)
    # TODO(synk): dropout path omitted (use_dropout=False configuration).
    _build_slab(slab_ref, y.astype(jnp.bfloat16))                  # slab reused
    y = _conv3x3_in_from_slab(slab_ref, w2_ref, b2_ref, relu=False)

    # Residual add in f32; re-read the (still resident) input block instead of
    # holding an f32 copy live across both convs.
    o_ref[0] = (x_ref[0].astype(jnp.float32) + y).astype(o_ref.dtype)


# ------------------------------ host wrappers --------------------------------
def _vmem_limit_bytes(H, W, C, single_buffer_weights):
    """Scoped VMEM limit sized from the real buffers, capped per generation."""
    img_f32 = H * W * C * 4
    w_bufs = 1 if single_buffer_weights else 2
    need = (
        2 * 2 * img_f32                                  # double-buffered in/out blocks
        + w_bufs * 2 * (3 * 3 * C * C * 2 + C * 4)       # bf16 weights + f32 biases
        + (H + 2) * W * 3 * C * 2                        # persistent bf16 im2col slab
        + 6 * img_f32                                    # live f32/bf16 temporaries
        + (16 << 20)                                     # Mosaic internal scratch headroom
    )
    try:
        cap = pltpu.get_tpu_info().vmem_capacity_bytes   # 128 MiB v5e/v6e, 64 MiB v7x
    except Exception:
        cap = 64 << 20                                   # assume the smallest (v7x)
    return int(min(max(need, 32 << 20), cap - (12 << 20)))


def _forward(x_nhwc, w1p, b1p, w2p, b2p, *, single_buffer_weights):
    B, H, W, C = x_nhwc.shape

    def const_spec(shape):
        idx = lambda b: (0,) * len(shape)
        if single_buffer_weights:
            # Grid-invariant operands: no need for double buffering.
            return pl.BlockSpec(shape, idx, pipeline_mode=pl.Buffered(1))
        return pl.BlockSpec(shape, idx)

    cost = pl.CostEstimate(
        flops=2 * 2 * B * H * W * 9 * C * C,             # 2 convs, 2 flops / MAC
        transcendentals=2 * B * C,                       # rsqrt per channel per norm
        bytes_accessed=(2 * B * H * W * C * 4            # in + out activations (f32)
                        + 2 * 3 * 3 * C * C * 2          # bf16 weights
                        + 2 * C * 4),                    # biases
    )

    return pl.pallas_call(
        resnet_block_kernel,
        out_shape=jax.ShapeDtypeStruct((B, H, W, C), x_nhwc.dtype),
        grid_spec=pltpu.PrefetchScalarGridSpec(
            num_scalar_prefetch=0,
            grid=(B,),
            in_specs=[
                pl.BlockSpec((1, H, W, C), lambda b: (b, 0, 0, 0)),
                const_spec((3, 3 * C, C)),
                const_spec((1, C)),
                const_spec((3, 3 * C, C)),
                const_spec((1, C)),
            ],
            out_specs=pl.BlockSpec((1, H, W, C), lambda b: (b, 0, 0, 0)),
            scratch_shapes=[pltpu.VMEM((H + 2, W, 3 * C), jnp.bfloat16)],
        ),
        compiler_params=pltpu.CompilerParams(
            # batch axis is parallel (megacore sharding when per-chip B >= 2)
            dimension_semantics=("parallel",),
            vmem_limit_bytes=_vmem_limit_bytes(H, W, C, single_buffer_weights),
        ),
        cost_estimate=cost,
    )(x_nhwc, w1p, b1p, w2p, b2p)


def _pad_channels(x_nhwc, w1, b1, w2, b2):
    """Zero-pad channels to a lane multiple (128) so the kernel runs lane-dense."""
    C = x_nhwc.shape[-1]
    Cp = ((C + _LANE - 1) // _LANE) * _LANE
    if Cp == C:
        return x_nhwc, w1, b1, w2, b2, C
    dc = Cp - C
    x_nhwc = jnp.pad(x_nhwc, ((0, 0), (0, 0), (0, 0), (0, dc)))
    w1 = jnp.pad(w1, ((0, dc), (0, dc), (0, 0), (0, 0)))
    w2 = jnp.pad(w2, ((0, dc), (0, dc), (0, 0), (0, 0)))
    b1 = jnp.pad(b1, (0, dc))
    b2 = jnp.pad(b2, (0, dc))
    return x_nhwc, w1, b1, w2, b2, C


def resnet_block_nhwc(x_nhwc, w1, b1, w2, b2):
    """NHWC entry point (preferred when the surrounding model is NHWC: avoids
    the NCHW<->NHWC HBM round-trips). w*: (Cout, Cin, 3, 3); b*: (Cout,)."""
    B, H, W, C = x_nhwc.shape
    assert H >= 2 and W >= 2, "ReflectionPad2d(1) requires H, W >= 2"

    x_p, w1_p, b1_p, w2_p, b2_p, c_orig = _pad_channels(x_nhwc, w1, b1, w2, b2)
    Cp = x_p.shape[-1]

    # Repack weights: (Cout, Cin, ky, kx) -> (ky, kx*Cin + cin, Cout), bf16.
    w1r = jnp.transpose(w1_p, (2, 3, 1, 0)).reshape(3, 3 * Cp, Cp).astype(jnp.bfloat16)
    w2r = jnp.transpose(w2_p, (2, 3, 1, 0)).reshape(3, 3 * Cp, Cp).astype(jnp.bfloat16)
    b1r = b1_p.reshape(1, Cp).astype(jnp.float32)
    b2r = b2_p.reshape(1, Cp).astype(jnp.float32)

    try:
        out = _forward(x_p, w1r, b1r, w2r, b2r, single_buffer_weights=True)
    except _BUFFERED_FALLBACK_ERRORS:
        # pl.Buffered(1) rejected by this jax/Mosaic version: fall back to the
        # default (double-buffered) weight blocks. Any unrelated compile
        # failure will re-raise from this fallback call as well.
        out = _forward(x_p, w1r, b1r, w2r, b2r, single_buffer_weights=False)

    return out[..., :c_orig] if Cp != c_orig else out


def resnet_block(x_nchw, w1, b1, w2, b2):
    """PyTorch-layout entry point. x_nchw: (B, C, H, W); w*: (Cout, Cin, 3, 3).

    NOTE: the two transposes below are full HBM round-trips of the activation;
    chains of blocks should use resnet_block_nhwc and stay NHWC throughout.
    """
    x = jnp.transpose(x_nchw, (0, 2, 3, 1))                        # NHWC
    out = resnet_block_nhwc(x, w1, b1, w2, b2)
    return jnp.transpose(out, (0, 3, 1, 2))                        # back to NCHW


# ---------------- pure-JAX reference (for correctness check) ----------------
def _ref_forward(x_nchw, w1, b1, w2, b2):
    x = jnp.transpose(x_nchw, (0, 2, 3, 1))                        # NHWC

    def conv_in_relu(h, w, b, relu):
        hp = jnp.pad(h, ((0, 0), (1, 1), (1, 1), (0, 0)), mode="reflect")
        y = lax.conv_general_dilated(
            hp, jnp.transpose(w, (2, 3, 1, 0)),                    # HWIO
            window_strides=(1, 1), padding="VALID",
            dimension_numbers=("NHWC", "HWIO", "NHWC"),
        ) + b
        mean = jnp.mean(y, axis=(1, 2), keepdims=True)
        var = jnp.mean((y - mean) ** 2, axis=(1, 2), keepdims=True)
        y = (y - mean) * lax.rsqrt(var + EPS)
        return jnp.maximum(y, 0.0) if relu else y

    y = conv_in_relu(x, w1, b1, relu=True)
    y = conv_in_relu(y, w2, b2, relu=False)
    return jnp.transpose(x + y, (0, 3, 1, 2))


if __name__ == "__main__":
    B, C, H, W = 2, 4, 16, 16
    key = jax.random.PRNGKey(0)
    kx_, k1, kb1, k2, kb2 = jax.random.split(key, 5)

    x = jax.random.normal(kx_, (B, C, H, W), dtype=jnp.float32)
    w1 = 0.1 * jax.random.normal(k1, (C, C, 3, 3), dtype=jnp.float32)
    b1 = 0.1 * jax.random.normal(kb1, (C,), dtype=jnp.float32)
    w2 = 0.1 * jax.random.normal(k2, (C, C, 3, 3), dtype=jnp.float32)
    b2 = 0.1 * jax.random.normal(kb2, (C,), dtype=jnp.float32)

    out = jax.block_until_ready(resnet_block(x, w1, b1, w2, b2))
    ref = jax.block_until_ready(_ref_forward(x, w1, b1, w2, b2))

    assert out.shape == (B, C, H, W)
    # bf16 MXU operands (f32 reference): ~1e-2-level absolute error on the
    # O(1) instance-normalized values.
    max_err = float(jnp.max(jnp.abs(out - ref)))
    mean_err = float(jnp.mean(jnp.abs(out - ref)))
    assert max_err < 1e-1, f"mismatch vs reference: max abs err = {max_err}"
    assert mean_err < 1e-2, f"mismatch vs reference: mean abs err = {mean_err}"

    print("KERNEL_OK")
</pallas_src>

<mosaic_0001>
module attributes {stable_mosaic.version = 11 : i64} {
  func.func @resnet_block_kernel(%arg0: i32, %arg1: memref<1x16x16x128xf32, #tpu.memory_space<vmem>>, %arg2: memref<3x384x128xbf16, #tpu.memory_space<vmem>>, %arg3: memref<1x128xf32, #tpu.memory_space<vmem>>, %arg4: memref<3x384x128xbf16, #tpu.memory_space<vmem>>, %arg5: memref<1x128xf32, #tpu.memory_space<vmem>>, %arg6: memref<1x16x16x128xf32, #tpu.memory_space<vmem>>, %arg7: memref<18x16x384xbf16, #tpu.memory_space<vmem>>) attributes {dimension_semantics = [#tpu.dimension_semantics<parallel>], iteration_bounds = array<i64: 2>, scalar_prefetch = 0 : i64, scratch_operands = 1 : i64, tpu.core_type = #tpu.core_type<tc>, window_params = [{transform_indices = @transform_0, window_bounds = array<i64: 1, 16, 16, 128>}, {pipeline_mode = #tpu.pipeline_mode<synchronous>, transform_indices = @transform_1, window_bounds = array<i64: 3, 384, 128>}, {pipeline_mode = #tpu.pipeline_mode<synchronous>, transform_indices = @transform_2, window_bounds = array<i64: 1, 128>}, {pipeline_mode = #tpu.pipeline_mode<synchronous>, transform_indices = @transform_3, window_bounds = array<i64: 3, 384, 128>}, {pipeline_mode = #tpu.pipeline_mode<synchronous>, transform_indices = @transform_4, window_bounds = array<i64: 1, 128>}, {transform_indices = @transform_5, window_bounds = array<i64: 1, 16, 16, 128>}]} {
    %c0 = arith.constant 0 : index
    %c0_0 = arith.constant 0 : index
    %c0_1 = arith.constant 0 : index
    %c0_2 = arith.constant 0 : index
    %0 = vector.load %arg1[%c0, %c0_0, %c0_1, %c0_2] : memref<1x16x16x128xf32, #tpu.memory_space<vmem>>, vector<1x16x16x128xf32>
    %1 = vector.shape_cast %0 : vector<1x16x16x128xf32> to vector<16x16x128xf32>
    %2 = arith.truncf %1 : vector<16x16x128xf32> to vector<16x16x128xbf16>
    %c1 = arith.constant 1 : index
    %c0_3 = arith.constant 0 : index
    %c128 = arith.constant 128 : index
    %3 = vector.load %arg7[%c1, %c0_3, %c128] : memref<18x16x384xbf16, #tpu.memory_space<vmem>>, vector<16x16x128xbf16>
    tpu.vector_store %arg7[%c1, %c0_3, %c128], %2 {strides = array<i32>} : memref<18x16x384xbf16, #tpu.memory_space<vmem>>, vector<16x16x128xbf16>,
    %4 = vector.extract_strided_slice %2 {offsets = [1, 0, 0], sizes = [1, 16, 128], strides = [1, 1, 1]} : vector<16x16x128xbf16> to vector<1x16x128xbf16>
    %c0_4 = arith.constant 0 : index
    %c0_5 = arith.constant 0 : index
    %c128_6 = arith.constant 128 : index
    %5 = vector.load %arg7[%c0_4, %c0_5, %c128_6] : memref<18x16x384xbf16, #tpu.memory_space<vmem>>, vector<1x16x128xbf16>
    tpu.vector_store %arg7[%c0_4, %c0_5, %c128_6], %4 {strides = array<i32>} : memref<18x16x384xbf16, #tpu.memory_space<vmem>>, vector<1x16x128xbf16>,
    %6 = vector.extract_strided_slice %2 {offsets = [14, 0, 0], sizes = [1, 16, 128], strides = [1, 1, 1]} : vector<16x16x128xbf16> to vector<1x16x128xbf16>
    %c17 = arith.constant 17 : index
    %c0_7 = arith.constant 0 : index
    %c128_8 = arith.constant 128 : index
    %7 = vector.load %arg7[%c17, %c0_7, %c128_8] : memref<18x16x384xbf16, #tpu.memory_space<vmem>>, vector<1x16x128xbf16>
    tpu.vector_store %arg7[%c17, %c0_7, %c128_8], %6 {strides = array<i32>} : memref<18x16x384xbf16, #tpu.memory_space<vmem>>, vector<1x16x128xbf16>,
    %8 = vector.extract_strided_slice %2 {offsets = [0, 1, 0], sizes = [16, 1, 128], strides = [1, 1, 1]} : vector<16x16x128xbf16> to vector<16x1x128xbf16>
    %9 = vector.extract_strided_slice %2 {offsets = [0, 0, 0], sizes = [16, 15, 128], strides = [1, 1, 1]} : vector<16x16x128xbf16> to vector<16x15x128xbf16>
    %10 = tpu.concatenate %8, %9 in 1 : vector<16x1x128xbf16>, vector<16x15x128xbf16> -> vector<16x16x128xbf16>
    %c1_9 = arith.constant 1 : index
    %c0_10 = arith.constant 0 : index
    %c0_11 = arith.constant 0 : index
    %11 = vector.load %arg7[%c1_9, %c0_10, %c0_11] : memref<18x16x384xbf16, #tpu.memory_space<vmem>>, vector<16x16x128xbf16>
    tpu.vector_store %arg7[%c1_9, %c0_10, %c0_11], %10 {strides = array<i32>} : memref<18x16x384xbf16, #tpu.memory_space<vmem>>, vector<16x16x128xbf16>,
    %12 = vector.extract_strided_slice %10 {offsets = [1, 0, 0], sizes = [1, 16, 128], strides = [1, 1, 1]} : vector<16x16x128xbf16> to vector<1x16x128xbf16>
    %c0_12 = arith.constant 0 : index
    %c0_13 = arith.constant 0 : index
    %c0_14 = arith.constant 0 : index
    %13 = vector.load %arg7[%c0_12, %c0_13, %c0_14] : memref<18x16x384xbf16, #tpu.memory_space<vmem>>, vector<1x16x128xbf16>
    tpu.vector_store %arg7[%c0_12, %c0_13, %c0_14], %12 {strides = array<i32>} : memref<18x16x384xbf16, #tpu.memory_space<vmem>>, vector<1x16x128xbf16>,
    %14 = vector.extract_strided_slice %10 {offsets = [14, 0, 0], sizes = [1, 16, 128], strides = [1, 1, 1]} : vector<16x16x128xbf16> to vector<1x16x128xbf16>
    %c17_15 = arith.constant 17 : index
    %c0_16 = arith.constant 0 : index
    %c0_17 = arith.constant 0 : index
    %15 = vector.load %arg7[%c17_15, %c0_16, %c0_17] : memref<18x16x384xbf16, #tpu.memory_space<vmem>>, vector<1x16x128xbf16>
    tpu.vector_store %arg7[%c17_15, %c0_16, %c0_17], %14 {strides = array<i32>} : memref<18x16x384xbf16, #tpu.memory_space<vmem>>, vector<1x16x128xbf16>,
    %16 = vector.extract_strided_slice %2 {offsets = [0, 1, 0], sizes = [16, 15, 128], strides = [1, 1, 1]} : vector<16x16x128xbf16> to vector<16x15x128xbf16>
    %17 = vector.extract_strided_slice %2 {offsets = [0, 14, 0], sizes = [16, 1, 128], strides = [1, 1, 1]} : vector<16x16x128xbf16> to vector<16x1x128xbf16>
    %18 = tpu.concatenate %16, %17 in 1 : vector<16x15x128xbf16>, vector<16x1x128xbf16> -> vector<16x16x128xbf16>
    %c1_18 = arith.constant 1 : index
    %c0_19 = arith.constant 0 : index
    %c256 = arith.constant 256 : index
    %19 = vector.load %arg7[%c1_18, %c0_19, %c256] : memref<18x16x384xbf16, #tpu.memory_space<vmem>>, vector<16x16x128xbf16>
    tpu.vector_store %arg7[%c1_18, %c0_19, %c256], %18 {strides = array<i32>} : memref<18x16x384xbf16, #tpu.memory_space<vmem>>, vector<16x16x128xbf16>,
    %20 = vector.extract_strided_slice %18 {offsets = [1, 0, 0], sizes = [1, 16, 128], strides = [1, 1, 1]} : vector<16x16x128xbf16> to vector<1x16x128xbf16>
    %c0_20 = arith.constant 0 : index
    %c0_21 = arith.constant 0 : index
    %c256_22 = arith.constant 256 : index
    %21 = vector.load %arg7[%c0_20, %c0_21, %c256_22] : memref<18x16x384xbf16, #tpu.memory_space<vmem>>, vector<1x16x128xbf16>
    tpu.vector_store %arg7[%c0_20, %c0_21, %c256_22], %20 {strides = array<i32>} : memref<18x16x384xbf16, #tpu.memory_space<vmem>>, vector<1x16x128xbf16>,
    %22 = vector.extract_strided_slice %18 {offsets = [14, 0, 0], sizes = [1, 16, 128], strides = [1, 1, 1]} : vector<16x16x128xbf16> to vector<1x16x128xbf16>
    %c17_23 = arith.constant 17 : index
    %c0_24 = arith.constant 0 : index
    %c256_25 = arith.constant 256 : index
    %23 = vector.load %arg7[%c17_23, %c0_24, %c256_25] : memref<18x16x384xbf16, #tpu.memory_space<vmem>>, vector<1x16x128xbf16>
    tpu.vector_store %arg7[%c17_23, %c0_24, %c256_25], %22 {strides = array<i32>} : memref<18x16x384xbf16, #tpu.memory_space<vmem>>, vector<1x16x128xbf16>,
    %c0_26 = arith.constant 0 : index
    %c0_27 = arith.constant 0 : index
    %c0_28 = arith.constant 0 : index
    %24 = vector.load %arg7[%c0_26, %c0_27, %c0_28] : memref<18x16x384xbf16, #tpu.memory_space<vmem>>, vector<16x16x384xbf16>
    %25 = vector.shape_cast %24 : vector<16x16x384xbf16> to vector<256x384xbf16>
    %c0_29 = arith.constant 0 : index
    %c0_30 = arith.constant 0 : index
    %c0_31 = arith.constant 0 : index
    %26 = vector.load %arg2[%c0_29, %c0_30, %c0_31] : memref<3x384x128xbf16, #tpu.memory_space<vmem>>, vector<1x384x128xbf16>
    %27 = vector.shape_cast %26 : vector<1x384x128xbf16> to vector<384x128xbf16>
    %cst = arith.constant dense<0.000000e+00> : vector<256x128xf32>
    %28 = tpu.matmul %25, %27, %cst {dimension_numbers = #tpu.dot_dimension_numbers<[1], [0], [0], [1], [0, 0, 1, 1], [], []>} : vector<256x384xbf16>, vector<384x128xbf16>, vector<256x128xf32> -> vector<256x128xf32>
    %c1_32 = arith.constant 1 : index
    %c0_33 = arith.constant 0 : index
    %c0_34 = arith.constant 0 : index
    %29 = vector.load %arg7[%c1_32, %c0_33, %c0_34] : memref<18x16x384xbf16, #tpu.memory_space<vmem>>, vector<16x16x384xbf16>
    %30 = vector.shape_cast %29 : vector<16x16x384xbf16> to vector<256x384xbf16>
    %c1_35 = arith.constant 1 : index
    %c0_36 = arith.constant 0 : index
    %c0_37 = arith.constant 0 : index
    %31 = vector.load %arg2[%c1_35, %c0_36, %c0_37] : memref<3x384x128xbf16, #tpu.memory_space<vmem>>, vector<1x384x128xbf16>
    %32 = vector.shape_cast %31 : vector<1x384x128xbf16> to vector<384x128xbf16>
    %cst_38 = arith.constant dense<0.000000e+00> : vector<256x128xf32>
    %33 = tpu.matmul %30, %32, %cst_38 {dimension_numbers = #tpu.dot_dimension_numbers<[1], [0], [0], [1], [0, 0, 1, 1], [], []>} : vector<256x384xbf16>, vector<384x128xbf16>, vector<256x128xf32> -> vector<256x128xf32>
    %34 = arith.addf %28, %33 : vector<256x128xf32>
    %c2 = arith.constant 2 : index
    %c0_39 = arith.constant 0 : index
    %c0_40 = arith.constant 0 : index
    %35 = vector.load %arg7[%c2, %c0_39, %c0_40] : memref<18x16x384xbf16, #tpu.memory_space<vmem>>, vector<16x16x384xbf16>
    %36 = vector.shape_cast %35 : vector<16x16x384xbf16> to vector<256x384xbf16>
    %c2_41 = arith.constant 2 : index
    %c0_42 = arith.constant 0 : index
    %c0_43 = arith.constant 0 : index
    %37 = vector.load %arg2[%c2_41, %c0_42, %c0_43] : memref<3x384x128xbf16, #tpu.memory_space<vmem>>, vector<1x384x128xbf16>
    %38 = vector.shape_cast %37 : vector<1x384x128xbf16> to vector<384x128xbf16>
    %cst_44 = arith.constant dense<0.000000e+00> : vector<256x128xf32>
    %39 = tpu.matmul %36, %38, %cst_44 {dimension_numbers = #tpu.dot_dimension_numbers<[1], [0], [0], [1], [0, 0, 1, 1], [], []>} : vector<256x384xbf16>, vector<384x128xbf16>, vector<256x128xf32> -> vector<256x128xf32>
    %40 = arith.addf %34, %39 : vector<256x128xf32>
    %c0_45 = arith.constant 0 : index
    %c0_46 = arith.constant 0 : index
    %41 = vector.load %arg3[%c0_45, %c0_46] : memref<1x128xf32, #tpu.memory_space<vmem>>, vector<1x128xf32>
    %42 = vector.broadcast %41 : vector<1x128xf32> to vector<256x128xf32>
    %43 = arith.addf %40, %42 : vector<256x128xf32>
    %cst_47 = arith.constant dense<0.000000e+00> : vector<128xf32>
    %44 = vector.multi_reduction <add>, %43, %cst_47 [0] : vector<256x128xf32> to vector<128xf32>
    %45 = vector.shape_cast %44 : vector<128xf32> to vector<1x128xf32>
    %cst_48 = arith.constant 3.906250e-03 : f32
    %46 = vector.broadcast %cst_48 : f32 to vector<1x128xf32>
    %47 = arith.mulf %45, %46 : vector<1x128xf32>
    %48 = arith.mulf %43, %43 : vector<256x128xf32>
    %cst_49 = arith.constant dense<0.000000e+00> : vector<128xf32>
    %49 = vector.multi_reduction <add>, %48, %cst_49 [0] : vector<256x128xf32> to vector<128xf32>
    %50 = vector.shape_cast %49 : vector<128xf32> to vector<1x128xf32>
    %cst_50 = arith.constant 3.906250e-03 : f32
    %51 = vector.broadcast %cst_50 : f32 to vector<1x128xf32>
    %52 = arith.mulf %50, %51 : vector<1x128xf32>
    %53 = arith.mulf %47, %47 : vector<1x128xf32>
    %54 = arith.subf %52, %53 : vector<1x128xf32>
    %cst_51 = arith.constant 0.000000e+00 : f32
    %55 = vector.broadcast %cst_51 : f32 to vector<1x128xf32>
    %56 = arith.maximumf %54, %55 : vector<1x128xf32>
    %57 = vector.broadcast %47 : vector<1x128xf32> to vector<256x128xf32>
    %58 = arith.subf %43, %57 : vector<256x128xf32>
    %cst_52 = arith.constant 9.99999974E-6 : f32
    %59 = vector.broadcast %cst_52 : f32 to vector<1x128xf32>
    %60 = arith.addf %56, %59 : vector<1x128xf32>
    %61 = math.rsqrt %60 : vector<1x128xf32>
    %62 = vector.broadcast %61 : vector<1x128xf32> to vector<256x128xf32>
    %63 = arith.mulf %58, %62 : vector<256x128xf32>
    %cst_53 = arith.constant 0.000000e+00 : f32
    %64 = vector.broadcast %cst_53 : f32 to vector<256x128xf32>
    %65 = arith.maximumf %63, %64 : vector<256x128xf32>
    %66 = vector.shape_cast %65 : vector<256x128xf32> to vector<16x16x128xf32>
    %67 = arith.truncf %66 : vector<16x16x128xf32> to vector<16x16x128xbf16>
    %c1_54 = arith.constant 1 : index
    %c0_55 = arith.constant 0 : index
    %c128_56 = arith.constant 128 : index
    %68 = vector.load %arg7[%c1_54, %c0_55, %c128_56] : memref<18x16x384xbf16, #tpu.memory_space<vmem>>, vector<16x16x128xbf16>
    tpu.vector_store %arg7[%c1_54, %c0_55, %c128_56], %67 {strides = array<i32>} : memref<18x16x384xbf16, #tpu.memory_space<vmem>>, vector<16x16x128xbf16>,
    %69 = vector.extract_strided_slice %67 {offsets = [1, 0, 0], sizes = [1, 16, 128], strides = [1, 1, 1]} : vector<16x16x128xbf16> to vector<1x16x128xbf16>
    %c0_57 = arith.constant 0 : index
    %c0_58 = arith.constant 0 : index
    %c128_59 = arith.constant 128 : index
    %70 = vector.load %arg7[%c0_57, %c0_58, %c128_59] : memref<18x16x384xbf16, #tpu.memory_space<vmem>>, vector<1x16x128xbf16>
    tpu.vector_store %arg7[%c0_57, %c0_58, %c128_59], %69 {strides = array<i32>} : memref<18x16x384xbf16, #tpu.memory_space<vmem>>, vector<1x16x128xbf16>,
    %71 = vector.extract_strided_slice %67 {offsets = [14, 0, 0], sizes = [1, 16, 128], strides = [1, 1, 1]} : vector<16x16x128xbf16> to vector<1x16x128xbf16>
    %c17_60 = arith.constant 17 : index
    %c0_61 = arith.constant 0 : index
    %c128_62 = arith.constant 128 : index
    %72 = vector.load %arg7[%c17_60, %c0_61, %c128_62] : memref<18x16x384xbf16, #tpu.memory_space<vmem>>, vector<1x16x128xbf16>
    tpu.vector_store %arg7[%c17_60, %c0_61, %c128_62], %71 {strides = array<i32>} : memref<18x16x384xbf16, #tpu.memory_space<vmem>>, vector<1x16x128xbf16>,
    %73 = vector.extract_strided_slice %67 {offsets = [0, 1, 0], sizes = [16, 1, 128], strides = [1, 1, 1]} : vector<16x16x128xbf16> to vector<16x1x128xbf16>
    %74 = vector.extract_strided_slice %67 {offsets = [0, 0, 0], sizes = [16, 15, 128], strides = [1, 1, 1]} : vector<16x16x128xbf16> to vector<16x15x128xbf16>
    %75 = tpu.concatenate %73, %74 in 1 : vector<16x1x128xbf16>, vector<16x15x128xbf16> -> vector<16x16x128xbf16>
    %c1_63 = arith.constant 1 : index
    %c0_64 = arith.constant 0 : index
    %c0_65 = arith.constant 0 : index
    %76 = vector.load %arg7[%c1_63, %c0_64, %c0_65] : memref<18x16x384xbf16, #tpu.memory_space<vmem>>, vector<16x16x128xbf16>
    tpu.vector_store %arg7[%c1_63, %c0_64, %c0_65], %75 {strides = array<i32>} : memref<18x16x384xbf16, #tpu.memory_space<vmem>>, vector<16x16x128xbf16>,
    %77 = vector.extract_strided_slice %75 {offsets = [1, 0, 0], sizes = [1, 16, 128], strides = [1, 1, 1]} : vector<16x16x128xbf16> to vector<1x16x128xbf16>
    %c0_66 = arith.constant 0 : index
    %c0_67 = arith.constant 0 : index
    %c0_68 = arith.constant 0 : index
    %78 = vector.load %arg7[%c0_66, %c0_67, %c0_68] : memref<18x16x384xbf16, #tpu.memory_space<vmem>>, vector<1x16x128xbf16>
    tpu.vector_store %arg7[%c0_66, %c0_67, %c0_68], %77 {strides = array<i32>} : memref<18x16x384xbf16, #tpu.memory_space<vmem>>, vector<1x16x128xbf16>,
    %79 = vector.extract_strided_slice %75 {offsets = [14, 0, 0], sizes = [1, 16, 128], strides = [1, 1, 1]} : vector<16x16x128xbf16> to vector<1x16x128xbf16>
    %c17_69 = arith.constant 17 : index
    %c0_70 = arith.constant 0 : index
    %c0_71 = arith.constant 0 : index
    %80 = vector.load %arg7[%c17_69, %c0_70, %c0_71] : memref<18x16x384xbf16, #tpu.memory_space<vmem>>, vector<1x16x128xbf16>
    tpu.vector_store %arg7[%c17_69, %c0_70, %c0_71], %79 {strides = array<i32>} : memref<18x16x384xbf16, #tpu.memory_space<vmem>>, vector<1x16x128xbf16>,
    %81 = vector.extract_strided_slice %67 {offsets = [0, 1, 0], sizes = [16, 15, 128], strides = [1, 1, 1]} : vector<16x16x128xbf16> to vector<16x15x128xbf16>
    %82 = vector.extract_strided_slice %67 {offsets = [0, 14, 0], sizes = [16, 1, 128], strides = [1, 1, 1]} : vector<16x16x128xbf16> to vector<16x1x128xbf16>
    %83 = tpu.concatenate %81, %82 in 1 : vector<16x15x128xbf16>, vector<16x1x128xbf16> -> vector<16x16x128xbf16>
    %c1_72 = arith.constant 1 : index
    %c0_73 = arith.constant 0 : index
    %c256_74 = arith.constant 256 : index
    %84 = vector.load %arg7[%c1_72, %c0_73, %c256_74] : memref<18x16x384xbf16, #tpu.memory_space<vmem>>, vector<16x16x128xbf16>
    tpu.vector_store %arg7[%c1_72, %c0_73, %c256_74], %83 {strides = array<i32>} : memref<18x16x384xbf16, #tpu.memory_space<vmem>>, vector<16x16x128xbf16>,
    %85 = vector.extract_strided_slice %83 {offsets = [1, 0, 0], sizes = [1, 16, 128], strides = [1, 1, 1]} : vector<16x16x128xbf16> to vector<1x16x128xbf16>
    %c0_75 = arith.constant 0 : index
    %c0_76 = arith.constant 0 : index
    %c256_77 = arith.constant 256 : index
    %86 = vector.load %arg7[%c0_75, %c0_76, %c256_77] : memref<18x16x384xbf16, #tpu.memory_space<vmem>>, vector<1x16x128xbf16>
    tpu.vector_store %arg7[%c0_75, %c0_76, %c256_77], %85 {strides = array<i32>} : memref<18x16x384xbf16, #tpu.memory_space<vmem>>, vector<1x16x128xbf16>,
    %87 = vector.extract_strided_slice %83 {offsets = [14, 0, 0], sizes = [1, 16, 128], strides = [1, 1, 1]} : vector<16x16x128xbf16> to vector<1x16x128xbf16>
    %c17_78 = arith.constant 17 : index
    %c0_79 = arith.constant 0 : index
    %c256_80 = arith.constant 256 : index
    %88 = vector.load %arg7[%c17_78, %c0_79, %c256_80] : memref<18x16x384xbf16, #tpu.memory_space<vmem>>, vector<1x16x128xbf16>
    tpu.vector_store %arg7[%c17_78, %c0_79, %c256_80], %87 {strides = array<i32>} : memref<18x16x384xbf16, #tpu.memory_space<vmem>>, vector<1x16x128xbf16>,
    %c0_81 = arith.constant 0 : index
    %c0_82 = arith.constant 0 : index
    %c0_83 = arith.constant 0 : index
    %89 = vector.load %arg7[%c0_81, %c0_82, %c0_83] : memref<18x16x384xbf16, #tpu.memory_space<vmem>>, vector<16x16x384xbf16>
    %90 = vector.shape_cast %89 : vector<16x16x384xbf16> to vector<256x384xbf16>
    %c0_84 = arith.constant 0 : index
    %c0_85 = arith.constant 0 : index
    %c0_86 = arith.constant 0 : index
    %91 = vector.load %arg4[%c0_84, %c0_85, %c0_86] : memref<3x384x128xbf16, #tpu.memory_space<vmem>>, vector<1x384x128xbf16>
    %92 = vector.shape_cast %91 : vector<1x384x128xbf16> to vector<384x128xbf16>
    %cst_87 = arith.constant dense<0.000000e+00> : vector<256x128xf32>
    %93 = tpu.matmul %90, %92, %cst_87 {dimension_numbers = #tpu.dot_dimension_numbers<[1], [0], [0], [1], [0, 0, 1, 1], [], []>} : vector<256x384xbf16>, vector<384x128xbf16>, vector<256x128xf32> -> vector<256x128xf32>
    %c1_88 = arith.constant 1 : index
    %c0_89 = arith.constant 0 : index
    %c0_90 = arith.constant 0 : index
    %94 = vector.load %arg7[%c1_88, %c0_89, %c0_90] : memref<18x16x384xbf16, #tpu.memory_space<vmem>>, vector<16x16x384xbf16>
    %95 = vector.shape_cast %94 : vector<16x16x384xbf16> to vector<256x384xbf16>
    %c1_91 = arith.constant 1 : index
    %c0_92 = arith.constant 0 : index
    %c0_93 = arith.constant 0 : index
    %96 = vector.load %arg4[%c1_91, %c0_92, %c0_93] : memref<3x384x128xbf16, #tpu.memory_space<vmem>>, vector<1x384x128xbf16>
    %97 = vector.shape_cast %96 : vector<1x384x128xbf16> to vector<384x128xbf16>
    %cst_94 = arith.constant dense<0.000000e+00> : vector<256x128xf32>
    %98 = tpu.matmul %95, %97, %cst_94 {dimension_numbers = #tpu.dot_dimension_numbers<[1], [0], [0], [1], [0, 0, 1, 1], [], []>} : vector<256x384xbf16>, vector<384x128xbf16>, vector<256x128xf32> -> vector<256x128xf32>
    %99 = arith.addf %93, %98 : vector<256x128xf32>
    %c2_95 = arith.constant 2 : index
    %c0_96 = arith.constant 0 : index
    %c0_97 = arith.constant 0 : index
    %100 = vector.load %arg7[%c2_95, %c0_96, %c0_97] : memref<18x16x384xbf16, #tpu.memory_space<vmem>>, vector<16x16x384xbf16>
    %101 = vector.shape_cast %100 : vector<16x16x384xbf16> to vector<256x384xbf16>
    %c2_98 = arith.constant 2 : index
    %c0_99 = arith.constant 0 : index
    %c0_100 = arith.constant 0 : index
    %102 = vector.load %arg4[%c2_98, %c0_99, %c0_100] : memref<3x384x128xbf16, #tpu.memory_space<vmem>>, vector<1x384x128xbf16>
    %103 = vector.shape_cast %102 : vector<1x384x128xbf16> to vector<384x128xbf16>
    %cst_101 = arith.constant dense<0.000000e+00> : vector<256x128xf32>
    %104 = tpu.matmul %101, %103, %cst_101 {dimension_numbers = #tpu.dot_dimension_numbers<[1], [0], [0], [1], [0, 0, 1, 1], [], []>} : vector<256x384xbf16>, vector<384x128xbf16>, vector<256x128xf32> -> vector<256x128xf32>
    %105 = arith.addf %99, %104 : vector<256x128xf32>
    %c0_102 = arith.constant 0 : index
    %c0_103 = arith.constant 0 : index
    %106 = vector.load %arg5[%c0_102, %c0_103] : memref<1x128xf32, #tpu.memory_space<vmem>>, vector<1x128xf32>
    %107 = vector.broadcast %106 : vector<1x128xf32> to vector<256x128xf32>
    %108 = arith.addf %105, %107 : vector<256x128xf32>
    %cst_104 = arith.constant dense<0.000000e+00> : vector<128xf32>
    %109 = vector.multi_reduction <add>, %108, %cst_104 [0] : vector<256x128xf32> to vector<128xf32>
    %110 = vector.shape_cast %109 : vector<128xf32> to vector<1x128xf32>
    %cst_105 = arith.constant 3.906250e-03 : f32
    %111 = vector.broadcast %cst_105 : f32 to vector<1x128xf32>
    %112 = arith.mulf %110, %111 : vector<1x128xf32>
    %113 = arith.mulf %108, %108 : vector<256x128xf32>
    %cst_106 = arith.constant dense<0.000000e+00> : vector<128xf32>
    %114 = vector.multi_reduction <add>, %113, %cst_106 [0] : vector<256x128xf32> to vector<128xf32>
    %115 = vector.shape_cast %114 : vector<128xf32> to vector<1x128xf32>
    %cst_107 = arith.constant 3.906250e-03 : f32
    %116 = vector.broadcast %cst_107 : f32 to vector<1x128xf32>
    %117 = arith.mulf %115, %116 : vector<1x128xf32>
    %118 = arith.mulf %112, %112 : vector<1x128xf32>
    %119 = arith.subf %117, %118 : vector<1x128xf32>
    %cst_108 = arith.constant 0.000000e+00 : f32
    %120 = vector.broadcast %cst_108 : f32 to vector<1x128xf32>
    %121 = arith.maximumf %119, %120 : vector<1x128xf32>
    %122 = vector.broadcast %112 : vector<1x128xf32> to vector<256x128xf32>
    %123 = arith.subf %108, %122 : vector<256x128xf32>
    %cst_109 = arith.constant 9.99999974E-6 : f32
    %124 = vector.broadcast %cst_109 : f32 to vector<1x128xf32>
    %125 = arith.addf %121, %124 : vector<1x128xf32>
    %126 = math.rsqrt %125 : vector<1x128xf32>
    %127 = vector.broadcast %126 : vector<1x128xf32> to vector<256x128xf32>
    %128 = arith.mulf %123, %127 : vector<256x128xf32>
    %129 = vector.shape_cast %128 : vector<256x128xf32> to vector<16x16x128xf32>
    %c0_110 = arith.constant 0 : index
    %c0_111 = arith.constant 0 : index
    %c0_112 = arith.constant 0 : index
    %c0_113 = arith.constant 0 : index
    %130 = vector.load %arg1[%c0_110, %c0_111, %c0_112, %c0_113] : memref<1x16x16x128xf32, #tpu.memory_space<vmem>>, vector<1x16x16x128xf32>
    %131 = vector.shape_cast %130 : vector<1x16x16x128xf32> to vector<16x16x128xf32>
    %132 = arith.addf %131, %129 : vector<16x16x128xf32>
    %c0_114 = arith.constant 0 : index
    %c0_115 = arith.constant 0 : index
    %c0_116 = arith.constant 0 : index
    %c0_117 = arith.constant 0 : index
    %133 = vector.load %arg6[%c0_114, %c0_115, %c0_116, %c0_117] : memref<1x16x16x128xf32, #tpu.memory_space<vmem>>, vector<1x16x16x128xf32>
    %134 = vector.shape_cast %133 : vector<1x16x16x128xf32> to vector<16x16x128xf32>
    %135 = vector.shape_cast %132 : vector<16x16x128xf32> to vector<1x16x16x128xf32>
    tpu.vector_store %arg6[%c0_114, %c0_115, %c0_116, %c0_117], %135 {strides = array<i32>} : memref<1x16x16x128xf32, #tpu.memory_space<vmem>>, vector<1x16x16x128xf32>,
    return
  }
  func.func @transform_0(%arg0: i32) -> (i32, i32, i32, i32) {
    %c0_i32 = arith.constant 0 : i32
    %c0_i32_0 = arith.constant 0 : i32
    %c0_i32_1 = arith.constant 0 : i32
    %c0_i32_2 = arith.constant 0 : i32
    return %arg0, %c0_i32, %c0_i32_0, %c0_i32_1 : i32, i32, i32, i32
  }
  func.func @transform_1(%arg0: i32) -> (i32, i32, i32) {
    %c0_i32 = arith.constant 0 : i32
    %c0_i32_0 = arith.constant 0 : i32
    %c0_i32_1 = arith.constant 0 : i32
    %c0_i32_2 = arith.constant 0 : i32
    return %c0_i32, %c0_i32_0, %c0_i32_1 : i32, i32, i32
  }
  func.func @transform_2(%arg0: i32) -> (i32, i32) {
    %c0_i32 = arith.constant 0 : i32
    %c0_i32_0 = arith.constant 0 : i32
    %c0_i32_1 = arith.constant 0 : i32
    return %c0_i32, %c0_i32_0 : i32, i32
  }
  func.func @transform_3(%arg0: i32) -> (i32, i32, i32) {
    %c0_i32 = arith.constant 0 : i32
    %c0_i32_0 = arith.constant 0 : i32
    %c0_i32_1 = arith.constant 0 : i32
    %c0_i32_2 = arith.constant 0 : i32
    return %c0_i32, %c0_i32_0, %c0_i32_1 : i32, i32, i32
  }
  func.func @transform_4(%arg0: i32) -> (i32, i32) {
    %c0_i32 = arith.constant 0 : i32
    %c0_i32_0 = arith.constant 0 : i32
    %c0_i32_1 = arith.constant 0 : i32
    return %c0_i32, %c0_i32_0 : i32, i32
  }
  func.func @transform_5(%arg0: i32) -> (i32, i32, i32, i32) {
    %c0_i32 = arith.constant 0 : i32
    %c0_i32_0 = arith.constant 0 : i32
    %c0_i32_1 = arith.constant 0 : i32
    %c0_i32_2 = arith.constant 0 : i32
    return %arg0, %c0_i32, %c0_i32_0, %c0_i32_1 : i32, i32, i32, i32
  }
}

</mosaic_0001>

<llo_original>
// kernel: tpu_custom_call.1
$region0: #{tpu_custom_call.1}
  #allocation0 [shape = 'u32[]', space=smem, size = 0x4, offset = 0x4, fixed_abs, tag = 'smem constant byte address 0x4 - core index']
  #allocation1 [shape = 'u32[144,128]{1,0:T(1,128)}', space=vmem, size = 0x12000, scoped, tag = 'internal scratch']
  #allocation2 [shape = 'bf16[18,16,384]{2,1,0:T(16,128)(2,1)}', space=vmem, size = 0x36000, scoped, tag = 'scratch operand']
  %s0 = inlined_call_operand.hbm [shape: f32[2,16,16,128], index: 0, kind: input, shape index: {}]
  %s1 = inlined_call_operand.hbm [shape: bf16[3,384,128], index: 1, kind: input, shape index: {}]
  %s2 = inlined_call_operand.vmem [shape: f32[1,128], index: 2, kind: input, shape index: {}]
  %s3 = inlined_call_operand.hbm [shape: bf16[3,384,128], index: 3, kind: input, shape index: {}]
  %s4 = inlined_call_operand.vmem [shape: f32[1,128], index: 4, kind: input, shape index: {}]
  %s5 = inlined_call_operand.hbm [shape: f32[2,16,16,128], index: 5, kind: output, shape index: {}]
  %s6 = sld [smem:[#allocation0]]
  $region65: #{tpu_custom_call.1} parent=0
    _
  %s8 = ssub.s32 1, %s6
  %s9 = scalar_select 0, %s8, %s6
  $region1: #{tpu_custom_call.1} parent=0
    #allocation3 [shape = 'u8[262144]{0}', space=vmem, size = 0x40000, scoped, tag = 'input window, operand 0']
    #allocation4 [shape = 's32[2]{0}', space=sflag, size = 0x8, scoped, tag = 'scoped memory for tpu_custom_call.1']
    #allocation5 [shape = 's32[2]{0}', space=sflag, size = 0x8, scoped, tag = 'scoped memory for tpu_custom_call.1']
    #allocation6 [shape = 'u8[294912]{0}', space=vmem, size = 0x48000, scoped, tag = 'input window, operand 1, single buffered']
    #allocation7 [shape = 's32[1]{0}', space=sflag, size = 0x4, scoped, tag = 'scoped memory for tpu_custom_call.1']
    #allocation8 [shape = 'u8[294912]{0}', space=vmem, size = 0x48000, scoped, tag = 'input window, operand 3, single buffered']
    #allocation9 [shape = 'u8[262144]{0}', space=vmem, size = 0x40000, scoped, tag = 'output window, operand 0']
    %10 = vsyncpa [#allocation4], 0
    %s11 = scalar_lea.sflag [#allocation4], 1
    %12 = vsyncpa %s11, 0
    %13 = vsyncpa [#allocation7], 0
    %14 = vsyncpa [#allocation5], 0
    %s15 = scalar_lea.sflag [#allocation5], 1
    %16 = vsyncpa %s15, 0
    loop: start=0, step=1, limit=4
    $region2: #{tpu_custom_call.1} parent=1 // loop_pre_header
      _
    $region3: #{tpu_custom_call.1} parent=1 // loop_header
      %s18 = sphi 0, %s22
      %p19 = scmp.ge.s32.totalorder %s18, 4
      %s28 = sphi 0, %s30
      %s31 = sphi 0, %s28
      %s32 = sphi 0, %s31
      %s48 = sphi 0, %s32
      %s52 = sphi 0, %s52
      %s54 = sphi 0, %s52
      %s55 = sphi 0, %s54
      %s69 = sphi 0, %s55
      %s73 = sphi 0, %s73
      %s75 = sphi 0, %s73
      %s76 = sphi 0, %s75
      %s90 = sphi 0, %s76
      %s94 = sphi 0, %s94
      %s96 = sphi 0, %s94
      %s97 = sphi 0, %s96
      %s111 = sphi 0, %s97
      %s115 = sphi 0, %s115
      %s117 = sphi 0, %s115
      %s118 = sphi 0, %s117
      %s132 = sphi 0, %s118
      %s138 = sphi 0, %s140
      %s141 = sphi 0, %s138
      %s142 = sphi 0, %s141
      %s158 = sphi 0, %s142
    $region4: #{tpu_custom_call.1} parent=1 // loop_header_branch
      %21 = sbr.rel (%p19) target = $region8
    $region5: #{tpu_custom_call.1} parent=1 // loop_body
      %s23 = ssub.s32 %s18, 1
      %s24 = ssub.s32 %s18, 2
      %s25 = sadd.s32 %s18, 1
      %s26 = ssub.s32 %s18, %s25
      %p27 = scmp.eq.s32.totalorder %s26, 0
      %s29 = sadd.s32 %s28, 1
      %s30 = scalar_select %p27, %s28, %s29
      %p33 = pneg %p27
      %p34 = scmp.eq.s32.totalorder %s18, 1
      %p35 = por %p33, %p34
      %p36 = scmp.ne.s32.totalorder %s28, %s31
      %p37 = scmp.eq.s32.totalorder %s18, 0
      %p38 = por %p36, %p37
      %p39 = scmp.ne.s32.totalorder %s28, %s31
      %p40 = scmp.eq.s32.totalorder %s23, 1
      %p41 = por %p39, %p40
      %p42 = scmp.ne.s32.totalorder %s31, %s32
      %p43 = scmp.eq.s32.totalorder %s23, 0
      %p44 = por %p42, %p43
      %p45 = scmp.ne.s32.totalorder %s31, %s32
      %p46 = scmp.eq.s32.totalorder %s24, 1
      %p47 = por %p45, %p46
      %p49 = scmp.ne.s32.totalorder %s32, %s48
      %p50 = scmp.eq.s32.totalorder %s24, 0
      %p51 = por %p49, %p50
      %s53 = sadd.s32 %s52, 1
      %p56 = scmp.eq.s32.totalorder %s18, 1
      %p57 = scmp.ne.s32.totalorder %s52, %s54
      %p58 = scmp.eq.s32.totalorder %s18, 0
      %p59 = por %p57, %p58
      %p60 = scmp.ne.s32.totalorder %s52, %s54
      %p61 = scmp.eq.s32.totalorder %s23, 1
      %p62 = por %p60, %p61
      %p63 = scmp.ne.s32.totalorder %s54, %s55
      %p64 = scmp.eq.s32.totalorder %s23, 0
      %p65 = por %p63, %p64
      %p66 = scmp.ne.s32.totalorder %s54, %s55
      %p67 = scmp.eq.s32.totalorder %s24, 1
      %p68 = por %p66, %p67
      %p70 = scmp.ne.s32.totalorder %s55, %s69
      %p71 = scmp.eq.s32.totalorder %s24, 0
      %p72 = por %p70, %p71
      %s74 = sadd.s32 %s73, 1
      %p77 = scmp.eq.s32.totalorder %s18, 1
      %p78 = scmp.ne.s32.totalorder %s73, %s75
      %p79 = scmp.eq.s32.totalorder %s18, 0
      %p80 = por %p78, %p79
      %p81 = scmp.ne.s32.totalorder %s73, %s75
      %p82 = scmp.eq.s32.totalorder %s23, 1
      %p83 = por %p81, %p82
      %p84 = scmp.ne.s32.totalorder %s75, %s76
      %p85 = scmp.eq.s32.totalorder %s23, 0
      %p86 = por %p84, %p85
      %p87 = scmp.ne.s32.totalorder %s75, %s76
      %p88 = scmp.eq.s32.totalorder %s24, 1
      %p89 = por %p87, %p88
      %p91 = scmp.ne.s32.totalorder %s76, %s90
      %p92 = scmp.eq.s32.totalorder %s24, 0
      %p93 = por %p91, %p92
      %s95 = sadd.s32 %s94, 1
      %p98 = scmp.eq.s32.totalorder %s18, 1
      %p99 = scmp.ne.s32.totalorder %s94, %s96
      %p100 = scmp.eq.s32.totalorder %s18, 0
      %p101 = por %p99, %p100
      %p102 = scmp.ne.s32.totalorder %s94, %s96
      %p103 = scmp.eq.s32.totalorder %s23, 1
      %p104 = por %p102, %p103
      %p105 = scmp.ne.s32.totalorder %s96, %s97
      %p106 = scmp.eq.s32.totalorder %s23, 0
      %p107 = por %p105, %p106
      %p108 = scmp.ne.s32.totalorder %s96, %s97
      %p109 = scmp.eq.s32.totalorder %s24, 1
      %p110 = por %p108, %p109
      %p112 = scmp.ne.s32.totalorder %s97, %s111
      %p113 = scmp.eq.s32.totalorder %s24, 0
      %p114 = por %p112, %p113
      %s116 = sadd.s32 %s115, 1
      %p119 = scmp.eq.s32.totalorder %s18, 1
      %p120 = scmp.ne.s32.totalorder %s115, %s117
      %p121 = scmp.eq.s32.totalorder %s18, 0
      %p122 = por %p120, %p121
      %p123 = scmp.ne.s32.totalorder %s115, %s117
      %p124 = scmp.eq.s32.totalorder %s23, 1
      %p125 = por %p123, %p124
      %p126 = scmp.ne.s32.totalorder %s117, %s118
      %p127 = scmp.eq.s32.totalorder %s23, 0
      %p128 = por %p126, %p127
      %p129 = scmp.ne.s32.totalorder %s117, %s118
      %p130 = scmp.eq.s32.totalorder %s24, 1
      %p131 = por %p129, %p130
      %p133 = scmp.ne.s32.totalorder %s118, %s132
      %p134 = scmp.eq.s32.totalorder %s24, 0
      %p135 = por %p133, %p134
      %s136 = ssub.s32 %s18, %s25
      %p137 = scmp.eq.s32.totalorder %s136, 0
      %s139 = sadd.s32 %s138, 1
      %s140 = scalar_select %p137, %s138, %s139
      %p143 = pneg %p137
      %p144 = scmp.eq.s32.totalorder %s18, 1
      %p145 = por %p143, %p144
      %p146 = scmp.ne.s32.totalorder %s138, %s141
      %p147 = scmp.eq.s32.totalorder %s18, 0
      %p148 = por %p146, %p147
      %p149 = scmp.ne.s32.totalorder %s138, %s141
      %p150 = scmp.eq.s32.totalorder %s23, 1
      %p151 = por %p149, %p150
      %p152 = scmp.ne.s32.totalorder %s141, %s142
      %p153 = scmp.eq.s32.totalorder %s23, 0
      %p154 = por %p152, %p153
      %p155 = scmp.ne.s32.totalorder %s141, %s142
      %p156 = scmp.eq.s32.totalorder %s24, 1
      %p157 = por %p155, %p156
      %p159 = scmp.ne.s32.totalorder %s142, %s158
      %p160 = scmp.eq.s32.totalorder %s24, 0
      %p161 = por %p159, %p160
      %p162 = scmp.le.s32.totalorder 1, %s18
      %p163 = scmp.lt.s32.totalorder %s18, 3
      %p164 = pnand %p162, %p163
      %p165 = pneg %p164
      // Predicated region
      $region9: #{tpu_custom_call.1} parent=5 // pred_check
        _
      $region10: #{tpu_custom_call.1} parent=5 // pred_check_branch
        %167 = sbr.rel (%p164) target = $region12
      $region11: #{tpu_custom_call.1} parent=5 // pred_region
        %s168 = ssub.s32 %s18, 1
        // Predicated region
        $region13: #{tpu_custom_call.1} parent=11 // pred_check
          %p169 = pneg %p65
        $region14: #{tpu_custom_call.1} parent=11 // pred_check_branch
          %171 = sbr.rel (%p169) target = $region16
        $region15: #{tpu_custom_call.1} parent=11 // pred_region
          %s173 = ssub.s32 9216, 9216
          %174 = vsyncadd [#allocation7], %s173
          %s175 = sshll.u32 [#allocation6], 4
          %s176 = int_to_ptr.vmem [resolvable:$true] %s175
          %181 = dma.hbm_to_vmem [thread:$0]  %s1, 9216, %s176, [#allocation7], 64, 64, 4
        $region16: #{tpu_custom_call.1} parent=11 // pred_fallthru
          _
        // Predicated region
        $region17: #{tpu_custom_call.1} parent=11 // pred_check
          %p182 = pneg %p86
        $region18: #{tpu_custom_call.1} parent=11 // pred_check_branch
          %184 = sbr.rel (%p182) target = $region20
        $region19: #{tpu_custom_call.1} parent=11 // pred_region
          _
        $region20: #{tpu_custom_call.1} parent=11 // pred_fallthru
          _
        // Predicated region
        $region21: #{tpu_custom_call.1} parent=11 // pred_check
          %p185 = pneg %p107
        $region22: #{tpu_custom_call.1} parent=11 // pred_check_branch
          %187 = sbr.rel (%p185) target = $region24
        $region23: #{tpu_custom_call.1} parent=11 // pred_region
          %s189 = ssub.s32 9216, 9216
          %190 = vsyncadd [#allocation7], %s189
          %s191 = sshll.u32 [#allocation8], 4
          %s192 = int_to_ptr.vmem [resolvable:$true] %s191
          %197 = dma.hbm_to_vmem [thread:$0]  %s3, 9216, %s192, [#allocation7], 64, 64, 4
        $region24: #{tpu_custom_call.1} parent=11 // pred_fallthru
          _
        // Predicated region
        $region25: #{tpu_custom_call.1} parent=11 // pred_check
          %p198 = pneg %p128
        $region26: #{tpu_custom_call.1} parent=11 // pred_check_branch
          %200 = sbr.rel (%p198) target = $region28
        $region27: #{tpu_custom_call.1} parent=11 // pred_region
          _
        $region28: #{tpu_custom_call.1} parent=11 // pred_fallthru
          _
      $region12: #{tpu_custom_call.1} parent=5 // pred_fallthru
        _
      %p201 = scmp.lt.s32.totalorder %s18, 2
      // Predicated region
      $region29: #{tpu_custom_call.1} parent=5 // pred_check
        %p202 = pneg %p201
      $region30: #{tpu_custom_call.1} parent=5 // pred_check_branch
        %204 = sbr.rel (%p202) target = $region32
      $region31: #{tpu_custom_call.1} parent=5 // pred_region
        // Predicated region
        $region33: #{tpu_custom_call.1} parent=31 // pred_check
          %p205 = pneg %p38
        $region34: #{tpu_custom_call.1} parent=31 // pred_check_branch
          %207 = sbr.rel (%p205) target = $region36
        $region35: #{tpu_custom_call.1} parent=31 // pred_region
          %s208 = sand.u32 %s28, 1
          %s209 = scalar_lea.sflag [#allocation4], %s208
          %s210 = sand.u32 %s28, 1
          %s211 = smul.addr %s210, 256
          %s212 = scalar_lea.vmem [#allocation3], %s211
          %s214 = ssub.s32 4096, 4096
          %215 = vsyncadd %s209, %s214
          %s216 = smul.addr %s18, 32
          %s217 = smul.addr %s216, 128
          %s218 = scalar_lea.hbm %s0, %s217
          %s219 = sshll.u32 %s212, 4
          %s220 = int_to_ptr.vmem [resolvable:$true] %s219
          %225 = dma.hbm_to_vmem [thread:$0]  %s218, 4096, %s220, %s209, 128, 128, 8
        $region36: #{tpu_custom_call.1} parent=31 // pred_fallthru
          _
      $region32: #{tpu_custom_call.1} parent=5 // pred_fallthru
        _
      %p226 = scmp.le.s32.totalorder 1, %s18
      %p227 = scmp.lt.s32.totalorder %s18, 3
      %p228 = pnand %p226, %p227
      %p229 = pneg %p228
      // Predicated region
      $region37: #{tpu_custom_call.1} parent=5 // pred_check
        _
      $region38: #{tpu_custom_call.1} parent=5 // pred_check_branch
        %231 = sbr.rel (%p228) target = $region40
      $region39: #{tpu_custom_call.1} parent=5 // pred_region
        %s232 = ssub.s32 %s18, 1
        %s233 = sand.u32 %s31, 1
        %s234 = scalar_lea.sflag [#allocation4], %s233
        %s235 = sand.u32 %s31, 1
        %s236 = smul.addr %s235, 256
        %s237 = scalar_lea.vmem [#allocation3], %s236
        // Predicated region
        $region41: #{tpu_custom_call.1} parent=39 // pred_check
          %p238 = pneg %p44
        $region42: #{tpu_custom_call.1} parent=39 // pred_check_branch
          %240 = sbr.rel (%p238) target = $region44
        $region43: #{tpu_custom_call.1} parent=39 // pred_region
          %241 = dma.done %s234, 4096
        $region44: #{tpu_custom_call.1} parent=39 // pred_fallthru
          _
        // Predicated region
        $region45: #{tpu_custom_call.1} parent=39 // pred_check
          %p242 = pneg %p65
        $region46: #{tpu_custom_call.1} parent=39 // pred_check_branch
          %244 = sbr.rel (%p242) target = $region48
        $region47: #{tpu_custom_call.1} parent=39 // pred_region
          %245 = dma.done [#allocation7], 9216
        $region48: #{tpu_custom_call.1} parent=39 // pred_fallthru
          _
        // Predicated region
        $region49: #{tpu_custom_call.1} parent=39 // pred_check
          %p246 = pneg %p107
        $region50: #{tpu_custom_call.1} parent=39 // pred_check_branch
          %248 = sbr.rel (%p246) target = $region52
        $region51: #{tpu_custom_call.1} parent=39 // pred_region
          %249 = dma.done [#allocation7], 9216
        $region52: #{tpu_custom_call.1} parent=39 // pred_fallthru
          _
        %s250 = sand.u32 %s31, 1
        %s251 = scalar_lea.sflag [#allocation4], %s250
        %s252 = sand.u32 %s31, 1
        %s253 = smul.addr %s252, 256
        %s254 = scalar_lea.vmem [#allocation3], %s253
        %p255 = pneg %p44
        %p256 = pneg %p41
        %p257 = pneg %p65
        %p258 = pneg %p62
        %p259 = pneg %p86
        %p260 = pneg %p83
        %p261 = pneg %p107
        %p262 = pneg %p104
        %p263 = pneg %p128
        %p264 = pneg %p125
        %p265 = pneg %p154
        %p266 = pneg %p151
        %s267 = sand.u32 %s141, 1
        %s268 = scalar_lea.sflag [#allocation5], %s267
        %s269 = sand.u32 %s141, 1
        %s270 = smul.addr %s269, 256
        %s271 = scalar_lea.vmem [#allocation9], %s270
        %v273 = vld [vmem:[%s237] sm:$0xff]
        %v274 = vld [vmem:[%s237 + $0x8] sm:$0xff]
        %v275 = vld [vmem:[%s237 + $0x10] sm:$0xff]
        %v276 = vld [vmem:[%s237 + $0x18] sm:$0xff]
        %v277 = vld [vmem:[%s237 + $0x20] sm:$0xff]
        %v278 = vld [vmem:[%s237 + $0x28] sm:$0xff]
        %v279 = vld [vmem:[%s237 + $0x30] sm:$0xff]
        %v280 = vld [vmem:[%s237 + $0x38] sm:$0xff]
        %v281 = vld [vmem:[%s237 + $0x40] sm:$0xff]
        %v282 = vld [vmem:[%s237 + $0x48] sm:$0xff]
        %v283 = vld [vmem:[%s237 + $0x50] sm:$0xff]
        %v284 = vld [vmem:[%s237 + $0x58] sm:$0xff]
        %v285 = vld [vmem:[%s237 + $0x60] sm:$0xff]
        %v286 = vld [vmem:[%s237 + $0x68] sm:$0xff]
        %v287 = vld [vmem:[%s237 + $0x70] sm:$0xff]
        %v288 = vld [vmem:[%s237 + $0x78] sm:$0xff]
        %v289 = vld [vmem:[%s237 + $0x80] sm:$0xff]
        %v290 = vld [vmem:[%s237 + $0x88] sm:$0xff]
        %v291 = vld [vmem:[%s237 + $0x90] sm:$0xff]
        %v292 = vld [vmem:[%s237 + $0x98] sm:$0xff]
        %v293 = vld [vmem:[%s237 + $0xa0] sm:$0xff]
        %v294 = vld [vmem:[%s237 + $0xa8] sm:$0xff]
        %v295 = vld [vmem:[%s237 + $0xb0] sm:$0xff]
        %v296 = vld [vmem:[%s237 + $0xb8] sm:$0xff]
        %v297 = vld [vmem:[%s237 + $0xc0] sm:$0xff]
        %v298 = vld [vmem:[%s237 + $0xc8] sm:$0xff]
        %v299 = vld [vmem:[%s237 + $0xd0] sm:$0xff]
        %v300 = vld [vmem:[%s237 + $0xd8] sm:$0xff]
        %v301 = vld [vmem:[%s237 + $0xe0] sm:$0xff]
        %v302 = vld [vmem:[%s237 + $0xe8] sm:$0xff]
        %v303 = vld [vmem:[%s237 + $0xf0] sm:$0xff]
        %v304 = vld [vmem:[%s237 + $0xf8] sm:$0xff]
        %v305 = vpack.c.bf16 %v274, %v273
        %v306 = vpack.c.bf16 %v276, %v275
        %v307 = vpack.c.bf16 %v278, %v277
        %v308 = vpack.c.bf16 %v280, %v279
        %v309 = vpack.c.bf16 %v282, %v281
        %v310 = vpack.c.bf16 %v284, %v283
        %v311 = vpack.c.bf16 %v286, %v285
        %v312 = vpack.c.bf16 %v288, %v287
        %v313 = vpack.c.bf16 %v290, %v289
        %v314 = vpack.c.bf16 %v292, %v291
        %v315 = vpack.c.bf16 %v294, %v293
        %v316 = vpack.c.bf16 %v296, %v295
        %v317 = vpack.c.bf16 %v298, %v297
        %v318 = vpack.c.bf16 %v300, %v299
        %v319 = vpack.c.bf16 %v302, %v301
        %v320 = vpack.c.bf16 %v304, %v303
        %s321 = scalar_lea.vmem [#allocation2], 24
        %322 = vst [vmem:[%s321 + $0x8] sm:$0xff] %v305
        %323 = vst [vmem:[%s321 + $0x20] sm:$0xff] %v306
        %324 = vst [vmem:[%s321 + $0x38] sm:$0xff] %v307
        %325 = vst [vmem:[%s321 + $0x50] sm:$0xff] %v308
        %326 = vst [vmem:[%s321 + $0x68] sm:$0xff] %v309
        %327 = vst [vmem:[%s321 + $0x80] sm:$0xff] %v310
        %328 = vst [vmem:[%s321 + $0x98] sm:$0xff] %v311
        %329 = vst [vmem:[%s321 + $0xb0] sm:$0xff] %v312
        %330 = vst [vmem:[%s321 + $0xc8] sm:$0xff] %v313
        %331 = vst [vmem:[%s321 + $0xe0] sm:$0xff] %v314
        %332 = vst [vmem:[%s321 + $0xf8] sm:$0xff] %v315
        %333 = vst [vmem:[%s321 + $0x110] sm:$0xff] %v316
        %334 = vst [vmem:[%s321 + $0x128] sm:$0xff] %v317
        %335 = vst [vmem:[%s321 + $0x140] sm:$0xff] %v318
        %336 = vst [vmem:[%s321 + $0x158] sm:$0xff] %v319
        %337 = vst [vmem:[%s321 + $0x170] sm:$0xff] %v320
        %338 = vst [vmem:[#allocation2 + $0x8] sm:$0xff] %v306
        %s339 = scalar_lea.vmem [#allocation2], 408
        %340 = vst [vmem:[%s339 + $0x8] sm:$0xff] %v319
        %v342 = vshrl.u32 %v305, 16
        %v345 = vshrl.u32 %v306, 16
        %v348 = vshrl.u32 %v307, 16
        %v351 = vshrl.u32 %v308, 16
        %v354 = vshrl.u32 %v309, 16
        %v357 = vshrl.u32 %v310, 16
        %v360 = vshrl.u32 %v311, 16
        %v363 = vshrl.u32 %v312, 16
        %v366 = vshrl.u32 %v313, 16
        %v369 = vshrl.u32 %v314, 16
        %v372 = vshrl.u32 %v315, 16
        %v375 = vshrl.u32 %v316, 16
        %v378 = vshrl.u32 %v317, 16
        %v381 = vshrl.u32 %v318, 16
        %v384 = vshrl.u32 %v319, 16
        %v387 = vshrl.u32 %v320, 16
        %v405 = vrot.slane %v342, 7
        %v406 = vshll.u32 %v305, 16
        %v408 = vor.u32 %v405, %v406
        %v409 = vrot.slane %v345, 7
        %v410 = vshll.u32 %v306, 16
        %v412 = vor.u32 %v409, %v410
        %v413 = vrot.slane %v348, 7
        %v414 = vshll.u32 %v307, 16
        %v416 = vor.u32 %v413, %v414
        %v417 = vrot.slane %v351, 7
        %v418 = vshll.u32 %v308, 16
        %v420 = vor.u32 %v417, %v418
        %v421 = vrot.slane %v354, 7
        %v422 = vshll.u32 %v309, 16
        %v424 = vor.u32 %v421, %v422
        %v425 = vrot.slane %v357, 7
        %v426 = vshll.u32 %v310, 16
        %v428 = vor.u32 %v425, %v426
        %v429 = vrot.slane %v360, 7
        %v430 = vshll.u32 %v311, 16
        %v432 = vor.u32 %v429, %v430
        %v433 = vrot.slane %v363, 7
        %v434 = vshll.u32 %v312, 16
        %v436 = vor.u32 %v433, %v434
        %v437 = vrot.slane %v366, 7
        %v438 = vshll.u32 %v313, 16
        %v440 = vor.u32 %v437, %v438
        %v441 = vrot.slane %v369, 7
        %v442 = vshll.u32 %v314, 16
        %v444 = vor.u32 %v441, %v442
        %v445 = vrot.slane %v372, 7
        %v446 = vshll.u32 %v315, 16
        %v448 = vor.u32 %v445, %v446
        %v449 = vrot.slane %v375, 7
        %v450 = vshll.u32 %v316, 16
        %v452 = vor.u32 %v449, %v450
        %v453 = vrot.slane %v378, 7
        %v454 = vshll.u32 %v317, 16
        %v456 = vor.u32 %v453, %v454
        %v457 = vrot.slane %v381, 7
        %v458 = vshll.u32 %v318, 16
        %v460 = vor.u32 %v457, %v458
        %v461 = vrot.slane %v384, 7
        %v462 = vshll.u32 %v319, 16
        %v464 = vor.u32 %v461, %v462
        %v465 = vrot.slane %v387, 7
        %v466 = vshll.u32 %v320, 16
        %v468 = vor.u32 %v465, %v466
        %vm485 = vcmask 1040384
        %vm486 = vsmask.f32 256
        %vm487 = vmand %vm485, %vm486
        %v488 = vsel %vm487, %v342, %v408
        %v489 = vsel %vm487, %v345, %v412
        %v490 = vsel %vm487, %v348, %v416
        %v491 = vsel %vm487, %v351, %v420
        %v492 = vsel %vm487, %v354, %v424
        %v493 = vsel %vm487, %v357, %v428
        %v494 = vsel %vm487, %v360, %v432
        %v495 = vsel %vm487, %v363, %v436
        %v496 = vsel %vm487, %v366, %v440
        %v497 = vsel %vm487, %v369, %v444
        %v498 = vsel %vm487, %v372, %v448
        %v499 = vsel %vm487, %v375, %v452
        %v500 = vsel %vm487, %v378, %v456
        %v501 = vsel %vm487, %v381, %v460
        %v502 = vsel %vm487, %v384, %v464
        %v503 = vsel %vm487, %v387, %v468
        %504 = vst [vmem:[%s321] sm:$0xff] %v488
        %505 = vst [vmem:[%s321 + $0x18] sm:$0xff] %v489
        %506 = vst [vmem:[%s321 + $0x30] sm:$0xff] %v490
        %507 = vst [vmem:[%s321 + $0x48] sm:$0xff] %v491
        %508 = vst [vmem:[%s321 + $0x60] sm:$0xff] %v492
        %509 = vst [vmem:[%s321 + $0x78] sm:$0xff] %v493
        %510 = vst [vmem:[%s321 + $0x90] sm:$0xff] %v494
        %511 = vst [vmem:[%s321 + $0xa8] sm:$0xff] %v495
        %512 = vst [vmem:[%s321 + $0xc0] sm:$0xff] %v496
        %513 = vst [vmem:[%s321 + $0xd8] sm:$0xff] %v497
        %514 = vst [vmem:[%s321 + $0xf0] sm:$0xff] %v498
        %515 = vst [vmem:[%s321 + $0x108] sm:$0xff] %v499
        %516 = vst [vmem:[%s321 + $0x120] sm:$0xff] %v500
        %517 = vst [vmem:[%s321 + $0x138] sm:$0xff] %v501
        %518 = vst [vmem:[%s321 + $0x150] sm:$0xff] %v502
        %519 = vst [vmem:[%s321 + $0x168] sm:$0xff] %v503
        %520 = vst [vmem:[#allocation2] sm:$0xff] %v489
        %521 = vst [vmem:[%s339] sm:$0xff] %v502
        %v522 = vrot.slane %v406, 1
        %v523 = vor.u32 %v342, %v522
        %v524 = vrot.slane %v410, 1
        %v525 = vor.u32 %v345, %v524
        %v526 = vrot.slane %v414, 1
        %v527 = vor.u32 %v348, %v526
        %v528 = vrot.slane %v418, 1
        %v529 = vor.u32 %v351, %v528
        %v530 = vrot.slane %v422, 1
        %v531 = vor.u32 %v354, %v530
        %v532 = vrot.slane %v426, 1
        %v533 = vor.u32 %v357, %v532
        %v534 = vrot.slane %v430, 1
        %v535 = vor.u32 %v360, %v534
        %v536 = vrot.slane %v434, 1
        %v537 = vor.u32 %v363, %v536
        %v538 = vrot.slane %v438, 1
        %v539 = vor.u32 %v366, %v538
        %v540 = vrot.slane %v442, 1
        %v541 = vor.u32 %v369, %v540
        %v542 = vrot.slane %v446, 1
        %v543 = vor.u32 %v372, %v542
        %v544 = vrot.slane %v450, 1
        %v545 = vor.u32 %v375, %v544
        %v546 = vrot.slane %v454, 1
        %v547 = vor.u32 %v378, %v546
        %v548 = vrot.slane %v458, 1
        %v549 = vor.u32 %v381, %v548
        %v550 = vrot.slane %v462, 1
        %v551 = vor.u32 %v384, %v550
        %v552 = vrot.slane %v466, 1
        %v553 = vor.u32 %v387, %v552
        %vm586 = vcmask 1047552
        %vm587 = vsmask.f32 7424
        %vm588 = vmand %vm586, %vm587
        %v589 = vsel %vm588, %v523, %v406
        %v590 = vsel %vm588, %v525, %v410
        %v591 = vsel %vm588, %v527, %v414
        %v592 = vsel %vm588, %v529, %v418
        %v593 = vsel %vm588, %v531, %v422
        %v594 = vsel %vm588, %v533, %v426
        %v595 = vsel %vm588, %v535, %v430
        %v596 = vsel %vm588, %v537, %v434
        %v597 = vsel %vm588, %v539, %v438
        %v598 = vsel %vm588, %v541, %v442
        %v599 = vsel %vm588, %v543, %v446
        %v600 = vsel %vm588, %v545, %v450
        %v601 = vsel %vm588, %v547, %v454
        %v602 = vsel %vm588, %v549, %v458
        %v603 = vsel %vm588, %v551, %v462
        %v604 = vsel %vm588, %v553, %v466
        %605 = vst [vmem:[%s321 + $0x10] sm:$0xff] %v589
        %606 = vst [vmem:[%s321 + $0x28] sm:$0xff] %v590
        %607 = vst [vmem:[%s321 + $0x40] sm:$0xff] %v591
        %608 = vst [vmem:[%s321 + $0x58] sm:$0xff] %v592
        %609 = vst [vmem:[%s321 + $0x70] sm:$0xff] %v593
        %610 = vst [vmem:[%s321 + $0x88] sm:$0xff] %v594
        %611 = vst [vmem:[%s321 + $0xa0] sm:$0xff] %v595
        %612 = vst [vmem:[%s321 + $0xb8] sm:$0xff] %v596
        %613 = vst [vmem:[%s321 + $0xd0] sm:$0xff] %v597
        %614 = vst [vmem:[%s321 + $0xe8] sm:$0xff] %v598
        %615 = vst [vmem:[%s321 + $0x100] sm:$0xff] %v599
        %616 = vst [vmem:[%s321 + $0x118] sm:$0xff] %v600
        %617 = vst [vmem:[%s321 + $0x130] sm:$0xff] %v601
        %618 = vst [vmem:[%s321 + $0x148] sm:$0xff] %v602
        %619 = vst [vmem:[%s321 + $0x160] sm:$0xff] %v603
        %620 = vst [vmem:[%s321 + $0x178] sm:$0xff] %v604
        %621 = vst [vmem:[#allocation2 + $0x10] sm:$0xff] %v590
        %622 = vst [vmem:[%s339 + $0x10] sm:$0xff] %v603
        %v623 = vld [vmem:[#allocation2] sm:$0xff]
        %v624 = vld [vmem:[#allocation2 + $0x8] sm:$0xff]
        %v625 = vld [vmem:[#allocation2 + $0x10] sm:$0xff]
        %v626 = vld [vmem:[#allocation2 + $0x18] sm:$0xff]
        %v627 = vld [vmem:[#allocation2 + $0x20] sm:$0xff]
        %v628 = vld [vmem:[#allocation2 + $0x28] sm:$0xff]
        %v629 = vld [vmem:[#allocation2 + $0x30] sm:$0xff]
        %v630 = vld [vmem:[#allocation2 + $0x38] sm:$0xff]
        %v631 = vld [vmem:[#allocation2 + $0x40] sm:$0xff]
        %v632 = vld [vmem:[#allocation2 + $0x48] sm:$0xff]
        %v633 = vld [vmem:[#allocation2 + $0x50] sm:$0xff]
        %v634 = vld [vmem:[#allocation2 + $0x58] sm:$0xff]
        %v635 = vld [vmem:[#allocation2 + $0x60] sm:$0xff]
        %v636 = vld [vmem:[#allocation2 + $0x68] sm:$0xff]
        %v637 = vld [vmem:[#allocation2 + $0x70] sm:$0xff]
        %v638 = vld [vmem:[#allocation2 + $0x78] sm:$0xff]
        %v639 = vld [vmem:[#allocation2 + $0x80] sm:$0xff]
        %v640 = vld [vmem:[#allocation2 + $0x88] sm:$0xff]
        %v641 = vld [vmem:[#allocation2 + $0x90] sm:$0xff]
        %v642 = vld [vmem:[#allocation2 + $0x98] sm:$0xff]
        %v643 = vld [vmem:[#allocation2 + $0xa0] sm:$0xff]
        %v644 = vld [vmem:[#allocation2 + $0xa8] sm:$0xff]
        %v645 = vld [vmem:[#allocation2 + $0xb0] sm:$0xff]
        %v646 = vld [vmem:[#allocation2 + $0xb8] sm:$0xff]
        %v647 = vld [vmem:[#allocation2 + $0xc0] sm:$0xff]
        %v648 = vld [vmem:[#allocation2 + $0xc8] sm:$0xff]
        %v649 = vld [vmem:[#allocation2 + $0xd0] sm:$0xff]
        %v650 = vld [vmem:[#allocation2 + $0xd8] sm:$0xff]
        %v651 = vld [vmem:[#allocation2 + $0xe0] sm:$0xff]
        %v652 = vld [vmem:[#allocation2 + $0xe8] sm:$0xff]
        %v653 = vld [vmem:[#allocation2 + $0xf0] sm:$0xff]
        %v654 = vld [vmem:[#allocation2 + $0xf8] sm:$0xff]
        %v655 = vld [vmem:[#allocation2 + $0x100] sm:$0xff]
        %v656 = vld [vmem:[#allocation2 + $0x108] sm:$0xff]
        %v657 = vld [vmem:[#allocation2 + $0x110] sm:$0xff]
        %v658 = vld [vmem:[#allocation2 + $0x118] sm:$0xff]
        %v659 = vld [vmem:[#allocation2 + $0x120] sm:$0xff]
        %v660 = vld [vmem:[#allocation2 + $0x128] sm:$0xff]
        %v661 = vld [vmem:[#allocation2 + $0x130] sm:$0xff]
        %v662 = vld [vmem:[#allocation2 + $0x138] sm:$0xff]
        %v663 = vld [vmem:[#allocation2 + $0x140] sm:$0xff]
        %v664 = vld [vmem:[#allocation2 + $0x148] sm:$0xff]
        %v665 = vld [vmem:[#allocation2 + $0x150] sm:$0xff]
        %v666 = vld [vmem:[#allocation2 + $0x158] sm:$0xff]
        %v667 = vld [vmem:[#allocation2 + $0x160] sm:$0xff]
        %v668 = vld [vmem:[#allocation2 + $0x168] sm:$0xff]
        %v669 = vld [vmem:[#allocation2 + $0x170] sm:$0xff]
        %v670 = vld [vmem:[#allocation2 + $0x178] sm:$0xff]
        %v671 = vld [vmem:[#allocation6] sm:$0xf]
        %v672 = vld [vmem:[#allocation6 + $0x4] sm:$0xf]
        %v673 = vld [vmem:[#allocation6 + $0x8] sm:$0xf]
        %v674 = vld [vmem:[#allocation6 + $0xc] sm:$0xf]
        %v675 = vld [vmem:[#allocation6 + $0x10] sm:$0xf]
        %v676 = vld [vmem:[#allocation6 + $0x14] sm:$0xf]
        %v677 = vld [vmem:[#allocation6 + $0x18] sm:$0xf]
        %v678 = vld [vmem:[#allocation6 + $0x1c] sm:$0xf]
        %v679 = vld [vmem:[#allocation6 + $0x20] sm:$0xf]
        %v680 = vld [vmem:[#allocation6 + $0x24] sm:$0xf]
        %v681 = vld [vmem:[#allocation6 + $0x28] sm:$0xf]
        %v682 = vld [vmem:[#allocation6 + $0x2c] sm:$0xf]
        %v683 = vld [vmem:[#allocation6 + $0x30] sm:$0xf]
        %v684 = vld [vmem:[#allocation6 + $0x34] sm:$0xf]
        %v685 = vld [vmem:[#allocation6 + $0x38] sm:$0xf]
        %v686 = vld [vmem:[#allocation6 + $0x3c] sm:$0xf]
        %v687 = vld [vmem:[#allocation6 + $0x40] sm:$0xf]
        %v688 = vld [vmem:[#allocation6 + $0x44] sm:$0xf]
        %v689 = vld [vmem:[#allocation6 + $0x48] sm:$0xf]
        %v690 = vld [vmem:[#allocation6 + $0x4c] sm:$0xf]
        %v691 = vld [vmem:[#allocation6 + $0x50] sm:$0xf]
        %v692 = vld [vmem:[#allocation6 + $0x54] sm:$0xf]
        %v693 = vld [vmem:[#allocation6 + $0x58] sm:$0xf]
        %v694 = vld [vmem:[#allocation6 + $0x5c] sm:$0xf]
        %v695 = vld [vmem:[#allocation6 + $0x60] sm:$0xf]
        %v696 = vld [vmem:[#allocation6 + $0x64] sm:$0xf]
        %v697 = vld [vmem:[#allocation6 + $0x68] sm:$0xf]
        %v698 = vld [vmem:[#allocation6 + $0x6c] sm:$0xf]
        %v699 = vld [vmem:[#allocation6 + $0x70] sm:$0xf]
        %v700 = vld [vmem:[#allocation6 + $0x74] sm:$0xf]
        %v701 = vld [vmem:[#allocation6 + $0x78] sm:$0xf]
        %v702 = vld [vmem:[#allocation6 + $0x7c] sm:$0xf]
        %v703 = vld [vmem:[#allocation6 + $0x80] sm:$0xf]
        %v704 = vld [vmem:[#allocation6 + $0x84] sm:$0xf]
        %v705 = vld [vmem:[#allocation6 + $0x88] sm:$0xf]
        %v706 = vld [vmem:[#allocation6 + $0x8c] sm:$0xf]
        %v707 = vld [vmem:[#allocation6 + $0x90] sm:$0xf]
        %v708 = vld [vmem:[#allocation6 + $0x94] sm:$0xf]
        %v709 = vld [vmem:[#allocation6 + $0x98] sm:$0xf]
        %v710 = vld [vmem:[#allocation6 + $0x9c] sm:$0xf]
        %v711 = vld [vmem:[#allocation6 + $0xa0] sm:$0xf]
        %v712 = vld [vmem:[#allocation6 + $0xa4] sm:$0xf]
        %v713 = vld [vmem:[#allocation6 + $0xa8] sm:$0xf]
        %v714 = vld [vmem:[#allocation6 + $0xac] sm:$0xf]
        %v715 = vld [vmem:[#allocation6 + $0xb0] sm:$0xf]
        %v716 = vld [vmem:[#allocation6 + $0xb4] sm:$0xf]
        %v717 = vld [vmem:[#allocation6 + $0xb8] sm:$0xf]
        %v718 = vld [vmem:[#allocation6 + $0xbc] sm:$0xf]
        %v719 = vld [vmem:[%s321] sm:$0xff]
        %v720 = vld [vmem:[%s321 + $0x8] sm:$0xff]
        %v721 = vld [vmem:[%s321 + $0x10] sm:$0xff]
        %v722 = vld [vmem:[%s321 + $0x18] sm:$0xff]
        %v723 = vld [vmem:[%s321 + $0x20] sm:$0xff]
        %v724 = vld [vmem:[%s321 + $0x28] sm:$0xff]
        %v725 = vld [vmem:[%s321 + $0x30] sm:$0xff]
        %v726 = vld [vmem:[%s321 + $0x38] sm:$0xff]
        %v727 = vld [vmem:[%s321 + $0x40] sm:$0xff]
        %v728 = vld [vmem:[%s321 + $0x48] sm:$0xff]
        %v729 = vld [vmem:[%s321 + $0x50] sm:$0xff]
        %v730 = vld [vmem:[%s321 + $0x58] sm:$0xff]
        %v731 = vld [vmem:[%s321 + $0x60] sm:$0xff]
        %v732 = vld [vmem:[%s321 + $0x68] sm:$0xff]
        %v733 = vld [vmem:[%s321 + $0x70] sm:$0xff]
        %v734 = vld [vmem:[%s321 + $0x78] sm:$0xff]
        %v735 = vld [vmem:[%s321 + $0x80] sm:$0xff]
        %v736 = vld [vmem:[%s321 + $0x88] sm:$0xff]
        %v737 = vld [vmem:[%s321 + $0x90] sm:$0xff]
        %v738 = vld [vmem:[%s321 + $0x98] sm:$0xff]
        %v739 = vld [vmem:[%s321 + $0xa0] sm:$0xff]
        %v740 = vld [vmem:[%s321 + $0xa8] sm:$0xff]
        %v741 = vld [vmem:[%s321 + $0xb0] sm:$0xff]
        %v742 = vld [vmem:[%s321 + $0xb8] sm:$0xff]
        %v743 = vld [vmem:[%s321 + $0xc0] sm:$0xff]
        %v744 = vld [vmem:[%s321 + $0xc8] sm:$0xff]
        %v745 = vld [vmem:[%s321 + $0xd0] sm:$0xff]
        %v746 = vld [vmem:[%s321 + $0xd8] sm:$0xff]
        %v747 = vld [vmem:[%s321 + $0xe0] sm:$0xff]
        %v748 = vld [vmem:[%s321 + $0xe8] sm:$0xff]
        %v749 = vld [vmem:[%s321 + $0xf0] sm:$0xff]
        %v750 = vld [vmem:[%s321 + $0xf8] sm:$0xff]
        %v751 = vld [vmem:[%s321 + $0x100] sm:$0xff]
        %v752 = vld [vmem:[%s321 + $0x108] sm:$0xff]
        %v753 = vld [vmem:[%s321 + $0x110] sm:$0xff]
        %v754 = vld [vmem:[%s321 + $0x118] sm:$0xff]
        %v755 = vld [vmem:[%s321 + $0x120] sm:$0xff]
        %v756 = vld [vmem:[%s321 + $0x128] sm:$0xff]
        %v757 = vld [vmem:[%s321 + $0x130] sm:$0xff]
        %v758 = vld [vmem:[%s321 + $0x138] sm:$0xff]
        %v759 = vld [vmem:[%s321 + $0x140] sm:$0xff]
        %v760 = vld [vmem:[%s321 + $0x148] sm:$0xff]
        %v761 = vld [vmem:[%s321 + $0x150] sm:$0xff]
        %v762 = vld [vmem:[%s321 + $0x158] sm:$0xff]
        %v763 = vld [vmem:[%s321 + $0x160] sm:$0xff]
        %v764 = vld [vmem:[%s321 + $0x168] sm:$0xff]
        %v765 = vld [vmem:[%s321 + $0x170] sm:$0xff]
        %v766 = vld [vmem:[%s321 + $0x178] sm:$0xff]
        %s767 = scalar_lea.vmem [#allocation6], 192
        %v768 = vld [vmem:[%s767] sm:$0xf]
        %v769 = vld [vmem:[%s767 + $0x4] sm:$0xf]
        %v770 = vld [vmem:[%s767 + $0x8] sm:$0xf]
        %v771 = vld [vmem:[%s767 + $0xc] sm:$0xf]
        %v772 = vld [vmem:[%s767 + $0x10] sm:$0xf]
        %v773 = vld [vmem:[%s767 + $0x14] sm:$0xf]
        %v774 = vld [vmem:[%s767 + $0x18] sm:$0xf]
        %v775 = vld [vmem:[%s767 + $0x1c] sm:$0xf]
        %v776 = vld [vmem:[%s767 + $0x20] sm:$0xf]
        %v777 = vld [vmem:[%s767 + $0x24] sm:$0xf]
        %v778 = vld [vmem:[%s767 + $0x28] sm:$0xf]
        %v779 = vld [vmem:[%s767 + $0x2c] sm:$0xf]
        %v780 = vld [vmem:[%s767 + $0x30] sm:$0xf]
        %v781 = vld [vmem:[%s767 + $0x34] sm:$0xf]
        %v782 = vld [vmem:[%s767 + $0x38] sm:$0xf]
        %v783 = vld [vmem:[%s767 + $0x3c] sm:$0xf]
        %v784 = vld [vmem:[%s767 + $0x40] sm:$0xf]
        %v785 = vld [vmem:[%s767 + $0x44] sm:$0xf]
        %v786 = vld [vmem:[%s767 + $0x48] sm:$0xf]
        %v787 = vld [vmem:[%s767 + $0x4c] sm:$0xf]
        %v788 = vld [vmem:[%s767 + $0x50] sm:$0xf]
        %v789 = vld [vmem:[%s767 + $0x54] sm:$0xf]
        %v790 = vld [vmem:[%s767 + $0x58] sm:$0xf]
        %v791 = vld [vmem:[%s767 + $0x5c] sm:$0xf]
        %v792 = vld [vmem:[%s767 + $0x60] sm:$0xf]
        %v793 = vld [vmem:[%s767 + $0x64] sm:$0xf]
        %v794 = vld [vmem:[%s767 + $0x68] sm:$0xf]
        %v795 = vld [vmem:[%s767 + $0x6c] sm:$0xf]
        %v796 = vld [vmem:[%s767 + $0x70] sm:$0xf]
        %v797 = vld [vmem:[%s767 + $0x74] sm:$0xf]
        %v798 = vld [vmem:[%s767 + $0x78] sm:$0xf]
        %v799 = vld [vmem:[%s767 + $0x7c] sm:$0xf]
        %v800 = vld [vmem:[%s767 + $0x80] sm:$0xf]
        %v801 = vld [vmem:[%s767 + $0x84] sm:$0xf]
        %v802 = vld [vmem:[%s767 + $0x88] sm:$0xf]
        %v803 = vld [vmem:[%s767 + $0x8c] sm:$0xf]
        %v804 = vld [vmem:[%s767 + $0x90] sm:$0xf]
        %v805 = vld [vmem:[%s767 + $0x94] sm:$0xf]
        %v806 = vld [vmem:[%s767 + $0x98] sm:$0xf]
        %v807 = vld [vmem:[%s767 + $0x9c] sm:$0xf]
        %v808 = vld [vmem:[%s767 + $0xa0] sm:$0xf]
        %v809 = vld [vmem:[%s767 + $0xa4] sm:$0xf]
        %v810 = vld [vmem:[%s767 + $0xa8] sm:$0xf]
        %v811 = vld [vmem:[%s767 + $0xac] sm:$0xf]
        %v812 = vld [vmem:[%s767 + $0xb0] sm:$0xf]
        %v813 = vld [vmem:[%s767 + $0xb4] sm:$0xf]
        %v814 = vld [vmem:[%s767 + $0xb8] sm:$0xf]
        %v815 = vld [vmem:[%s767 + $0xbc] sm:$0xf]
        %v864 = vunpack.c.l.b16 %v768
        %v865 = vunpack.c.l.b16 %v769
        %v866 = vunpack.c.l.b16 %v770
        %v867 = vunpack.c.l.b16 %v771
        %v868 = vunpack.c.l.b16 %v772
        %v869 = vunpack.c.l.b16 %v773
        %v870 = vunpack.c.l.b16 %v774
        %v871 = vunpack.c.l.b16 %v775
        %v872 = vunpack.c.l.b16 %v776
        %v873 = vunpack.c.l.b16 %v777
        %v874 = vunpack.c.l.b16 %v778
        %v875 = vunpack.c.l.b16 %v779
        %v876 = vunpack.c.l.b16 %v780
        %v877 = vunpack.c.l.b16 %v781
        %v878 = vunpack.c.l.b16 %v782
        %v879 = vunpack.c.l.b16 %v783
        %v880 = vunpack.c.l.b16 %v784
        %v881 = vunpack.c.l.b16 %v785
        %v882 = vunpack.c.l.b16 %v786
        %v883 = vunpack.c.l.b16 %v787
        %v884 = vunpack.c.l.b16 %v788
        %v885 = vunpack.c.l.b16 %v789
        %v886 = vunpack.c.l.b16 %v790
        %v887 = vunpack.c.l.b16 %v791
        %v888 = vunpack.c.l.b16 %v792
        %v889 = vunpack.c.l.b16 %v793
        %v890 = vunpack.c.l.b16 %v794
        %v891 = vunpack.c.l.b16 %v795
        %v892 = vunpack.c.l.b16 %v796
        %v893 = vunpack.c.l.b16 %v797
        %v894 = vunpack.c.l.b16 %v798
        %v895 = vunpack.c.l.b16 %v799
        %v896 = vunpack.c.l.b16 %v800
        %v897 = vunpack.c.l.b16 %v801
        %v898 = vunpack.c.l.b16 %v802
        %v899 = vunpack.c.l.b16 %v803
        %v900 = vunpack.c.l.b16 %v804
        %v901 = vunpack.c.l.b16 %v805
        %v902 = vunpack.c.l.b16 %v806
        %v903 = vunpack.c.l.b16 %v807
        %v904 = vunpack.c.l.b16 %v808
        %v905 = vunpack.c.l.b16 %v809
        %v906 = vunpack.c.l.b16 %v810
        %v907 = vunpack.c.l.b16 %v811
        %v908 = vunpack.c.l.b16 %v812
        %v909 = vunpack.c.l.b16 %v813
        %v910 = vunpack.c.l.b16 %v814
        %v911 = vunpack.c.l.b16 %v815
        %v912 = vpack.c.b16 %v865, %v864
        %v913 = vpack.c.b16 %v867, %v866
        %v914 = vpack.c.b16 %v869, %v868
        %v915 = vpack.c.b16 %v871, %v870
        %v916 = vpack.c.b16 %v873, %v872
        %v917 = vpack.c.b16 %v875, %v874
        %v918 = vpack.c.b16 %v877, %v876
        %v919 = vpack.c.b16 %v879, %v878
        %v920 = vpack.c.b16 %v881, %v880
        %v921 = vpack.c.b16 %v883, %v882
        %v922 = vpack.c.b16 %v885, %v884
        %v923 = vpack.c.b16 %v887, %v886
        %v924 = vpack.c.b16 %v889, %v888
        %v925 = vpack.c.b16 %v891, %v890
        %v926 = vpack.c.b16 %v893, %v892
        %v927 = vpack.c.b16 %v895, %v894
        %v928 = vpack.c.b16 %v897, %v896
        %v929 = vpack.c.b16 %v899, %v898
        %v930 = vpack.c.b16 %v901, %v900
        %v931 = vpack.c.b16 %v903, %v902
        %v932 = vpack.c.b16 %v905, %v904
        %v933 = vpack.c.b16 %v907, %v906
        %v934 = vpack.c.b16 %v909, %v908
        %v935 = vpack.c.b16 %v911, %v910
        %960 = vmatprep.subr.bf16.mxu0 0
        %961 = vmatpush1.bf16.msra.mxu0 %v912
        %962 = vmatprep.subr.bf16.mxu0 0
        %963 = vmatpush1.bf16.msra.mxu0 %v913
        %964 = vmatprep.subr.bf16.mxu0 0
        %965 = vmatpush1.bf16.msra.mxu0 %v914
        %966 = vmatprep.subr.bf16.mxu0 0
        %967 = vmatpush1.bf16.msra.mxu0 %v915
        %968 = vmatprep.subr.bf16.mxu0 0
        %969 = vmatpush1.bf16.msra.mxu0 %v916
        %970 = vmatprep.subr.bf16.mxu0 0
        %971 = vmatpush1.bf16.msra.mxu0 %v917
        %972 = vmatprep.subr.bf16.mxu0 0
        %973 = vmatpush1.bf16.msra.mxu0 %v918
        %974 = vmatprep.subr.bf16.mxu0 0
        %975 = vmatpush1.bf16.msra.mxu0 %v919
        %976 = vmatprep.subr.bf16.mxu0 0
        %977 = vmatpush1.bf16.msra.mxu0 %v920
        %978 = vmatprep.subr.bf16.mxu0 0
        %979 = vmatpush1.bf16.msra.mxu0 %v921
        %980 = vmatprep.subr.bf16.mxu0 0
        %981 = vmatpush1.bf16.msra.mxu0 %v922
        %982 = vmatprep.subr.bf16.mxu0 0
        %983 = vmatpush1.bf16.msra.mxu0 %v923
        %984 = vmatprep.subr.bf16.mxu0 0
        %985 = vmatpush1.bf16.msra.mxu0 %v924
        %986 = vmatprep.subr.bf16.mxu0 0
        %987 = vmatpush1.bf16.msra.mxu0 %v925
        %988 = vmatprep.subr.bf16.mxu0 0
        %989 = vmatpush1.bf16.msra.mxu0 %v926
        %990 = vmatprep.subr.bf16.mxu0 0
        %991 = vmatpush1.bf16.msra.mxu0 %v927
        %992 = vmatprep.mubr.bf16.mxu0 %v720
        %993 = vmatmul.mubr.bf16.gmra.mrb[0].mxu0 %v719
        %v994 = vpop.f32.mrb[0].mxu0
        %v995 = vadd.f32 0.0, %v994
        %v996 = vpop.f32.mrb[0].mxu0
        %v997 = vpop.f32.mrb[0].mxu0
        %v998 = vadd.f32 0.0, %v997
        %v999 = vpop.f32.mrb[0].mxu0
        %1000 = vmatprep.mubr.bf16.mxu0 %v723
        %1001 = vmatmul.mubr.bf16.gmra.mrb[0].mxu0 %v722
        %v1002 = vpop.f32.mrb[0].mxu0
        %v1003 = vadd.f32 0.0, %v1002
        %v1004 = vpop.f32.mrb[0].mxu0
        %v1005 = vpop.f32.mrb[0].mxu0
        %v1006 = vadd.f32 0.0, %v1005
        %v1007 = vpop.f32.mrb[0].mxu0
        %1008 = vmatprep.mubr.bf16.mxu0 %v726
        %1009 = vmatmul.mubr.bf16.gmra.mrb[0].mxu0 %v725
        %v1010 = vpop.f32.mrb[0].mxu0
        %v1011 = vadd.f32 0.0, %v1010
        %v1012 = vpop.f32.mrb[0].mxu0
        %v1013 = vpop.f32.mrb[0].mxu0
        %v1014 = vadd.f32 0.0, %v1013
        %v1015 = vpop.f32.mrb[0].mxu0
        %1016 = vmatprep.mubr.bf16.mxu0 %v729
        %1017 = vmatmul.mubr.bf16.gmra.mrb[0].mxu0 %v728
        %v1018 = vpop.f32.mrb[0].mxu0
        %v1019 = vadd.f32 0.0, %v1018
        %v1020 = vpop.f32.mrb[0].mxu0
        %v1021 = vpop.f32.mrb[0].mxu0
        %v1022 = vadd.f32 0.0, %v1021
        %v1023 = vpop.f32.mrb[0].mxu0
        %1024 = vmatprep.mubr.bf16.mxu0 %v732
        %1025 = vmatmul.mubr.bf16.gmra.mrb[0].mxu0 %v731
        %v1026 = vpop.f32.mrb[0].mxu0
        %v1027 = vadd.f32 0.0, %v1026
        %v1028 = vpop.f32.mrb[0].mxu0
        %v1029 = vpop.f32.mrb[0].mxu0
        %v1030 = vadd.f32 0.0, %v1029
        %v1031 = vpop.f32.mrb[0].mxu0
        %1032 = vmatprep.mubr.bf16.mxu0 %v735
        %1033 = vmatmul.mubr.bf16.gmra.mrb[0].mxu0 %v734
        %v1034 = vpop.f32.mrb[0].mxu0
        %v1035 = vadd.f32 0.0, %v1034
        %v1036 = vpop.f32.mrb[0].mxu0
        %v1037 = vpop.f32.mrb[0].mxu0
        %v1038 = vadd.f32 0.0, %v1037
        %v1039 = vpop.f32.mrb[0].mxu0
        %1040 = vmatprep.mubr.bf16.mxu0 %v738
        %1041 = vmatmul.mubr.bf16.gmra.mrb[0].mxu0 %v737
        %v1042 = vpop.f32.mrb[0].mxu0
        %v1043 = vadd.f32 0.0, %v1042
        %v1044 = vpop.f32.mrb[0].mxu0
        %v1045 = vpop.f32.mrb[0].mxu0
        %v1046 = vadd.f32 0.0, %v1045
        %v1047 = vpop.f32.mrb[0].mxu0
        %1048 = vmatprep.mubr.bf16.mxu0 %v741
        %1049 = vmatmul.mubr.bf16.gmra.mrb[0].mxu0 %v740
        %v1050 = vpop.f32.mrb[0].mxu0
        %v1051 = vadd.f32 0.0, %v1050
        %v1052 = vpop.f32.mrb[0].mxu0
        %v1053 = vpop.f32.mrb[0].mxu0
        %v1054 = vadd.f32 0.0, %v1053
        %v1055 = vpop.f32.mrb[0].mxu0
        %1056 = vmatprep.mubr.bf16.mxu0 %v744
        %1057 = vmatmul.mubr.bf16.gmra.mrb[0].mxu0 %v743
        %v1058 = vpop.f32.mrb[0].mxu0
        %v1059 = vadd.f32 0.0, %v1058
        %v1060 = vpop.f32.mrb[0].mxu0
        %v1061 = vpop.f32.mrb[0].mxu0
        %v1062 = vadd.f32 0.0, %v1061
        %v1063 = vpop.f32.mrb[0].mxu0
        %1064 = vmatprep.mubr.bf16.mxu0 %v747
        %1065 = vmatmul.mubr.bf16.gmra.mrb[0].mxu0 %v746
        %v1066 = vpop.f32.mrb[0].mxu0
        %v1067 = vadd.f32 0.0, %v1066
        %v1068 = vpop.f32.mrb[0].mxu0
        %v1069 = vpop.f32.mrb[0].mxu0
        %v1070 = vadd.f32 0.0, %v1069
        %v1071 = vpop.f32.mrb[0].mxu0
        %1072 = vmatprep.mubr.bf16.mxu0 %v750
        %1073 = vmatmul.mubr.bf16.gmra.mrb[0].mxu0 %v749
        %v1074 = vpop.f32.mrb[0].mxu0
        %v1075 = vadd.f32 0.0, %v1074
        %v1076 = vpop.f32.mrb[0].mxu0
        %v1077 = vpop.f32.mrb[0].mxu0
        %v1078 = vadd.f32 0.0, %v1077
        %v1079 = vpop.f32.mrb[0].mxu0
        %1080 = vmatprep.mubr.bf16.mxu0 %v753
        %1081 = vmatmul.mubr.bf16.gmra.mrb[0].mxu0 %v752
        %v1082 = vpop.f32.mrb[0].mxu0
        %v1083 = vadd.f32 0.0, %v1082
        %v1084 = vpop.f32.mrb[0].mxu0
        %v1085 = vpop.f32.mrb[0].mxu0
        %v1086 = vadd.f32 0.0, %v1085
        %v1087 = vpop.f32.mrb[0].mxu0
        %1088 = vmatprep.mubr.bf16.mxu0 %v756
        %1089 = vmatmul.mubr.bf16.gmra.mrb[0].mxu0 %v755
        %v1090 = vpop.f32.mrb[0].mxu0
        %v1091 = vadd.f32 0.0, %v1090
        %v1092 = vpop.f32.mrb[0].mxu0
        %v1093 = vpop.f32.mrb[0].mxu0
        %v1094 = vadd.f32 0.0, %v1093
        %v1095 = vpop.f32.mrb[0].mxu0
        %1096 = vmatprep.mubr.bf16.mxu0 %v759
        %1097 = vmatmul.mubr.bf16.gmra.mrb[0].mxu0 %v758
        %v1098 = vpop.f32.mrb[0].mxu0
        %v1099 = vadd.f32 0.0, %v1098
        %v1100 = vpop.f32.mrb[0].mxu0
        %v1101 = vpop.f32.mrb[0].mxu0
        %v1102 = vadd.f32 0.0, %v1101
        %v1103 = vpop.f32.mrb[0].mxu0
        %1104 = vmatprep.mubr.bf16.mxu0 %v762
        %1105 = vmatmul.mubr.bf16.gmra.mrb[0].mxu0 %v761
        %v1106 = vpop.f32.mrb[0].mxu0
        %v1107 = vadd.f32 0.0, %v1106
        %v1108 = vpop.f32.mrb[0].mxu0
        %v1109 = vpop.f32.mrb[0].mxu0
        %v1110 = vadd.f32 0.0, %v1109
        %v1111 = vpop.f32.mrb[0].mxu0
        %1112 = vmatprep.mubr.bf16.mxu0 %v765
        %1113 = vmatmul.mubr.bf16.gmra.mrb[0].mxu0 %v764
        %v1114 = vpop.f32.mrb[0].mxu0
        %v1115 = vadd.f32 0.0, %v1114
        %v1116 = vpop.f32.mrb[0].mxu0
        %v1117 = vpop.f32.mrb[0].mxu0
        %v1118 = vadd.f32 0.0, %v1117
        %v1119 = vpop.f32.mrb[0].mxu0
        %1120 = vdwg.mxu0
        %1121 = vmatprep.subr.bf16.mxu0 0
        %1122 = vmatpush1.bf16.msra.mxu0 %v928
        %1123 = vmatprep.subr.bf16.mxu0 0
        %1124 = vmatpush1.bf16.msra.mxu0 %v929
        %1125 = vmatprep.subr.bf16.mxu0 0
        %1126 = vmatpush1.bf16.msra.mxu0 %v930
        %1127 = vmatprep.subr.bf16.mxu0 0
        %1128 = vmatpush1.bf16.msra.mxu0 %v931
        %1129 = vmatprep.subr.bf16.mxu0 0
        %1130 = vmatpush1.bf16.msra.mxu0 %v932
        %1131 = vmatprep.subr.bf16.mxu0 0
        %1132 = vmatpush1.bf16.msra.mxu0 %v933
        %1133 = vmatprep.subr.bf16.mxu0 0
        %1134 = vmatpush1.bf16.msra.mxu0 %v934
        %1135 = vmatprep.subr.bf16.mxu0 0
        %1136 = vmatpush1.bf16.msra.mxu0 %v935
        %1137 = vmatprep.subr.bf16.mxu0 0
        %1138 = vmatpush1.bf16.msra.mxu0 0
        %1139 = vmatprep.subr.bf16.mxu0 0
        %1140 = vmatpush1.bf16.msra.mxu0 0
        %1141 = vmatprep.subr.bf16.mxu0 0
        %1142 = vmatpush1.bf16.msra.mxu0 0
        %1143 = vmatprep.subr.bf16.mxu0 0
        %1144 = vmatpush1.bf16.msra.mxu0 0
        %1145 = vmatprep.subr.bf16.mxu0 0
        %1146 = vmatpush1.bf16.msra.mxu0 0
        %1147 = vmatprep.subr.bf16.mxu0 0
        %1148 = vmatpush1.bf16.msra.mxu0 0
        %1149 = vmatprep.subr.bf16.mxu0 0
        %1150 = vmatpush1.bf16.msra.mxu0 0
        %1151 = vmatprep.subr.bf16.mxu0 0
        %1152 = vmatpush1.bf16.msra.mxu0 0
        %1153 = vmatprep.mubr.bf16.mxu0 0
        %1154 = vmatmul.mubr.bf16.gmra.mrb[0].mxu0 %v721
        %v1155 = vpop.f32.mrb[0].mxu0
        %v1156 = vadd.f32 %v995, %v1155
        %v1157 = vpop.f32.mrb[0].mxu0
        %v1158 = vpop.f32.mrb[0].mxu0
        %v1159 = vadd.f32 %v998, %v1158
        %v1160 = vpop.f32.mrb[0].mxu0
        %1161 = vmatprep.mubr.bf16.mxu0 0
        %1162 = vmatmul.mubr.bf16.gmra.mrb[0].mxu0 %v724
        %v1163 = vpop.f32.mrb[0].mxu0
        %v1164 = vadd.f32 %v1003, %v1163
        %v1165 = vpop.f32.mrb[0].mxu0
        %v1166 = vpop.f32.mrb[0].mxu0
        %v1167 = vadd.f32 %v1006, %v1166
        %v1168 = vpop.f32.mrb[0].mxu0
        %1169 = vmatprep.mubr.bf16.mxu0 0
        %1170 = vmatmul.mubr.bf16.gmra.mrb[0].mxu0 %v727
        %v1171 = vpop.f32.mrb[0].mxu0
        %v1172 = vadd.f32 %v1011, %v1171
        %v1173 = vpop.f32.mrb[0].mxu0
        %v1174 = vpop.f32.mrb[0].mxu0
        %v1175 = vadd.f32 %v1014, %v1174
        %v1176 = vpop.f32.mrb[0].mxu0
        %1177 = vmatprep.mubr.bf16.mxu0 0
        %1178 = vmatmul.mubr.bf16.gmra.mrb[0].mxu0 %v730
        %v1179 = vpop.f32.mrb[0].mxu0
        %v1180 = vadd.f32 %v1019, %v1179
        %v1181 = vpop.f32.mrb[0].mxu0
        %v1182 = vpop.f32.mrb[0].mxu0
        %v1183 = vadd.f32 %v1022, %v1182
        %v1184 = vpop.f32.mrb[0].mxu0
        %1185 = vmatprep.mubr.bf16.mxu0 0
        %1186 = vmatmul.mubr.bf16.gmra.mrb[0].mxu0 %v733
        %v1187 = vpop.f32.mrb[0].mxu0
        %v1188 = vadd.f32 %v1027, %v1187
        %v1189 = vpop.f32.mrb[0].mxu0
        %v1190 = vpop.f32.mrb[0].mxu0
        %v1191 = vadd.f32 %v1030, %v1190
        %v1192 = vpop.f32.mrb[0].mxu0
        %1193 = vmatprep.mubr.bf16.mxu0 0
        %1194 = vmatmul.mubr.bf16.gmra.mrb[0].mxu0 %v736
        %v1195 = vpop.f32.mrb[0].mxu0
        %v1196 = vadd.f32 %v1035, %v1195
        %v1197 = vpop.f32.mrb[0].mxu0
        %v1198 = vpop.f32.mrb[0].mxu0
        %v1199 = vadd.f32 %v1038, %v1198
        %v1200 = vpop.f32.mrb[0].mxu0
        %1201 = vmatprep.mubr.bf16.mxu0 0
        %1202 = vmatmul.mubr.bf16.gmra.mrb[0].mxu0 %v739
        %v1203 = vpop.f32.mrb[0].mxu0
        %v1204 = vadd.f32 %v1043, %v1203
        %v1205 = vpop.f32.mrb[0].mxu0
        %v1206 = vpop.f32.mrb[0].mxu0
        %v1207 = vadd.f32 %v1046, %v1206
        %v1208 = vpop.f32.mrb[0].mxu0
        %1209 = vmatprep.mubr.bf16.mxu0 0
        %1210 = vmatmul.mubr.bf16.gmra.mrb[0].mxu0 %v742
        %v1211 = vpop.f32.mrb[0].mxu0
        %v1212 = vadd.f32 %v1051, %v1211
        %v1213 = vpop.f32.mrb[0].mxu0
        %v1214 = vpop.f32.mrb[0].mxu0
        %v1215 = vadd.f32 %v1054, %v1214
        %v1216 = vpop.f32.mrb[0].mxu0
        %1217 = vmatprep.mubr.bf16.mxu0 0
        %1218 = vmatmul.mubr.bf16.gmra.mrb[0].mxu0 %v745
        %v1219 = vpop.f32.mrb[0].mxu0
        %v1220 = vadd.f32 %v1059, %v1219
        %v1221 = vpop.f32.mrb[0].mxu0
        %v1222 = vpop.f32.mrb[0].mxu0
        %v1223 = vadd.f32 %v1062, %v1222
        %v1224 = vpop.f32.mrb[0].mxu0
        %1225 = vmatprep.mubr.bf16.mxu0 0
        %1226 = vmatmul.mubr.bf16.gmra.mrb[0].mxu0 %v748
        %v1227 = vpop.f32.mrb[0].mxu0
        %v1228 = vadd.f32 %v1067, %v1227
        %v1229 = vpop.f32.mrb[0].mxu0
        %v1230 = vpop.f32.mrb[0].mxu0
        %v1231 = vadd.f32 %v1070, %v1230
        %v1232 = vpop.f32.mrb[0].mxu0
        %1233 = vmatprep.mubr.bf16.mxu0 0
        %1234 = vmatmul.mubr.bf16.gmra.mrb[0].mxu0 %v751
        %v1235 = vpop.f32.mrb[0].mxu0
        %v1236 = vadd.f32 %v1075, %v1235
        %v1237 = vpop.f32.mrb[0].mxu0
        %v1238 = vpop.f32.mrb[0].mxu0
        %v1239 = vadd.f32 %v1078, %v1238
        %v1240 = vpop.f32.mrb[0].mxu0
        %1241 = vmatprep.mubr.bf16.mxu0 0
        %1242 = vmatmul.mubr.bf16.gmra.mrb[0].mxu0 %v754
        %v1243 = vpop.f32.mrb[0].mxu0
        %v1244 = vadd.f32 %v1083, %v1243
        %v1245 = vpop.f32.mrb[0].mxu0
        %v1246 = vpop.f32.mrb[0].mxu0
        %v1247 = vadd.f32 %v1086, %v1246
        %v1248 = vpop.f32.mrb[0].mxu0
        %1249 = vmatprep.mubr.bf16.mxu0 0
        %1250 = vmatmul.mubr.bf16.gmra.mrb[0].mxu0 %v757
        %v1251 = vpop.f32.mrb[0].mxu0
        %v1252 = vadd.f32 %v1091, %v1251
        %v1253 = vpop.f32.mrb[0].mxu0
        %v1254 = vpop.f32.mrb[0].mxu0
        %v1255 = vadd.f32 %v1094, %v1254
        %v1256 = vpop.f32.mrb[0].mxu0
        %1257 = vmatprep.mubr.bf16.mxu0 0
        %1258 = vmatmul.mubr.bf16.gmra.mrb[0].mxu0 %v760
        %v1259 = vpop.f32.mrb[0].mxu0
        %v1260 = vadd.f32 %v1099, %v1259
        %v1261 = vpop.f32.mrb[0].mxu0
        %v1262 = vpop.f32.mrb[0].mxu0
        %v1263 = vadd.f32 %v1102, %v1262
        %v1264 = vpop.f32.mrb[0].mxu0
        %1265 = vmatprep.mubr.bf16.mxu0 0
        %1266 = vmatmul.mubr.bf16.gmra.mrb[0].mxu0 %v763
        %v1267 = vpop.f32.mrb[0].mxu0
        %v1268 = vadd.f32 %v1107, %v1267
        %v1269 = vpop.f32.mrb[0].mxu0
        %v1270 = vpop.f32.mrb[0].mxu0
        %v1271 = vadd.f32 %v1110, %v1270
        %v1272 = vpop.f32.mrb[0].mxu0
        %1273 = vmatprep.mubr.bf16.mxu0 0
        %1274 = vmatmul.mubr.bf16.gmra.mrb[0].mxu0 %v766
        %v1275 = vpop.f32.mrb[0].mxu0
        %v1276 = vadd.f32 %v1115, %v1275
        %v1277 = vpop.f32.mrb[0].mxu0
        %v1278 = vpop.f32.mrb[0].mxu0
        %v1279 = vadd.f32 %v1118, %v1278
        %v1280 = vpop.f32.mrb[0].mxu0
        %1281 = vdwg.mxu0
        %v1330 = vunpack.c.l.b16 %v671
        %v1331 = vunpack.c.l.b16 %v672
        %v1332 = vunpack.c.l.b16 %v673
        %v1333 = vunpack.c.l.b16 %v674
        %v1334 = vunpack.c.l.b16 %v675
        %v1335 = vunpack.c.l.b16 %v676
        %v1336 = vunpack.c.l.b16 %v677
        %v1337 = vunpack.c.l.b16 %v678
        %v1338 = vunpack.c.l.b16 %v679
        %v1339 = vunpack.c.l.b16 %v680
        %v1340 = vunpack.c.l.b16 %v681
        %v1341 = vunpack.c.l.b16 %v682
        %v1342 = vunpack.c.l.b16 %v683
        %v1343 = vunpack.c.l.b16 %v684
        %v1344 = vunpack.c.l.b16 %v685
        %v1345 = vunpack.c.l.b16 %v686
        %v1346 = vunpack.c.l.b16 %v687
        %v1347 = vunpack.c.l.b16 %v688
        %v1348 = vunpack.c.l.b16 %v689
        %v1349 = vunpack.c.l.b16 %v690
        %v1350 = vunpack.c.l.b16 %v691
        %v1351 = vunpack.c.l.b16 %v692
        %v1352 = vunpack.c.l.b16 %v693
        %v1353 = vunpack.c.l.b16 %v694
        %v1354 = vunpack.c.l.b16 %v695
        %v1355 = vunpack.c.l.b16 %v696
        %v1356 = vunpack.c.l.b16 %v697
        %v1357 = vunpack.c.l.b16 %v698
        %v1358 = vunpack.c.l.b16 %v699
        %v1359 = vunpack.c.l.b16 %v700
        %v1360 = vunpack.c.l.b16 %v701
        %v1361 = vunpack.c.l.b16 %v702
        %v1362 = vunpack.c.l.b16 %v703
        %v1363 = vunpack.c.l.b16 %v704
        %v1364 = vunpack.c.l.b16 %v705
        %v1365 = vunpack.c.l.b16 %v706
        %v1366 = vunpack.c.l.b16 %v707
        %v1367 = vunpack.c.l.b16 %v708
        %v1368 = vunpack.c.l.b16 %v709
        %v1369 = vunpack.c.l.b16 %v710
        %v1370 = vunpack.c.l.b16 %v711
        %v1371 = vunpack.c.l.b16 %v712
        %v1372 = vunpack.c.l.b16 %v713
        %v1373 = vunpack.c.l.b16 %v714
        %v1374 = vunpack.c.l.b16 %v715
        %v1375 = vunpack.c.l.b16 %v716
        %v1376 = vunpack.c.l.b16 %v717
        %v1377 = vunpack.c.l.b16 %v718
        %v1378 = vpack.c.b16 %v1331, %v1330
        %v1379 = vpack.c.b16 %v1333, %v1332
        %v1380 = vpack.c.b16 %v1335, %v1334
        %v1381 = vpack.c.b16 %v1337, %v1336
        %v1382 = vpack.c.b16 %v1339, %v1338
        %v1383 = vpack.c.b16 %v1341, %v1340
        %v1384 = vpack.c.b16 %v1343, %v1342
        %v1385 = vpack.c.b16 %v1345, %v1344
        %v1386 = vpack.c.b16 %v1347, %v1346
        %v1387 = vpack.c.b16 %v1349, %v1348
        %v1388 = vpack.c.b16 %v1351, %v1350
        %v1389 = vpack.c.b16 %v1353, %v1352
        %v1390 = vpack.c.b16 %v1355, %v1354
        %v1391 = vpack.c.b16 %v1357, %v1356
        %v1392 = vpack.c.b16 %v1359, %v1358
        %v1393 = vpack.c.b16 %v1361, %v1360
        %v1394 = vpack.c.b16 %v1363, %v1362
        %v1395 = vpack.c.b16 %v1365, %v1364
        %v1396 = vpack.c.b16 %v1367, %v1366
        %v1397 = vpack.c.b16 %v1369, %v1368
        %v1398 = vpack.c.b16 %v1371, %v1370
        %v1399 = vpack.c.b16 %v1373, %v1372
        %v1400 = vpack.c.b16 %v1375, %v1374
        %v1401 = vpack.c.b16 %v1377, %v1376
        %1426 = vmatprep.subr.bf16.mxu0 0
        %1427 = vmatpush1.bf16.msra.mxu0 %v1378
        %1428 = vmatprep.subr.bf16.mxu0 0
        %1429 = vmatpush1.bf16.msra.mxu0 %v1379
        %1430 = vmatprep.subr.bf16.mxu0 0
        %1431 = vmatpush1.bf16.msra.mxu0 %v1380
        %1432 = vmatprep.subr.bf16.mxu0 0
        %1433 = vmatpush1.bf16.msra.mxu0 %v1381
        %1434 = vmatprep.subr.bf16.mxu0 0
        %1435 = vmatpush1.bf16.msra.mxu0 %v1382
        %1436 = vmatprep.subr.bf16.mxu0 0
        %1437 = vmatpush1.bf16.msra.mxu0 %v1383
        %1438 = vmatprep.subr.bf16.mxu0 0
        %1439 = vmatpush1.bf16.msra.mxu0 %v1384
        %1440 = vmatprep.subr.bf16.mxu0 0
        %1441 = vmatpush1.bf16.msra.mxu0 %v1385
        %1442 = vmatprep.subr.bf16.mxu0 0
        %1443 = vmatpush1.bf16.msra.mxu0 %v1386
        %1444 = vmatprep.subr.bf16.mxu0 0
        %1445 = vmatpush1.bf16.msra.mxu0 %v1387
        %1446 = vmatprep.subr.bf16.mxu0 0
        %1447 = vmatpush1.bf16.msra.mxu0 %v1388
        %1448 = vmatprep.subr.bf16.mxu0 0
        %1449 = vmatpush1.bf16.msra.mxu0 %v1389
        %1450 = vmatprep.subr.bf16.mxu0 0
        %1451 = vmatpush1.bf16.msra.mxu0 %v1390
        %1452 = vmatprep.subr.bf16.mxu0 0
        %1453 = vmatpush1.bf16.msra.mxu0 %v1391
        %1454 = vmatprep.subr.bf16.mxu0 0
        %1455 = vmatpush1.bf16.msra.mxu0 %v1392
        %1456 = vmatprep.subr.bf16.mxu0 0
        %1457 = vmatpush1.bf16.msra.mxu0 %v1393
        %1458 = vmatprep.mubr.bf16.mxu0 %v624
        %1459 = vmatmul.mubr.bf16.gmra.mrb[0].mxu0 %v623
        %v1460 = vpop.f32.mrb[0].mxu0
        %v1461 = vadd.f32 %v1156, %v1460
        %v1462 = vpop.f32.mrb[0].mxu0
        %v1463 = vpop.f32.mrb[0].mxu0
        %v1464 = vadd.f32 %v1159, %v1463
        %v1465 = vpop.f32.mrb[0].mxu0
        %1466 = vmatprep.mubr.bf16.mxu0 %v627
        %1467 = vmatmul.mubr.bf16.gmra.mrb[0].mxu0 %v626
        %v1468 = vpop.f32.mrb[0].mxu0
        %v1469 = vadd.f32 %v1164, %v1468
        %v1470 = vpop.f32.mrb[0].mxu0
        %v1471 = vpop.f32.mrb[0].mxu0
        %v1472 = vadd.f32 %v1167, %v1471
        %v1473 = vpop.f32.mrb[0].mxu0
        %1474 = vmatprep.mubr.bf16.mxu0 %v630
        %1475 = vmatmul.mubr.bf16.gmra.mrb[0].mxu0 %v629
        %v1476 = vpop.f32.mrb[0].mxu0
        %v1477 = vadd.f32 %v1172, %v1476
        %v1478 = vpop.f32.mrb[0].mxu0
        %v1479 = vpop.f32.mrb[0].mxu0
        %v1480 = vadd.f32 %v1175, %v1479
        %v1481 = vpop.f32.mrb[0].mxu0
        %1482 = vmatprep.mubr.bf16.mxu0 %v633
        %1483 = vmatmul.mubr.bf16.gmra.mrb[0].mxu0 %v632
        %v1484 = vpop.f32.mrb[0].mxu0
        %v1485 = vadd.f32 %v1180, %v1484
        %v1486 = vpop.f32.mrb[0].mxu0
        %v1487 = vpop.f32.mrb[0].mxu0
        %v1488 = vadd.f32 %v1183, %v1487
        %v1489 = vpop.f32.mrb[0].mxu0
        %1490 = vmatprep.mubr.bf16.mxu0 %v636
        %1491 = vmatmul.mubr.bf16.gmra.mrb[0].mxu0 %v635
        %v1492 = vpop.f32.mrb[0].mxu0
        %v1493 = vadd.f32 %v1188, %v1492
        %v1494 = vpop.f32.mrb[0].mxu0
        %v1495 = vpop.f32.mrb[0].mxu0
        %v1496 = vadd.f32 %v1191, %v1495
        %v1497 = vpop.f32.mrb[0].mxu0
        %1498 = vmatprep.mubr.bf16.mxu0 %v639
        %1499 = vmatmul.mubr.bf16.gmra.mrb[0].mxu0 %v638
        %v1500 = vpop.f32.mrb[0].mxu0
        %v1501 = vadd.f32 %v1196, %v1500
        %v1502 = vpop.f32.mrb[0].mxu0
        %v1503 = vpop.f32.mrb[0].mxu0
        %v1504 = vadd.f32 %v1199, %v1503
        %v1505 = vpop.f32.mrb[0].mxu0
        %1506 = vmatprep.mubr.bf16.mxu0 %v642
        %1507 = vmatmul.mubr.bf16.gmra.mrb[0].mxu0 %v641
        %v1508 = vpop.f32.mrb[0].mxu0
        %v1509 = vadd.f32 %v1204, %v1508
        %v1510 = vpop.f32.mrb[0].mxu0
        %v1511 = vpop.f32.mrb[0].mxu0
        %v1512 = vadd.f32 %v1207, %v1511
        %v1513 = vpop.f32.mrb[0].mxu0
        %1514 = vmatprep.mubr.bf16.mxu0 %v645
        %1515 = vmatmul.mubr.bf16.gmra.mrb[0].mxu0 %v644
        %v1516 = vpop.f32.mrb[0].mxu0
        %v1517 = vadd.f32 %v1212, %v1516
        %v1518 = vpop.f32.mrb[0].mxu0
        %v1519 = vpop.f32.mrb[0].mxu0
        %v1520 = vadd.f32 %v1215, %v1519
        %v1521 = vpop.f32.mrb[0].mxu0
        %1522 = vmatprep.mubr.bf16.mxu0 %v648
        %1523 = vmatmul.mubr.bf16.gmra.mrb[0].mxu0 %v647
        %v1524 = vpop.f32.mrb[0].mxu0
        %v1525 = vadd.f32 %v1220, %v1524
        %v1526 = vpop.f32.mrb[0].mxu0
        %v1527 = vpop.f32.mrb[0].mxu0
        %v1528 = vadd.f32 %v1223, %v1527
        %v1529 = vpop.f32.mrb[0].mxu0
        %1530 = vmatprep.mubr.bf16.mxu0 %v651
        %1531 = vmatmul.mubr.bf16.gmra.mrb[0].mxu0 %v650
        %v1532 = vpop.f32.mrb[0].mxu0
        %v1533 = vadd.f32 %v1228, %v1532
        %v1534 = vpop.f32.mrb[0].mxu0
        %v1535 = vpop.f32.mrb[0].mxu0
        %v1536 = vadd.f32 %v1231, %v1535
        %v1537 = vpop.f32.mrb[0].mxu0
        %1538 = vmatprep.mubr.bf16.mxu0 %v654
        %1539 = vmatmul.mubr.bf16.gmra.mrb[0].mxu0 %v653
        %v1540 = vpop.f32.mrb[0].mxu0
        %v1541 = vadd.f32 %v1236, %v1540
        %v1542 = vpop.f32.mrb[0].mxu0
        %v1543 = vpop.f32.mrb[0].mxu0
        %v1544 = vadd.f32 %v1239, %v1543
        %v1545 = vpop.f32.mrb[0].mxu0
        %1546 = vmatprep.mubr.bf16.mxu0 %v657
        %1547 = vmatmul.mubr.bf16.gmra.mrb[0].mxu0 %v656
        %v1548 = vpop.f32.mrb[0].mxu0
        %v1549 = vadd.f32 %v1244, %v1548
        %v1550 = vpop.f32.mrb[0].mxu0
        %v1551 = vpop.f32.mrb[0].mxu0
        %v1552 = vadd.f32 %v1247, %v1551
        %v1553 = vpop.f32.mrb[0].mxu0
        %1554 = vmatprep.mubr.bf16.mxu0 %v660
        %1555 = vmatmul.mubr.bf16.gmra.mrb[0].mxu0 %v659
        %v1556 = vpop.f32.mrb[0].mxu0
        %v1557 = vadd.f32 %v1252, %v1556
        %v1558 = vpop.f32.mrb[0].mxu0
        %v1559 = vpop.f32.mrb[0].mxu0
        %v1560 = vadd.f32 %v1255, %v1559
        %v1561 = vpop.f32.mrb[0].mxu0
        %1562 = vmatprep.mubr.bf16.mxu0 %v663
        %1563 = vmatmul.mubr.bf16.gmra.mrb[0].mxu0 %v662
        %v1564 = vpop.f32.mrb[0].mxu0
        %v1565 = vadd.f32 %v1260, %v1564
        %v1566 = vpop.f32.mrb[0].mxu0
        %v1567 = vpop.f32.mrb[0].mxu0
        %v1568 = vadd.f32 %v1263, %v1567
        %v1569 = vpop.f32.mrb[0].mxu0
        %1570 = vmatprep.mubr.bf16.mxu0 %v666
        %1571 = vmatmul.mubr.bf16.gmra.mrb[0].mxu0 %v665
        %v1572 = vpop.f32.mrb[0].mxu0
        %v1573 = vadd.f32 %v1268, %v1572
        %v1574 = vpop.f32.mrb[0].mxu0
        %v1575 = vpop.f32.mrb[0].mxu0
        %v1576 = vadd.f32 %v1271, %v1575
        %v1577 = vpop.f32.mrb[0].mxu0
        %1578 = vmatprep.mubr.bf16.mxu0 %v669
        %1579 = vmatmul.mubr.bf16.gmra.mrb[0].mxu0 %v668
        %v1580 = vpop.f32.mrb[0].mxu0
        %v1581 = vadd.f32 %v1276, %v1580
        %v1582 = vpop.f32.mrb[0].mxu0
        %v1583 = vpop.f32.mrb[0].mxu0
        %v1584 = vadd.f32 %v1279, %v1583
        %v1585 = vpop.f32.mrb[0].mxu0
        %1586 = vdwg.mxu0
        %1587 = vmatprep.subr.bf16.mxu0 0
        %1588 = vmatpush1.bf16.msra.mxu0 %v1394
        %1589 = vmatprep.subr.bf16.mxu0 0
        %1590 = vmatpush1.bf16.msra.mxu0 %v1395
        %1591 = vmatprep.subr.bf16.mxu0 0
        %1592 = vmatpush1.bf16.msra.mxu0 %v1396
        %1593 = vmatprep.subr.bf16.mxu0 0
        %1594 = vmatpush1.bf16.msra.mxu0 %v1397
        %1595 = vmatprep.subr.bf16.mxu0 0
        %1596 = vmatpush1.bf16.msra.mxu0 %v1398
        %1597 = vmatprep.subr.bf16.mxu0 0
        %1598 = vmatpush1.bf16.msra.mxu0 %v1399
        %1599 = vmatprep.subr.bf16.mxu0 0
        %1600 = vmatpush1.bf16.msra.mxu0 %v1400
        %1601 = vmatprep.subr.bf16.mxu0 0
        %1602 = vmatpush1.bf16.msra.mxu0 %v1401
        %1603 = vmatprep.subr.bf16.mxu0 0
        %1604 = vmatpush1.bf16.msra.mxu0 0
        %1605 = vmatprep.subr.bf16.mxu0 0
        %1606 = vmatpush1.bf16.msra.mxu0 0
        %1607 = vmatprep.subr.bf16.mxu0 0
        %1608 = vmatpush1.bf16.msra.mxu0 0
        %1609 = vmatprep.subr.bf16.mxu0 0
        %1610 = vmatpush1.bf16.msra.mxu0 0
        %1611 = vmatprep.subr.bf16.mxu0 0
        %1612 = vmatpush1.bf16.msra.mxu0 0
        %1613 = vmatprep.subr.bf16.mxu0 0
        %1614 = vmatpush1.bf16.msra.mxu0 0
        %1615 = vmatprep.subr.bf16.mxu0 0
        %1616 = vmatpush1.bf16.msra.mxu0 0
        %1617 = vmatprep.subr.bf16.mxu0 0
        %1618 = vmatpush1.bf16.msra.mxu0 0
        %1619 = vmatprep.mubr.bf16.mxu0 0
        %1620 = vmatmul.mubr.bf16.gmra.mrb[0].mxu0 %v625
        %v1621 = vpop.f32.mrb[0].mxu0
        %v1622 = vadd.f32 %v1461, %v1621
        %v1623 = vpop.f32.mrb[0].mxu0
        %v1624 = vpop.f32.mrb[0].mxu0
        %v1625 = vadd.f32 %v1464, %v1624
        %v1626 = vpop.f32.mrb[0].mxu0
        %1627 = vmatprep.mubr.bf16.mxu0 0
        %1628 = vmatmul.mubr.bf16.gmra.mrb[0].mxu0 %v628
        %v1629 = vpop.f32.mrb[0].mxu0
        %v1630 = vadd.f32 %v1469, %v1629
        %v1631 = vpop.f32.mrb[0].mxu0
        %v1632 = vpop.f32.mrb[0].mxu0
        %v1633 = vadd.f32 %v1472, %v1632
        %v1634 = vpop.f32.mrb[0].mxu0
        %1635 = vmatprep.mubr.bf16.mxu0 0
        %1636 = vmatmul.mubr.bf16.gmra.mrb[0].mxu0 %v631
        %v1637 = vpop.f32.mrb[0].mxu0
        %v1638 = vadd.f32 %v1477, %v1637
        %v1639 = vpop.f32.mrb[0].mxu0
        %v1640 = vpop.f32.mrb[0].mxu0
        %v1641 = vadd.f32 %v1480, %v1640
        %v1642 = vpop.f32.mrb[0].mxu0
        %1643 = vmatprep.mubr.bf16.mxu0 0
        %1644 = vmatmul.mubr.bf16.gmra.mrb[0].mxu0 %v634
        %v1645 = vpop.f32.mrb[0].mxu0
        %v1646 = vadd.f32 %v1485, %v1645
        %v1647 = vpop.f32.mrb[0].mxu0
        %v1648 = vpop.f32.mrb[0].mxu0
        %v1649 = vadd.f32 %v1488, %v1648
        %v1650 = vpop.f32.mrb[0].mxu0
        %1651 = vmatprep.mubr.bf16.mxu0 0
        %1652 = vmatmul.mubr.bf16.gmra.mrb[0].mxu0 %v637
        %v1653 = vpop.f32.mrb[0].mxu0
        %v1654 = vadd.f32 %v1493, %v1653
        %v1655 = vpop.f32.mrb[0].mxu0
        %v1656 = vpop.f32.mrb[0].mxu0
        %v1657 = vadd.f32 %v1496, %v1656
        %v1658 = vpop.f32.mrb[0].mxu0
        %1659 = vmatprep.mubr.bf16.mxu0 0
        %1660 = vmatmul.mubr.bf16.gmra.mrb[0].mxu0 %v640
        %v1661 = vpop.f32.mrb[0].mxu0
        %v1662 = vadd.f32 %v1501, %v1661
        %v1663 = vpop.f32.mrb[0].mxu0
        %v1664 = vpop.f32.mrb[0].mxu0
        %v1665 = vadd.f32 %v1504, %v1664
        %v1666 = vpop.f32.mrb[0].mxu0
        %1667 = vmatprep.mubr.bf16.mxu0 0
        %1668 = vmatmul.mubr.bf16.gmra.mrb[0].mxu0 %v643
        %v1669 = vpop.f32.mrb[0].mxu0
        %v1670 = vadd.f32 %v1509, %v1669
        %v1671 = vpop.f32.mrb[0].mxu0
        %v1672 = vpop.f32.mrb[0].mxu0
        %v1673 = vadd.f32 %v1512, %v1672
        %v1674 = vpop.f32.mrb[0].mxu0
        %1675 = vmatprep.mubr.bf16.mxu0 0
        %1676 = vmatmul.mubr.bf16.gmra.mrb[0].mxu0 %v646
        %v1677 = vpop.f32.mrb[0].mxu0
        %v1678 = vadd.f32 %v1517, %v1677
        %v1679 = vpop.f32.mrb[0].mxu0
        %v1680 = vpop.f32.mrb[0].mxu0
        %v1681 = vadd.f32 %v1520, %v1680
        %v1682 = vpop.f32.mrb[0].mxu0
        %1683 = vmatprep.mubr.bf16.mxu0 0
        %1684 = vmatmul.mubr.bf16.gmra.mrb[0].mxu0 %v649
        %v1685 = vpop.f32.mrb[0].mxu0
        %v1686 = vadd.f32 %v1525, %v1685
        %v1687 = vpop.f32.mrb[0].mxu0
        %v1688 = vpop.f32.mrb[0].mxu0
        %v1689 = vadd.f32 %v1528, %v1688
        %v1690 = vpop.f32.mrb[0].mxu0
        %1691 = vmatprep.mubr.bf16.mxu0 0
        %1692 = vmatmul.mubr.bf16.gmra.mrb[0].mxu0 %v652
        %v1693 = vpop.f32.mrb[0].mxu0
        %v1694 = vadd.f32 %v1533, %v1693
        %v1695 = vpop.f32.mrb[0].mxu0
        %v1696 = vpop.f32.mrb[0].mxu0
        %v1697 = vadd.f32 %v1536, %v1696
        %v1698 = vpop.f32.mrb[0].mxu0
        %1699 = vmatprep.mubr.bf16.mxu0 0
        %1700 = vmatmul.mubr.bf16.gmra.mrb[0].mxu0 %v655
        %v1701 = vpop.f32.mrb[0].mxu0
        %v1702 = vadd.f32 %v1541, %v1701
        %v1703 = vpop.f32.mrb[0].mxu0
        %v1704 = vpop.f32.mrb[0].mxu0
        %v1705 = vadd.f32 %v1544, %v1704
        %v1706 = vpop.f32.mrb[0].mxu0
        %1707 = vmatprep.mubr.bf16.mxu0 0
        %1708 = vmatmul.mubr.bf16.gmra.mrb[0].mxu0 %v658
        %v1709 = vpop.f32.mrb[0].mxu0
        %v1710 = vadd.f32 %v1549, %v1709
        %v1711 = vpop.f32.mrb[0].mxu0
        %v1712 = vpop.f32.mrb[0].mxu0
        %v1713 = vadd.f32 %v1552, %v1712
        %v1714 = vpop.f32.mrb[0].mxu0
        %1715 = vmatprep.mubr.bf16.mxu0 0
        %1716 = vmatmul.mubr.bf16.gmra.mrb[0].mxu0 %v661
        %v1717 = vpop.f32.mrb[0].mxu0
        %v1718 = vadd.f32 %v1557, %v1717
        %v1719 = vpop.f32.mrb[0].mxu0
        %v1720 = vpop.f32.mrb[0].mxu0
        %v1721 = vadd.f32 %v1560, %v1720
        %v1722 = vpop.f32.mrb[0].mxu0
        %1723 = vmatprep.mubr.bf16.mxu0 0
        %1724 = vmatmul.mubr.bf16.gmra.mrb[0].mxu0 %v664
        %v1725 = vpop.f32.mrb[0].mxu0
        %v1726 = vadd.f32 %v1565, %v1725
        %v1727 = vpop.f32.mrb[0].mxu0
        %v1728 = vpop.f32.mrb[0].mxu0
        %v1729 = vadd.f32 %v1568, %v1728
        %v1730 = vpop.f32.mrb[0].mxu0
        %1731 = vmatprep.mubr.bf16.mxu0 0
        %1732 = vmatmul.mubr.bf16.gmra.mrb[0].mxu0 %v667
        %v1733 = vpop.f32.mrb[0].mxu0
        %v1734 = vadd.f32 %v1573, %v1733
        %v1735 = vpop.f32.mrb[0].mxu0
        %v1736 = vpop.f32.mrb[0].mxu0
        %v1737 = vadd.f32 %v1576, %v1736
        %v1738 = vpop.f32.mrb[0].mxu0
        %1739 = vmatprep.mubr.bf16.mxu0 0
        %1740 = vmatmul.mubr.bf16.gmra.mrb[0].mxu0 %v670
        %v1741 = vpop.f32.mrb[0].mxu0
        %v1742 = vadd.f32 %v1581, %v1741
        %v1743 = vpop.f32.mrb[0].mxu0
        %v1744 = vpop.f32.mrb[0].mxu0
        %v1745 = vadd.f32 %v1584, %v1744
        %v1746 = vpop.f32.mrb[0].mxu0
        %1747 = vdwg.mxu0
        %s1748 = scalar_lea.vmem [#allocation2], 48
        %v1749 = vld [vmem:[%s1748] sm:$0xff]
        %v1750 = vld [vmem:[%s1748 + $0x8] sm:$0xff]
        %v1751 = vld [vmem:[%s1748 + $0x10] sm:$0xff]
        %v1752 = vld [vmem:[%s1748 + $0x18] sm:$0xff]
        %v1753 = vld [vmem:[%s1748 + $0x20] sm:$0xff]
        %v1754 = vld [vmem:[%s1748 + $0x28] sm:$0xff]
        %v1755 = vld [vmem:[%s1748 + $0x30] sm:$0xff]
        %v1756 = vld [vmem:[%s1748 + $0x38] sm:$0xff]
        %v1757 = vld [vmem:[%s1748 + $0x40] sm:$0xff]
        %v1758 = vld [vmem:[%s1748 + $0x48] sm:$0xff]
        %v1759 = vld [vmem:[%s1748 + $0x50] sm:$0xff]
        %v1760 = vld [vmem:[%s1748 + $0x58] sm:$0xff]
        %v1761 = vld [vmem:[%s1748 + $0x60] sm:$0xff]
        %v1762 = vld [vmem:[%s1748 + $0x68] sm:$0xff]
        %v1763 = vld [vmem:[%s1748 + $0x70] sm:$0xff]
        %v1764 = vld [vmem:[%s1748 + $0x78] sm:$0xff]
        %v1765 = vld [vmem:[%s1748 + $0x80] sm:$0xff]
        %v1766 = vld [vmem:[%s1748 + $0x88] sm:$0xff]
        %v1767 = vld [vmem:[%s1748 + $0x90] sm:$0xff]
        %v1768 = vld [vmem:[%s1748 + $0x98] sm:$0xff]
        %v1769 = vld [vmem:[%s1748 + $0xa0] sm:$0xff]
        %v1770 = vld [vmem:[%s1748 + $0xa8] sm:$0xff]
        %v1771 = vld [vmem:[%s1748 + $0xb0] sm:$0xff]
        %v1772 = vld [vmem:[%s1748 + $0xb8] sm:$0xff]
        %v1773 = vld [vmem:[%s1748 + $0xc0] sm:$0xff]
        %v1774 = vld [vmem:[%s1748 + $0xc8] sm:$0xff]
        %v1775 = vld [vmem:[%s1748 + $0xd0] sm:$0xff]
        %v1776 = vld [vmem:[%s1748 + $0xd8] sm:$0xff]
        %v1777 = vld [vmem:[%s1748 + $0xe0] sm:$0xff]
        %v1778 = vld [vmem:[%s1748 + $0xe8] sm:$0xff]
        %v1779 = vld [vmem:[%s1748 + $0xf0] sm:$0xff]
        %v1780 = vld [vmem:[%s1748 + $0xf8] sm:$0xff]
        %v1781 = vld [vmem:[%s1748 + $0x100] sm:$0xff]
        %v1782 = vld [vmem:[%s1748 + $0x108] sm:$0xff]
        %v1783 = vld [vmem:[%s1748 + $0x110] sm:$0xff]
        %v1784 = vld [vmem:[%s1748 + $0x118] sm:$0xff]
        %v1785 = vld [vmem:[%s1748 + $0x120] sm:$0xff]
        %v1786 = vld [vmem:[%s1748 + $0x128] sm:$0xff]
        %v1787 = vld [vmem:[%s1748 + $0x130] sm:$0xff]
        %v1788 = vld [vmem:[%s1748 + $0x138] sm:$0xff]
        %v1789 = vld [vmem:[%s1748 + $0x140] sm:$0xff]
        %v1790 = vld [vmem:[%s1748 + $0x148] sm:$0xff]
        %v1791 = vld [vmem:[%s1748 + $0x150] sm:$0xff]
        %v1792 = vld [vmem:[%s1748 + $0x158] sm:$0xff]
        %v1793 = vld [vmem:[%s1748 + $0x160] sm:$0xff]
        %v1794 = vld [vmem:[%s1748 + $0x168] sm:$0xff]
        %v1795 = vld [vmem:[%s1748 + $0x170] sm:$0xff]
        %v1796 = vld [vmem:[%s1748 + $0x178] sm:$0xff]
        %s1797 = scalar_lea.vmem [#allocation6], 384
        %v1798 = vld [vmem:[%s1797] sm:$0xf]
        %v1799 = vld [vmem:[%s1797 + $0x4] sm:$0xf]
        %v1800 = vld [vmem:[%s1797 + $0x8] sm:$0xf]
        %v1801 = vld [vmem:[%s1797 + $0xc] sm:$0xf]
        %v1802 = vld [vmem:[%s1797 + $0x10] sm:$0xf]
        %v1803 = vld [vmem:[%s1797 + $0x14] sm:$0xf]
        %v1804 = vld [vmem:[%s1797 + $0x18] sm:$0xf]
        %v1805 = vld [vmem:[%s1797 + $0x1c] sm:$0xf]
        %v1806 = vld [vmem:[%s1797 + $0x20] sm:$0xf]
        %v1807 = vld [vmem:[%s1797 + $0x24] sm:$0xf]
        %v1808 = vld [vmem:[%s1797 + $0x28] sm:$0xf]
        %v1809 = vld [vmem:[%s1797 + $0x2c] sm:$0xf]
        %v1810 = vld [vmem:[%s1797 + $0x30] sm:$0xf]
        %v1811 = vld [vmem:[%s1797 + $0x34] sm:$0xf]
        %v1812 = vld [vmem:[%s1797 + $0x38] sm:$0xf]
        %v1813 = vld [vmem:[%s1797 + $0x3c] sm:$0xf]
        %v1814 = vld [vmem:[%s1797 + $0x40] sm:$0xf]
        %v1815 = vld [vmem:[%s1797 + $0x44] sm:$0xf]
        %v1816 = vld [vmem:[%s1797 + $0x48] sm:$0xf]
        %v1817 = vld [vmem:[%s1797 + $0x4c] sm:$0xf]
        %v1818 = vld [vmem:[%s1797 + $0x50] sm:$0xf]
        %v1819 = vld [vmem:[%s1797 + $0x54] sm:$0xf]
        %v1820 = vld [vmem:[%s1797 + $0x58] sm:$0xf]
        %v1821 = vld [vmem:[%s1797 + $0x5c] sm:$0xf]
        %v1822 = vld [vmem:[%s1797 + $0x60] sm:$0xf]
        %v1823 = vld [vmem:[%s1797 + $0x64] sm:$0xf]
        %v1824 = vld [vmem:[%s1797 + $0x68] sm:$0xf]
        %v1825 = vld [vmem:[%s1797 + $0x6c] sm:$0xf]
        %v1826 = vld [vmem:[%s1797 + $0x70] sm:$0xf]
        %v1827 = vld [vmem:[%s1797 + $0x74] sm:$0xf]
        %v1828 = vld [vmem:[%s1797 + $0x78] sm:$0xf]
        %v1829 = vld [vmem:[%s1797 + $0x7c] sm:$0xf]
        %v1830 = vld [vmem:[%s1797 + $0x80] sm:$0xf]
        %v1831 = vld [vmem:[%s1797 + $0x84] sm:$0xf]
        %v1832 = vld [vmem:[%s1797 + $0x88] sm:$0xf]
        %v1833 = vld [vmem:[%s1797 + $0x8c] sm:$0xf]
        %v1834 = vld [vmem:[%s1797 + $0x90] sm:$0xf]
        %v1835 = vld [vmem:[%s1797 + $0x94] sm:$0xf]
        %v1836 = vld [vmem:[%s1797 + $0x98] sm:$0xf]
        %v1837 = vld [vmem:[%s1797 + $0x9c] sm:$0xf]
        %v1838 = vld [vmem:[%s1797 + $0xa0] sm:$0xf]
        %v1839 = vld [vmem:[%s1797 + $0xa4] sm:$0xf]
        %v1840 = vld [vmem:[%s1797 + $0xa8] sm:$0xf]
        %v1841 = vld [vmem:[%s1797 + $0xac] sm:$0xf]
        %v1842 = vld [vmem:[%s1797 + $0xb0] sm:$0xf]
        %v1843 = vld [vmem:[%s1797 + $0xb4] sm:$0xf]
        %v1844 = vld [vmem:[%s1797 + $0xb8] sm:$0xf]
        %v1845 = vld [vmem:[%s1797 + $0xbc] sm:$0xf]
        %v1894 = vunpack.c.l.b16 %v1798
        %v1895 = vunpack.c.l.b16 %v1799
        %v1896 = vunpack.c.l.b16 %v1800
        %v1897 = vunpack.c.l.b16 %v1801
        %v1898 = vunpack.c.l.b16 %v1802
        %v1899 = vunpack.c.l.b16 %v1803
        %v1900 = vunpack.c.l.b16 %v1804
        %v1901 = vunpack.c.l.b16 %v1805
        %v1902 = vunpack.c.l.b16 %v1806
        %v1903 = vunpack.c.l.b16 %v1807
        %v1904 = vunpack.c.l.b16 %v1808
        %v1905 = vunpack.c.l.b16 %v1809
        %v1906 = vunpack.c.l.b16 %v1810
        %v1907 = vunpack.c.l.b16 %v1811
        %v1908 = vunpack.c.l.b16 %v1812
        %v1909 = vunpack.c.l.b16 %v1813
        %v1910 = vunpack.c.l.b16 %v1814
        %v1911 = vunpack.c.l.b16 %v1815
        %v1912 = vunpack.c.l.b16 %v1816
        %v1913 = vunpack.c.l.b16 %v1817
        %v1914 = vunpack.c.l.b16 %v1818
        %v1915 = vunpack.c.l.b16 %v1819
        %v1916 = vunpack.c.l.b16 %v1820
        %v1917 = vunpack.c.l.b16 %v1821
        %v1918 = vunpack.c.l.b16 %v1822
        %v1919 = vunpack.c.l.b16 %v1823
        %v1920 = vunpack.c.l.b16 %v1824
        %v1921 = vunpack.c.l.b16 %v1825
        %v1922 = vunpack.c.l.b16 %v1826
        %v1923 = vunpack.c.l.b16 %v1827
        %v1924 = vunpack.c.l.b16 %v1828
        %v1925 = vunpack.c.l.b16 %v1829
        %v1926 = vunpack.c.l.b16 %v1830
        %v1927 = vunpack.c.l.b16 %v1831
        %v1928 = vunpack.c.l.b16 %v1832
        %v1929 = vunpack.c.l.b16 %v1833
        %v1930 = vunpack.c.l.b16 %v1834
        %v1931 = vunpack.c.l.b16 %v1835
        %v1932 = vunpack.c.l.b16 %v1836
        %v1933 = vunpack.c.l.b16 %v1837
        %v1934 = vunpack.c.l.b16 %v1838
        %v1935 = vunpack.c.l.b16 %v1839
        %v1936 = vunpack.c.l.b16 %v1840
        %v1937 = vunpack.c.l.b16 %v1841
        %v1938 = vunpack.c.l.b16 %v1842
        %v1939 = vunpack.c.l.b16 %v1843
        %v1940 = vunpack.c.l.b16 %v1844
        %v1941 = vunpack.c.l.b16 %v1845
        %v1942 = vpack.c.b16 %v1895, %v1894
        %v1943 = vpack.c.b16 %v1897, %v1896
        %v1944 = vpack.c.b16 %v1899, %v1898
        %v1945 = vpack.c.b16 %v1901, %v1900
        %v1946 = vpack.c.b16 %v1903, %v1902
        %v1947 = vpack.c.b16 %v1905, %v1904
        %v1948 = vpack.c.b16 %v1907, %v1906
        %v1949 = vpack.c.b16 %v1909, %v1908
        %v1950 = vpack.c.b16 %v1911, %v1910
        %v1951 = vpack.c.b16 %v1913, %v1912
        %v1952 = vpack.c.b16 %v1915, %v1914
        %v1953 = vpack.c.b16 %v1917, %v1916
        %v1954 = vpack.c.b16 %v1919, %v1918
        %v1955 = vpack.c.b16 %v1921, %v1920
        %v1956 = vpack.c.b16 %v1923, %v1922
        %v1957 = vpack.c.b16 %v1925, %v1924
        %v1958 = vpack.c.b16 %v1927, %v1926
        %v1959 = vpack.c.b16 %v1929, %v1928
        %v1960 = vpack.c.b16 %v1931, %v1930
        %v1961 = vpack.c.b16 %v1933, %v1932
        %v1962 = vpack.c.b16 %v1935, %v1934
        %v1963 = vpack.c.b16 %v1937, %v1936
        %v1964 = vpack.c.b16 %v1939, %v1938
        %v1965 = vpack.c.b16 %v1941, %v1940
        %1990 = vmatprep.subr.bf16.mxu0 0
        %1991 = vmatpush1.bf16.msra.mxu0 %v1942
        %1992 = vmatprep.subr.bf16.mxu0 0
        %1993 = vmatpush1.bf16.msra.mxu0 %v1943
        %1994 = vmatprep.subr.bf16.mxu0 0
        %1995 = vmatpush1.bf16.msra.mxu0 %v1944
        %1996 = vmatprep.subr.bf16.mxu0 0
        %1997 = vmatpush1.bf16.msra.mxu0 %v1945
        %1998 = vmatprep.subr.bf16.mxu0 0
        %1999 = vmatpush1.bf16.msra.mxu0 %v1946
        %2000 = vmatprep.subr.bf16.mxu0 0
        %2001 = vmatpush1.bf16.msra.mxu0 %v1947
        %2002 = vmatprep.subr.bf16.mxu0 0
        %2003 = vmatpush1.bf16.msra.mxu0 %v1948
        %2004 = vmatprep.subr.bf16.mxu0 0
        %2005 = vmatpush1.bf16.msra.mxu0 %v1949
        %2006 = vmatprep.subr.bf16.mxu0 0
        %2007 = vmatpush1.bf16.msra.mxu0 %v1950
        %2008 = vmatprep.subr.bf16.mxu0 0
        %2009 = vmatpush1.bf16.msra.mxu0 %v1951
        %2010 = vmatprep.subr.bf16.mxu0 0
        %2011 = vmatpush1.bf16.msra.mxu0 %v1952
        %2012 = vmatprep.subr.bf16.mxu0 0
        %2013 = vmatpush1.bf16.msra.mxu0 %v1953
        %2014 = vmatprep.subr.bf16.mxu0 0
        %2015 = vmatpush1.bf16.msra.mxu0 %v1954
        %2016 = vmatprep.subr.bf16.mxu0 0
        %2017 = vmatpush1.bf16.msra.mxu0 %v1955
        %2018 = vmatprep.subr.bf16.mxu0 0
        %2019 = vmatpush1.bf16.msra.mxu0 %v1956
        %2020 = vmatprep.subr.bf16.mxu0 0
        %2021 = vmatpush1.bf16.msra.mxu0 %v1957
        %2022 = vmatprep.mubr.bf16.mxu0 %v1750
        %2023 = vmatmul.mubr.bf16.gmra.mrb[0].mxu0 %v1749
        %v2024 = vpop.f32.mrb[0].mxu0
        %v2025 = vadd.f32 0.0, %v2024
        %v2026 = vpop.f32.mrb[0].mxu0
        %v2027 = vpop.f32.mrb[0].mxu0
        %v2028 = vadd.f32 0.0, %v2027
        %v2029 = vpop.f32.mrb[0].mxu0
        %2030 = vmatprep.mubr.bf16.mxu0 %v1753
        %2031 = vmatmul.mubr.bf16.gmra.mrb[0].mxu0 %v1752
        %v2032 = vpop.f32.mrb[0].mxu0
        %v2033 = vadd.f32 0.0, %v2032
        %v2034 = vpop.f32.mrb[0].mxu0
        %v2035 = vpop.f32.mrb[0].mxu0
        %v2036 = vadd.f32 0.0, %v2035
        %v2037 = vpop.f32.mrb[0].mxu0
        %2038 = vmatprep.mubr.bf16.mxu0 %v1756
        %2039 = vmatmul.mubr.bf16.gmra.mrb[0].mxu0 %v1755
        %v2040 = vpop.f32.mrb[0].mxu0
        %v2041 = vadd.f32 0.0, %v2040
        %v2042 = vpop.f32.mrb[0].mxu0
        %v2043 = vpop.f32.mrb[0].mxu0
        %v2044 = vadd.f32 0.0, %v2043
        %v2045 = vpop.f32.mrb[0].mxu0
        %2046 = vmatprep.mubr.bf16.mxu0 %v1759
        %2047 = vmatmul.mubr.bf16.gmra.mrb[0].mxu0 %v1758
        %v2048 = vpop.f32.mrb[0].mxu0
        %v2049 = vadd.f32 0.0, %v2048
        %v2050 = vpop.f32.mrb[0].mxu0
        %v2051 = vpop.f32.mrb[0].mxu0
        %v2052 = vadd.f32 0.0, %v2051
        %v2053 = vpop.f32.mrb[0].mxu0
        %2054 = vmatprep.mubr.bf16.mxu0 %v1762
        %2055 = vmatmul.mubr.bf16.gmra.mrb[0].mxu0 %v1761
        %v2056 = vpop.f32.mrb[0].mxu0
        %v2057 = vadd.f32 0.0, %v2056
        %v2058 = vpop.f32.mrb[0].mxu0
        %v2059 = vpop.f32.mrb[0].mxu0
        %v2060 = vadd.f32 0.0, %v2059
        %v2061 = vpop.f32.mrb[0].mxu0
        %2062 = vmatprep.mubr.bf16.mxu0 %v1765
        %2063 = vmatmul.mubr.bf16.gmra.mrb[0].mxu0 %v1764
        %v2064 = vpop.f32.mrb[0].mxu0
        %v2065 = vadd.f32 0.0, %v2064
        %v2066 = vpop.f32.mrb[0].mxu0
        %v2067 = vpop.f32.mrb[0].mxu0
        %v2068 = vadd.f32 0.0, %v2067
        %v2069 = vpop.f32.mrb[0].mxu0
        %2070 = vmatprep.mubr.bf16.mxu0 %v1768
        %2071 = vmatmul.mubr.bf16.gmra.mrb[0].mxu0 %v1767
        %v2072 = vpop.f32.mrb[0].mxu0
        %v2073 = vadd.f32 0.0, %v2072
        %v2074 = vpop.f32.mrb[0].mxu0
        %v2075 = vpop.f32.mrb[0].mxu0
        %v2076 = vadd.f32 0.0, %v2075
        %v2077 = vpop.f32.mrb[0].mxu0
        %2078 = vmatprep.mubr.bf16.mxu0 %v1771
        %2079 = vmatmul.mubr.bf16.gmra.mrb[0].mxu0 %v1770
        %v2080 = vpop.f32.mrb[0].mxu0
        %v2081 = vadd.f32 0.0, %v2080
        %v2082 = vpop.f32.mrb[0].mxu0
        %v2083 = vpop.f32.mrb[0].mxu0
        %v2084 = vadd.f32 0.0, %v2083
        %v2085 = vpop.f32.mrb[0].mxu0
        %2086 = vmatprep.mubr.bf16.mxu0 %v1774
        %2087 = vmatmul.mubr.bf16.gmra.mrb[0].mxu0 %v1773
        %v2088 = vpop.f32.mrb[0].mxu0
        %v2089 = vadd.f32 0.0, %v2088
        %v2090 = vpop.f32.mrb[0].mxu0
        %v2091 = vpop.f32.mrb[0].mxu0
        %v2092 = vadd.f32 0.0, %v2091
        %v2093 = vpop.f32.mrb[0].mxu0
        %2094 = vmatprep.mubr.bf16.mxu0 %v1777
        %2095 = vmatmul.mubr.bf16.gmra.mrb[0].mxu0 %v1776
        %v2096 = vpop.f32.mrb[0].mxu0
        %v2097 = vadd.f32 0.0, %v2096
        %v2098 = vpop.f32.mrb[0].mxu0
        %v2099 = vpop.f32.mrb[0].mxu0
        %v2100 = vadd.f32 0.0, %v2099
        %v2101 = vpop.f32.mrb[0].mxu0
        %2102 = vmatprep.mubr.bf16.mxu0 %v1780
        %2103 = vmatmul.mubr.bf16.gmra.mrb[0].mxu0 %v1779
        %v2104 = vpop.f32.mrb[0].mxu0
        %v2105 = vadd.f32 0.0, %v2104
        %v2106 = vpop.f32.mrb[0].mxu0
        %v2107 = vpop.f32.mrb[0].mxu0
        %v2108 = vadd.f32 0.0, %v2107
        %v2109 = vpop.f32.mrb[0].mxu0
        %2110 = vmatprep.mubr.bf16.mxu0 %v1783
        %2111 = vmatmul.mubr.bf16.gmra.mrb[0].mxu0 %v1782
        %v2112 = vpop.f32.mrb[0].mxu0
        %v2113 = vadd.f32 0.0, %v2112
        %v2114 = vpop.f32.mrb[0].mxu0
        %v2115 = vpop.f32.mrb[0].mxu0
        %v2116 = vadd.f32 0.0, %v2115
        %v2117 = vpop.f32.mrb[0].mxu0
        %2118 = vmatprep.mubr.bf16.mxu0 %v1786
        %2119 = vmatmul.mubr.bf16.gmra.mrb[0].mxu0 %v1785
        %v2120 = vpop.f32.mrb[0].mxu0
        %v2121 = vadd.f32 0.0, %v2120
        %v2122 = vpop.f32.mrb[0].mxu0
        %v2123 = vpop.f32.mrb[0].mxu0
        %v2124 = vadd.f32 0.0, %v2123
        %v2125 = vpop.f32.mrb[0].mxu0
        %2126 = vmatprep.mubr.bf16.mxu0 %v1789
        %2127 = vmatmul.mubr.bf16.gmra.mrb[0].mxu0 %v1788
        %v2128 = vpop.f32.mrb[0].mxu0
        %v2129 = vadd.f32 0.0, %v2128
        %v2130 = vpop.f32.mrb[0].mxu0
        %v2131 = vpop.f32.mrb[0].mxu0
        %v2132 = vadd.f32 0.0, %v2131
        %v2133 = vpop.f32.mrb[0].mxu0
        %2134 = vmatprep.mubr.bf16.mxu0 %v1792
        %2135 = vmatmul.mubr.bf16.gmra.mrb[0].mxu0 %v1791
        %v2136 = vpop.f32.mrb[0].mxu0
        %v2137 = vadd.f32 0.0, %v2136
        %v2138 = vpop.f32.mrb[0].mxu0
        %v2139 = vpop.f32.mrb[0].mxu0
        %v2140 = vadd.f32 0.0, %v2139
        %v2141 = vpop.f32.mrb[0].mxu0
        %2142 = vmatprep.mubr.bf16.mxu0 %v1795
        %2143 = vmatmul.mubr.bf16.gmra.mrb[0].mxu0 %v1794
        %v2144 = vpop.f32.mrb[0].mxu0
        %v2145 = vadd.f32 0.0, %v2144
        %v2146 = vpop.f32.mrb[0].mxu0
        %v2147 = vpop.f32.mrb[0].mxu0
        %v2148 = vadd.f32 0.0, %v2147
        %v2149 = vpop.f32.mrb[0].mxu0
        %2150 = vdwg.mxu0
        %2151 = vmatprep.subr.bf16.mxu0 0
        %2152 = vmatpush1.bf16.msra.mxu0 %v1958
        %2153 = vmatprep.subr.bf16.mxu0 0
        %2154 = vmatpush1.bf16.msra.mxu0 %v1959
        %2155 = vmatprep.subr.bf16.mxu0 0
        %2156 = vmatpush1.bf16.msra.mxu0 %v1960
        %2157 = vmatprep.subr.bf16.mxu0 0
        %2158 = vmatpush1.bf16.msra.mxu0 %v1961
        %2159 = vmatprep.subr.bf16.mxu0 0
        %2160 = vmatpush1.bf16.msra.mxu0 %v1962
        %2161 = vmatprep.subr.bf16.mxu0 0
        %2162 = vmatpush1.bf16.msra.mxu0 %v1963
        %2163 = vmatprep.subr.bf16.mxu0 0
        %2164 = vmatpush1.bf16.msra.mxu0 %v1964
        %2165 = vmatprep.subr.bf16.mxu0 0
        %2166 = vmatpush1.bf16.msra.mxu0 %v1965
        %2167 = vmatprep.subr.bf16.mxu0 0
        %2168 = vmatpush1.bf16.msra.mxu0 0
        %2169 = vmatprep.subr.bf16.mxu0 0
        %2170 = vmatpush1.bf16.msra.mxu0 0
        %2171 = vmatprep.subr.bf16.mxu0 0
        %2172 = vmatpush1.bf16.msra.mxu0 0
        %2173 = vmatprep.subr.bf16.mxu0 0
        %2174 = vmatpush1.bf16.msra.mxu0 0
        %2175 = vmatprep.subr.bf16.mxu0 0
        %2176 = vmatpush1.bf16.msra.mxu0 0
        %2177 = vmatprep.subr.bf16.mxu0 0
        %2178 = vmatpush1.bf16.msra.mxu0 0
        %2179 = vmatprep.subr.bf16.mxu0 0
        %2180 = vmatpush1.bf16.msra.mxu0 0
        %2181 = vmatprep.subr.bf16.mxu0 0
        %2182 = vmatpush1.bf16.msra.mxu0 0
        %2183 = vmatprep.mubr.bf16.mxu0 0
        %2184 = vmatmul.mubr.bf16.gmra.mrb[0].mxu0 %v1751
        %v2185 = vpop.f32.mrb[0].mxu0
        %v2186 = vadd.f32 %v2025, %v2185
        %v2187 = vpop.f32.mrb[0].mxu0
        %v2188 = vpop.f32.mrb[0].mxu0
        %v2189 = vadd.f32 %v2028, %v2188
        %v2190 = vpop.f32.mrb[0].mxu0
        %2191 = vmatprep.mubr.bf16.mxu0 0
        %2192 = vmatmul.mubr.bf16.gmra.mrb[0].mxu0 %v1754
        %v2193 = vpop.f32.mrb[0].mxu0
        %v2194 = vadd.f32 %v2033, %v2193
        %v2195 = vpop.f32.mrb[0].mxu0
        %v2196 = vpop.f32.mrb[0].mxu0
        %v2197 = vadd.f32 %v2036, %v2196
        %v2198 = vpop.f32.mrb[0].mxu0
        %2199 = vmatprep.mubr.bf16.mxu0 0
        %2200 = vmatmul.mubr.bf16.gmra.mrb[0].mxu0 %v1757
        %v2201 = vpop.f32.mrb[0].mxu0
        %v2202 = vadd.f32 %v2041, %v2201
        %v2203 = vpop.f32.mrb[0].mxu0
        %v2204 = vpop.f32.mrb[0].mxu0
        %v2205 = vadd.f32 %v2044, %v2204
        %v2206 = vpop.f32.mrb[0].mxu0
        %2207 = vmatprep.mubr.bf16.mxu0 0
        %2208 = vmatmul.mubr.bf16.gmra.mrb[0].mxu0 %v1760
        %v2209 = vpop.f32.mrb[0].mxu0
        %v2210 = vadd.f32 %v2049, %v2209
        %v2211 = vpop.f32.mrb[0].mxu0
        %v2212 = vpop.f32.mrb[0].mxu0
        %v2213 = vadd.f32 %v2052, %v2212
        %v2214 = vpop.f32.mrb[0].mxu0
        %2215 = vmatprep.mubr.bf16.mxu0 0
        %2216 = vmatmul.mubr.bf16.gmra.mrb[0].mxu0 %v1763
        %v2217 = vpop.f32.mrb[0].mxu0
        %v2218 = vadd.f32 %v2057, %v2217
        %v2219 = vpop.f32.mrb[0].mxu0
        %v2220 = vpop.f32.mrb[0].mxu0
        %v2221 = vadd.f32 %v2060, %v2220
        %v2222 = vpop.f32.mrb[0].mxu0
        %2223 = vmatprep.mubr.bf16.mxu0 0
        %2224 = vmatmul.mubr.bf16.gmra.mrb[0].mxu0 %v1766
        %v2225 = vpop.f32.mrb[0].mxu0
        %v2226 = vadd.f32 %v2065, %v2225
        %v2227 = vpop.f32.mrb[0].mxu0
        %v2228 = vpop.f32.mrb[0].mxu0
        %v2229 = vadd.f32 %v2068, %v2228
        %v2230 = vpop.f32.mrb[0].mxu0
        %2231 = vmatprep.mubr.bf16.mxu0 0
        %2232 = vmatmul.mubr.bf16.gmra.mrb[0].mxu0 %v1769
        %v2233 = vpop.f32.mrb[0].mxu0
        %v2234 = vadd.f32 %v2073, %v2233
        %v2235 = vpop.f32.mrb[0].mxu0
        %v2236 = vpop.f32.mrb[0].mxu0
        %v2237 = vadd.f32 %v2076, %v2236
        %v2238 = vpop.f32.mrb[0].mxu0
        %2239 = vmatprep.mubr.bf16.mxu0 0
        %2240 = vmatmul.mubr.bf16.gmra.mrb[0].mxu0 %v1772
        %v2241 = vpop.f32.mrb[0].mxu0
        %v2242 = vadd.f32 %v2081, %v2241
        %v2243 = vpop.f32.mrb[0].mxu0
        %v2244 = vpop.f32.mrb[0].mxu0
        %v2245 = vadd.f32 %v2084, %v2244
        %v2246 = vpop.f32.mrb[0].mxu0
        %2247 = vmatprep.mubr.bf16.mxu0 0
        %2248 = vmatmul.mubr.bf16.gmra.mrb[0].mxu0 %v1775
        %v2249 = vpop.f32.mrb[0].mxu0
        %v2250 = vadd.f32 %v2089, %v2249
        %v2251 = vpop.f32.mrb[0].mxu0
        %v2252 = vpop.f32.mrb[0].mxu0
        %v2253 = vadd.f32 %v2092, %v2252
        %v2254 = vpop.f32.mrb[0].mxu0
        %2255 = vmatprep.mubr.bf16.mxu0 0
        %2256 = vmatmul.mubr.bf16.gmra.mrb[0].mxu0 %v1778
        %v2257 = vpop.f32.mrb[0].mxu0
        %v2258 = vadd.f32 %v2097, %v2257
        %v2259 = vpop.f32.mrb[0].mxu0
        %v2260 = vpop.f32.mrb[0].mxu0
        %v2261 = vadd.f32 %v2100, %v2260
        %v2262 = vpop.f32.mrb[0].mxu0
        %2263 = vmatprep.mubr.bf16.mxu0 0
        %2264 = vmatmul.mubr.bf16.gmra.mrb[0].mxu0 %v1781
        %v2265 = vpop.f32.mrb[0].mxu0
        %v2266 = vadd.f32 %v2105, %v2265
        %v2267 = vpop.f32.mrb[0].mxu0
        %v2268 = vpop.f32.mrb[0].mxu0
        %v2269 = vadd.f32 %v2108, %v2268
        %v2270 = vpop.f32.mrb[0].mxu0
        %2271 = vmatprep.mubr.bf16.mxu0 0
        %2272 = vmatmul.mubr.bf16.gmra.mrb[0].mxu0 %v1784
        %v2273 = vpop.f32.mrb[0].mxu0
        %v2274 = vadd.f32 %v2113, %v2273
        %v2275 = vpop.f32.mrb[0].mxu0
        %v2276 = vpop.f32.mrb[0].mxu0
        %v2277 = vadd.f32 %v2116, %v2276
        %v2278 = vpop.f32.mrb[0].mxu0
        %2279 = vmatprep.mubr.bf16.mxu0 0
        %2280 = vmatmul.mubr.bf16.gmra.mrb[0].mxu0 %v1787
        %v2281 = vpop.f32.mrb[0].mxu0
        %v2282 = vadd.f32 %v2121, %v2281
        %v2283 = vpop.f32.mrb[0].mxu0
        %v2284 = vpop.f32.mrb[0].mxu0
        %v2285 = vadd.f32 %v2124, %v2284
        %v2286 = vpop.f32.mrb[0].mxu0
        %2287 = vmatprep.mubr.bf16.mxu0 0
        %2288 = vmatmul.mubr.bf16.gmra.mrb[0].mxu0 %v1790
        %v2289 = vpop.f32.mrb[0].mxu0
        %v2290 = vadd.f32 %v2129, %v2289
        %v2291 = vpop.f32.mrb[0].mxu0
        %v2292 = vpop.f32.mrb[0].mxu0
        %v2293 = vadd.f32 %v2132, %v2292
        %v2294 = vpop.f32.mrb[0].mxu0
        %2295 = vmatprep.mubr.bf16.mxu0 0
        %2296 = vmatmul.mubr.bf16.gmra.mrb[0].mxu0 %v1793
        %v2297 = vpop.f32.mrb[0].mxu0
        %v2298 = vadd.f32 %v2137, %v2297
        %v2299 = vpop.f32.mrb[0].mxu0
        %v2300 = vpop.f32.mrb[0].mxu0
        %v2301 = vadd.f32 %v2140, %v2300
        %v2302 = vpop.f32.mrb[0].mxu0
        %2303 = vmatprep.mubr.bf16.mxu0 0
        %2304 = vmatmul.mubr.bf16.gmra.mrb[0].mxu0 %v1796
        %v2305 = vpop.f32.mrb[0].mxu0
        %v2306 = vadd.f32 %v2145, %v2305
        %v2307 = vpop.f32.mrb[0].mxu0
        %v2308 = vpop.f32.mrb[0].mxu0
        %v2309 = vadd.f32 %v2148, %v2308
        %v2310 = vpop.f32.mrb[0].mxu0
        %2311 = vdwg.mxu0
        %v2312 = vadd.f32 %v1622, %v2186
        %v2313 = vadd.f32 %v1625, %v2189
        %v2314 = vadd.f32 %v1630, %v2194
        %v2315 = vadd.f32 %v1633, %v2197
        %v2316 = vadd.f32 %v1638, %v2202
        %v2317 = vadd.f32 %v1641, %v2205
        %v2318 = vadd.f32 %v1646, %v2210
        %v2319 = vadd.f32 %v1649, %v2213
        %v2320 = vadd.f32 %v1654, %v2218
        %v2321 = vadd.f32 %v1657, %v2221
        %v2322 = vadd.f32 %v1662, %v2226
        %v2323 = vadd.f32 %v1665, %v2229
        %v2324 = vadd.f32 %v1670, %v2234
        %v2325 = vadd.f32 %v1673, %v2237
        %v2326 = vadd.f32 %v1678, %v2242
        %v2327 = vadd.f32 %v1681, %v2245
        %v2328 = vadd.f32 %v1686, %v2250
        %v2329 = vadd.f32 %v1689, %v2253
        %v2330 = vadd.f32 %v1694, %v2258
        %v2331 = vadd.f32 %v1697, %v2261
        %v2332 = vadd.f32 %v1702, %v2266
        %v2333 = vadd.f32 %v1705, %v2269
        %v2334 = vadd.f32 %v1710, %v2274
        %v2335 = vadd.f32 %v1713, %v2277
        %v2336 = vadd.f32 %v1718, %v2282
        %v2337 = vadd.f32 %v1721, %v2285
        %v2338 = vadd.f32 %v1726, %v2290
        %v2339 = vadd.f32 %v1729, %v2293
        %v2340 = vadd.f32 %v1734, %v2298
        %v2341 = vadd.f32 %v1737, %v2301
        %v2342 = vadd.f32 %v1742, %v2306
        %v2343 = vadd.f32 %v1745, %v2309
        %v2344 = vld [vmem:[%s2] sm:$0x1]
        %v2346 = vlaneseq
        %v2347 = vshrl.u32 %v2346, 7
        %v2348 = vsub.s32 0, %v2347
        %v2349 = vrot.slane %v2344, %v2348
        %v2351 = vadd.f32 %v2312, %v2349
        %v2352 = vadd.f32 %v2313, %v2349
        %v2353 = vadd.f32 %v2314, %v2349
        %v2354 = vadd.f32 %v2315, %v2349
        %v2355 = vadd.f32 %v2316, %v2349
        %v2356 = vadd.f32 %v2317, %v2349
        %v2357 = vadd.f32 %v2318, %v2349
        %v2358 = vadd.f32 %v2319, %v2349
        %v2359 = vadd.f32 %v2320, %v2349
        %v2360 = vadd.f32 %v2321, %v2349
        %v2361 = vadd.f32 %v2322, %v2349
        %v2362 = vadd.f32 %v2323, %v2349
        %v2363 = vadd.f32 %v2324, %v2349
        %v2364 = vadd.f32 %v2325, %v2349
        %v2365 = vadd.f32 %v2326, %v2349
        %v2366 = vadd.f32 %v2327, %v2349
        %v2367 = vadd.f32 %v2328, %v2349
        %v2368 = vadd.f32 %v2329, %v2349
        %v2369 = vadd.f32 %v2330, %v2349
        %v2370 = vadd.f32 %v2331, %v2349
        %v2371 = vadd.f32 %v2332, %v2349
        %v2372 = vadd.f32 %v2333, %v2349
        %v2373 = vadd.f32 %v2334, %v2349
        %v2374 = vadd.f32 %v2335, %v2349
        %v2375 = vadd.f32 %v2336, %v2349
        %v2376 = vadd.f32 %v2337, %v2349
        %v2377 = vadd.f32 %v2338, %v2349
        %v2378 = vadd.f32 %v2339, %v2349
        %v2379 = vadd.f32 %v2340, %v2349
        %v2380 = vadd.f32 %v2341, %v2349
        %v2381 = vadd.f32 %v2342, %v2349
        %v2382 = vadd.f32 %v2343, %v2349
        %v2383 = vadd.f32 %v2351, %v2352
        %v2384 = vadd.f32 %v2383, %v2353
        %v2385 = vadd.f32 %v2384, %v2354
        %v2386 = vadd.f32 %v2385, %v2355
        %v2387 = vadd.f32 %v2386, %v2356
        %v2388 = vadd.f32 %v2387, %v2357
        %v2389 = vadd.f32 %v2388, %v2358
        %v2390 = vadd.f32 %v2389, %v2359
        %v2391 = vadd.f32 %v2390, %v2360
        %v2392 = vadd.f32 %v2391, %v2361
        %v2393 = vadd.f32 %v2392, %v2362
        %v2394 = vadd.f32 %v2393, %v2363
        %v2395 = vadd.f32 %v2394, %v2364
        %v2396 = vadd.f32 %v2395, %v2365
        %v2397 = vadd.f32 %v2396, %v2366
        %v2398 = vadd.f32 %v2397, %v2367
        %v2399 = vadd.f32 %v2398, %v2368
        %v2400 = vadd.f32 %v2399, %v2369
        %v2401 = vadd.f32 %v2400, %v2370
        %v2402 = vadd.f32 %v2401, %v2371
        %v2403 = vadd.f32 %v2402, %v2372
        %v2404 = vadd.f32 %v2403, %v2373
        %v2405 = vadd.f32 %v2404, %v2374
        %v2406 = vadd.f32 %v2405, %v2375
        %v2407 = vadd.f32 %v2406, %v2376
        %v2408 = vadd.f32 %v2407, %v2377
        %v2409 = vadd.f32 %v2408, %v2378
        %v2410 = vadd.f32 %v2409, %v2379
        %v2411 = vadd.f32 %v2410, %v2380
        %v2412 = vadd.f32 %v2411, %v2381
        %v2413 = vadd.f32 %v2412, %v2382
        %v2414 = vrot.slane %v2413, 4
        %v2415 = vadd.f32 %v2413, %v2414
        %v2416 = vrot.slane %v2415, 2
        %v2417 = vadd.f32 %v2415, %v2416
        %v2418 = vrot.slane %v2417, 1
        %v2419 = vadd.f32 %v2417, %v2418
        %v2420 = vmul.f32 %v2419, 0.00390625
        %v2421 = vmul.f32 %v2351, %v2351
        %v2422 = vmul.f32 %v2352, %v2352
        %v2423 = vmul.f32 %v2353, %v2353
        %v2424 = vmul.f32 %v2354, %v2354
        %v2425 = vmul.f32 %v2355, %v2355
        %v2426 = vmul.f32 %v2356, %v2356
        %v2427 = vmul.f32 %v2357, %v2357
        %v2428 = vmul.f32 %v2358, %v2358
        %v2429 = vmul.f32 %v2359, %v2359
        %v2430 = vmul.f32 %v2360, %v2360
        %v2431 = vmul.f32 %v2361, %v2361
        %v2432 = vmul.f32 %v2362, %v2362
        %v2433 = vmul.f32 %v2363, %v2363
        %v2434 = vmul.f32 %v2364, %v2364
        %v2435 = vmul.f32 %v2365, %v2365
        %v2436 = vmul.f32 %v2366, %v2366
        %v2437 = vmul.f32 %v2367, %v2367
        %v2438 = vmul.f32 %v2368, %v2368
        %v2439 = vmul.f32 %v2369, %v2369
        %v2440 = vmul.f32 %v2370, %v2370
        %v2441 = vmul.f32 %v2371, %v2371
        %v2442 = vmul.f32 %v2372, %v2372
        %v2443 = vmul.f32 %v2373, %v2373
        %v2444 = vmul.f32 %v2374, %v2374
        %v2445 = vmul.f32 %v2375, %v2375
        %v2446 = vmul.f32 %v2376, %v2376
        %v2447 = vmul.f32 %v2377, %v2377
        %v2448 = vmul.f32 %v2378, %v2378
        %v2449 = vmul.f32 %v2379, %v2379
        %v2450 = vmul.f32 %v2380, %v2380
        %v2451 = vmul.f32 %v2381, %v2381
        %v2452 = vmul.f32 %v2382, %v2382
        %v2453 = vadd.f32 %v2421, %v2422
        %v2454 = vadd.f32 %v2453, %v2423
        %v2455 = vadd.f32 %v2454, %v2424
        %v2456 = vadd.f32 %v2455, %v2425
        %v2457 = vadd.f32 %v2456, %v2426
        %v2458 = vadd.f32 %v2457, %v2427
        %v2459 = vadd.f32 %v2458, %v2428
        %v2460 = vadd.f32 %v2459, %v2429
        %v2461 = vadd.f32 %v2460, %v2430
        %v2462 = vadd.f32 %v2461, %v2431
        %v2463 = vadd.f32 %v2462, %v2432
        %v2464 = vadd.f32 %v2463, %v2433
        %v2465 = vadd.f32 %v2464, %v2434
        %v2466 = vadd.f32 %v2465, %v2435
        %v2467 = vadd.f32 %v2466, %v2436
        %v2468 = vadd.f32 %v2467, %v2437
        %v2469 = vadd.f32 %v2468, %v2438
        %v2470 = vadd.f32 %v2469, %v2439
        %v2471 = vadd.f32 %v2470, %v2440
        %v2472 = vadd.f32 %v2471, %v2441
        %v2473 = vadd.f32 %v2472, %v2442
        %v2474 = vadd.f32 %v2473, %v2443
        %v2475 = vadd.f32 %v2474, %v2444
        %v2476 = vadd.f32 %v2475, %v2445
        %v2477 = vadd.f32 %v2476, %v2446
        %v2478 = vadd.f32 %v2477, %v2447
        %v2479 = vadd.f32 %v2478, %v2448
        %v2480 = vadd.f32 %v2479, %v2449
        %v2481 = vadd.f32 %v2480, %v2450
        %v2482 = vadd.f32 %v2481, %v2451
        %v2483 = vadd.f32 %v2482, %v2452
        %v2484 = vrot.slane %v2483, 4
        %v2485 = vadd.f32 %v2483, %v2484
        %v2486 = vrot.slane %v2485, 2
        %v2487 = vadd.f32 %v2485, %v2486
        %v2488 = vrot.slane %v2487, 1
        %v2489 = vadd.f32 %v2487, %v2488
        %v2490 = vmul.f32 %v2489, 0.00390625
        %v2491 = vmul.f32 %v2420, %v2420
        %v2492 = vsub.f32 %v2490, %v2491
        %v2493 = vmax.f32 %v2492, 0.0
        %v2494 = vsub.f32 %v2351, %v2420
        %v2495 = vsub.f32 %v2352, %v2420
        %v2496 = vsub.f32 %v2353, %v2420
        %v2497 = vsub.f32 %v2354, %v2420
        %v2498 = vsub.f32 %v2355, %v2420
        %v2499 = vsub.f32 %v2356, %v2420
        %v2500 = vsub.f32 %v2357, %v2420
        %v2501 = vsub.f32 %v2358, %v2420
        %v2502 = vsub.f32 %v2359, %v2420
        %v2503 = vsub.f32 %v2360, %v2420
        %v2504 = vsub.f32 %v2361, %v2420
        %v2505 = vsub.f32 %v2362, %v2420
        %v2506 = vsub.f32 %v2363, %v2420
        %v2507 = vsub.f32 %v2364, %v2420
        %v2508 = vsub.f32 %v2365, %v2420
        %v2509 = vsub.f32 %v2366, %v2420
        %v2510 = vsub.f32 %v2367, %v2420
        %v2511 = vsub.f32 %v2368, %v2420
        %v2512 = vsub.f32 %v2369, %v2420
        %v2513 = vsub.f32 %v2370, %v2420
        %v2514 = vsub.f32 %v2371, %v2420
        %v2515 = vsub.f32 %v2372, %v2420
        %v2516 = vsub.f32 %v2373, %v2420
        %v2517 = vsub.f32 %v2374, %v2420
        %v2518 = vsub.f32 %v2375, %v2420
        %v2519 = vsub.f32 %v2376, %v2420
        %v2520 = vsub.f32 %v2377, %v2420
        %v2521 = vsub.f32 %v2378, %v2420
        %v2522 = vsub.f32 %v2379, %v2420
        %v2523 = vsub.f32 %v2380, %v2420
        %v2524 = vsub.f32 %v2381, %v2420
        %v2525 = vsub.f32 %v2382, %v2420
        %v2526 = vadd.f32 %v2493, 1e-05
        %v2527 = vrsqrt.pop %v2526
        %v2528 = vmul.f32 %v2494, %v2527
        %v2529 = vmul.f32 %v2495, %v2527
        %v2530 = vmul.f32 %v2496, %v2527
        %v2531 = vmul.f32 %v2497, %v2527
        %v2532 = vmul.f32 %v2498, %v2527
        %v2533 = vmul.f32 %v2499, %v2527
        %v2534 = vmul.f32 %v2500, %v2527
        %v2535 = vmul.f32 %v2501, %v2527
        %v2536 = vmul.f32 %v2502, %v2527
        %v2537 = vmul.f32 %v2503, %v2527
        %v2538 = vmul.f32 %v2504, %v2527
        %v2539 = vmul.f32 %v2505, %v2527
        %v2540 = vmul.f32 %v2506, %v2527
        %v2541 = vmul.f32 %v2507, %v2527
        %v2542 = vmul.f32 %v2508, %v2527
        %v2543 = vmul.f32 %v2509, %v2527
        %v2544 = vmul.f32 %v2510, %v2527
        %v2545 = vmul.f32 %v2511, %v2527
        %v2546 = vmul.f32 %v2512, %v2527
        %v2547 = vmul.f32 %v2513, %v2527
        %v2548 = vmul.f32 %v2514, %v2527
        %v2549 = vmul.f32 %v2515, %v2527
        %v2550 = vmul.f32 %v2516, %v2527
        %v2551 = vmul.f32 %v2517, %v2527
        %v2552 = vmul.f32 %v2518, %v2527
        %v2553 = vmul.f32 %v2519, %v2527
        %v2554 = vmul.f32 %v2520, %v2527
        %v2555 = vmul.f32 %v2521, %v2527
        %v2556 = vmul.f32 %v2522, %v2527
        %v2557 = vmul.f32 %v2523, %v2527
        %v2558 = vmul.f32 %v2524, %v2527
        %v2559 = vmul.f32 %v2525, %v2527
        %v2560 = vmax.f32 %v2528, 0.0
        %v2561 = vmax.f32 %v2529, 0.0
        %v2562 = vmax.f32 %v2530, 0.0
        %v2563 = vmax.f32 %v2531, 0.0
        %v2564 = vmax.f32 %v2532, 0.0
        %v2565 = vmax.f32 %v2533, 0.0
        %v2566 = vmax.f32 %v2534, 0.0
        %v2567 = vmax.f32 %v2535, 0.0
        %v2568 = vmax.f32 %v2536, 0.0
        %v2569 = vmax.f32 %v2537, 0.0
        %v2570 = vmax.f32 %v2538, 0.0
        %v2571 = vmax.f32 %v2539, 0.0
        %v2572 = vmax.f32 %v2540, 0.0
        %v2573 = vmax.f32 %v2541, 0.0
        %v2574 = vmax.f32 %v2542, 0.0
        %v2575 = vmax.f32 %v2543, 0.0
        %v2576 = vmax.f32 %v2544, 0.0
        %v2577 = vmax.f32 %v2545, 0.0
        %v2578 = vmax.f32 %v2546, 0.0
        %v2579 = vmax.f32 %v2547, 0.0
        %v2580 = vmax.f32 %v2548, 0.0
        %v2581 = vmax.f32 %v2549, 0.0
        %v2582 = vmax.f32 %v2550, 0.0
        %v2583 = vmax.f32 %v2551, 0.0
        %v2584 = vmax.f32 %v2552, 0.0
        %v2585 = vmax.f32 %v2553, 0.0
        %v2586 = vmax.f32 %v2554, 0.0
        %v2587 = vmax.f32 %v2555, 0.0
        %v2588 = vmax.f32 %v2556, 0.0
        %v2589 = vmax.f32 %v2557, 0.0
        %v2590 = vmax.f32 %v2558, 0.0
        %v2591 = vmax.f32 %v2559, 0.0
        %v2592 = vpack.c.bf16 %v2561, %v2560
        %v2593 = vpack.c.bf16 %v2563, %v2562
        %v2594 = vpack.c.bf16 %v2565, %v2564
        %v2595 = vpack.c.bf16 %v2567, %v2566
        %v2596 = vpack.c.bf16 %v2569, %v2568
        %v2597 = vpack.c.bf16 %v2571, %v2570
        %v2598 = vpack.c.bf16 %v2573, %v2572
        %v2599 = vpack.c.bf16 %v2575, %v2574
        %v2600 = vpack.c.bf16 %v2577, %v2576
        %v2601 = vpack.c.bf16 %v2579, %v2578
        %v2602 = vpack.c.bf16 %v2581, %v2580
        %v2603 = vpack.c.bf16 %v2583, %v2582
        %v2604 = vpack.c.bf16 %v2585, %v2584
        %v2605 = vpack.c.bf16 %v2587, %v2586
        %v2606 = vpack.c.bf16 %v2589, %v2588
        %v2607 = vpack.c.bf16 %v2591, %v2590
        %2608 = vst [vmem:[%s321 + $0x8] sm:$0xff] %v2592
        %2609 = vst [vmem:[%s321 + $0x20] sm:$0xff] %v2593
        %2610 = vst [vmem:[%s321 + $0x38] sm:$0xff] %v2594
        %2611 = vst [vmem:[%s321 + $0x50] sm:$0xff] %v2595
        %2612 = vst [vmem:[%s321 + $0x68] sm:$0xff] %v2596
        %2613 = vst [vmem:[%s321 + $0x80] sm:$0xff] %v2597
        %2614 = vst [vmem:[%s321 + $0x98] sm:$0xff] %v2598
        %2615 = vst [vmem:[%s321 + $0xb0] sm:$0xff] %v2599
        %2616 = vst [vmem:[%s321 + $0xc8] sm:$0xff] %v2600
        %2617 = vst [vmem:[%s321 + $0xe0] sm:$0xff] %v2601
        %2618 = vst [vmem:[%s321 + $0xf8] sm:$0xff] %v2602
        %2619 = vst [vmem:[%s321 + $0x110] sm:$0xff] %v2603
        %2620 = vst [vmem:[%s321 + $0x128] sm:$0xff] %v2604
        %2621 = vst [vmem:[%s321 + $0x140] sm:$0xff] %v2605
        %2622 = vst [vmem:[%s321 + $0x158] sm:$0xff] %v2606
        %2623 = vst [vmem:[%s321 + $0x170] sm:$0xff] %v2607
        %2624 = vst [vmem:[#allocation2 + $0x8] sm:$0xff] %v2593
        %2625 = vst [vmem:[%s339 + $0x8] sm:$0xff] %v2606
        %v2627 = vshrl.u32 %v2592, 16
        %v2630 = vshrl.u32 %v2593, 16
        %v2633 = vshrl.u32 %v2594, 16
        %v2636 = vshrl.u32 %v2595, 16
        %v2639 = vshrl.u32 %v2596, 16
        %v2642 = vshrl.u32 %v2597, 16
        %v2645 = vshrl.u32 %v2598, 16
        %v2648 = vshrl.u32 %v2599, 16
        %v2651 = vshrl.u32 %v2600, 16
        %v2654 = vshrl.u32 %v2601, 16
        %v2657 = vshrl.u32 %v2602, 16
        %v2660 = vshrl.u32 %v2603, 16
        %v2663 = vshrl.u32 %v2604, 16
        %v2666 = vshrl.u32 %v2605, 16
        %v2669 = vshrl.u32 %v2606, 16
        %v2672 = vshrl.u32 %v2607, 16
        %v2690 = vrot.slane %v2627, 7
        %v2691 = vshll.u32 %v2592, 16
        %v2693 = vor.u32 %v2690, %v2691
        %v2694 = vrot.slane %v2630, 7
        %v2695 = vshll.u32 %v2593, 16
        %v2697 = vor.u32 %v2694, %v2695
        %v2698 = vrot.slane %v2633, 7
        %v2699 = vshll.u32 %v2594, 16
        %v2701 = vor.u32 %v2698, %v2699
        %v2702 = vrot.slane %v2636, 7
        %v2703 = vshll.u32 %v2595, 16
        %v2705 = vor.u32 %v2702, %v2703
        %v2706 = vrot.slane %v2639, 7
        %v2707 = vshll.u32 %v2596, 16
        %v2709 = vor.u32 %v2706, %v2707
        %v2710 = vrot.slane %v2642, 7
        %v2711 = vshll.u32 %v2597, 16
        %v2713 = vor.u32 %v2710, %v2711
        %v2714 = vrot.slane %v2645, 7
        %v2715 = vshll.u32 %v2598, 16
        %v2717 = vor.u32 %v2714, %v2715
        %v2718 = vrot.slane %v2648, 7
        %v2719 = vshll.u32 %v2599, 16
        %v2721 = vor.u32 %v2718, %v2719
        %v2722 = vrot.slane %v2651, 7
        %v2723 = vshll.u32 %v2600, 16
        %v2725 = vor.u32 %v2722, %v2723
        %v2726 = vrot.slane %v2654, 7
        %v2727 = vshll.u32 %v2601, 16
        %v2729 = vor.u32 %v2726, %v2727
        %v2730 = vrot.slane %v2657, 7
        %v2731 = vshll.u32 %v2602, 16
        %v2733 = vor.u32 %v2730, %v2731
        %v2734 = vrot.slane %v2660, 7
        %v2735 = vshll.u32 %v2603, 16
        %v2737 = vor.u32 %v2734, %v2735
        %v2738 = vrot.slane %v2663, 7
        %v2739 = vshll.u32 %v2604, 16
        %v2741 = vor.u32 %v2738, %v2739
        %v2742 = vrot.slane %v2666, 7
        %v2743 = vshll.u32 %v2605, 16
        %v2745 = vor.u32 %v2742, %v2743
        %v2746 = vrot.slane %v2669, 7
        %v2747 = vshll.u32 %v2606, 16
        %v2749 = vor.u32 %v2746, %v2747
        %v2750 = vrot.slane %v2672, 7
        %v2751 = vshll.u32 %v2607, 16
        %v2753 = vor.u32 %v2750, %v2751
        %v2770 = vsel %vm487, %v2627, %v2693
        %v2771 = vsel %vm487, %v2630, %v2697
        %v2772 = vsel %vm487, %v2633, %v2701
        %v2773 = vsel %vm487, %v2636, %v2705
        %v2774 = vsel %vm487, %v2639, %v2709
        %v2775 = vsel %vm487, %v2642, %v2713
        %v2776 = vsel %vm487, %v2645, %v2717
        %v2777 = vsel %vm487, %v2648, %v2721
        %v2778 = vsel %vm487, %v2651, %v2725
        %v2779 = vsel %vm487, %v2654, %v2729
        %v2780 = vsel %vm487, %v2657, %v2733
        %v2781 = vsel %vm487, %v2660, %v2737
        %v2782 = vsel %vm487, %v2663, %v2741
        %v2783 = vsel %vm487, %v2666, %v2745
        %v2784 = vsel %vm487, %v2669, %v2749
        %v2785 = vsel %vm487, %v2672, %v2753
        %2786 = vst [vmem:[%s321] sm:$0xff] %v2770
        %2787 = vst [vmem:[%s321 + $0x18] sm:$0xff] %v2771
        %2788 = vst [vmem:[%s321 + $0x30] sm:$0xff] %v2772
        %2789 = vst [vmem:[%s321 + $0x48] sm:$0xff] %v2773
        %2790 = vst [vmem:[%s321 + $0x60] sm:$0xff] %v2774
        %2791 = vst [vmem:[%s321 + $0x78] sm:$0xff] %v2775
        %2792 = vst [vmem:[%s321 + $0x90] sm:$0xff] %v2776
        %2793 = vst [vmem:[%s321 + $0xa8] sm:$0xff] %v2777
        %2794 = vst [vmem:[%s321 + $0xc0] sm:$0xff] %v2778
        %2795 = vst [vmem:[%s321 + $0xd8] sm:$0xff] %v2779
        %2796 = vst [vmem:[%s321 + $0xf0] sm:$0xff] %v2780
        %2797 = vst [vmem:[%s321 + $0x108] sm:$0xff] %v2781
        %2798 = vst [vmem:[%s321 + $0x120] sm:$0xff] %v2782
        %2799 = vst [vmem:[%s321 + $0x138] sm:$0xff] %v2783
        %2800 = vst [vmem:[%s321 + $0x150] sm:$0xff] %v2784
        %2801 = vst [vmem:[%s321 + $0x168] sm:$0xff] %v2785
        %2802 = vst [vmem:[#allocation2] sm:$0xff] %v2771
        %2803 = vst [vmem:[%s339] sm:$0xff] %v2784
        %v2804 = vrot.slane %v2691, 1
        %v2805 = vor.u32 %v2627, %v2804
        %v2806 = vrot.slane %v2695, 1
        %v2807 = vor.u32 %v2630, %v2806
        %v2808 = vrot.slane %v2699, 1
        %v2809 = vor.u32 %v2633, %v2808
        %v2810 = vrot.slane %v2703, 1
        %v2811 = vor.u32 %v2636, %v2810
        %v2812 = vrot.slane %v2707, 1
        %v2813 = vor.u32 %v2639, %v2812
        %v2814 = vrot.slane %v2711, 1
        %v2815 = vor.u32 %v2642, %v2814
        %v2816 = vrot.slane %v2715, 1
        %v2817 = vor.u32 %v2645, %v2816
        %v2818 = vrot.slane %v2719, 1
        %v2819 = vor.u32 %v2648, %v2818
        %v2820 = vrot.slane %v2723, 1
        %v2821 = vor.u32 %v2651, %v2820
        %v2822 = vrot.slane %v2727, 1
        %v2823 = vor.u32 %v2654, %v2822
        %v2824 = vrot.slane %v2731, 1
        %v2825 = vor.u32 %v2657, %v2824
        %v2826 = vrot.slane %v2735, 1
        %v2827 = vor.u32 %v2660, %v2826
        %v2828 = vrot.slane %v2739, 1
        %v2829 = vor.u32 %v2663, %v2828
        %v2830 = vrot.slane %v2743, 1
        %v2831 = vor.u32 %v2666, %v2830
        %v2832 = vrot.slane %v2747, 1
        %v2833 = vor.u32 %v2669, %v2832
        %v2834 = vrot.slane %v2751, 1
        %v2835 = vor.u32 %v2672, %v2834
        %v2868 = vsel %vm588, %v2805, %v2691
        %v2869 = vsel %vm588, %v2807, %v2695
        %v2870 = vsel %vm588, %v2809, %v2699
        %v2871 = vsel %vm588, %v2811, %v2703
        %v2872 = vsel %vm588, %v2813, %v2707
        %v2873 = vsel %vm588, %v2815, %v2711
        %v2874 = vsel %vm588, %v2817, %v2715
        %v2875 = vsel %vm588, %v2819, %v2719
        %v2876 = vsel %vm588, %v2821, %v2723
        %v2877 = vsel %vm588, %v2823, %v2727
        %v2878 = vsel %vm588, %v2825, %v2731
        %v2879 = vsel %vm588, %v2827, %v2735
        %v2880 = vsel %vm588, %v2829, %v2739
        %v2881 = vsel %vm588, %v2831, %v2743
        %v2882 = vsel %vm588, %v2833, %v2747
        %v2883 = vsel %vm588, %v2835, %v2751
        %2884 = vst [vmem:[%s321 + $0x10] sm:$0xff] %v2868
        %2885 = vst [vmem:[%s321 + $0x28] sm:$0xff] %v2869
        %2886 = vst [vmem:[%s321 + $0x40] sm:$0xff] %v2870
        %2887 = vst [vmem:[%s321 + $0x58] sm:$0xff] %v2871
        %2888 = vst [vmem:[%s321 + $0x70] sm:$0xff] %v2872
        %2889 = vst [vmem:[%s321 + $0x88] sm:$0xff] %v2873
        %2890 = vst [vmem:[%s321 + $0xa0] sm:$0xff] %v2874
        %2891 = vst [vmem:[%s321 + $0xb8] sm:$0xff] %v2875
        %2892 = vst [vmem:[%s321 + $0xd0] sm:$0xff] %v2876
        %2893 = vst [vmem:[%s321 + $0xe8] sm:$0xff] %v2877
        %2894 = vst [vmem:[%s321 + $0x100] sm:$0xff] %v2878
        %2895 = vst [vmem:[%s321 + $0x118] sm:$0xff] %v2879
        %2896 = vst [vmem:[%s321 + $0x130] sm:$0xff] %v2880
        %2897 = vst [vmem:[%s321 + $0x148] sm:$0xff] %v2881
        %2898 = vst [vmem:[%s321 + $0x160] sm:$0xff] %v2882
        %2899 = vst [vmem:[%s321 + $0x178] sm:$0xff] %v2883
        %2900 = vst [vmem:[#allocation2 + $0x10] sm:$0xff] %v2869
        %2901 = vst [vmem:[%s339 + $0x10] sm:$0xff] %v2882
        %v2902 = vld [vmem:[#allocation2] sm:$0xff]
        %v2903 = vld [vmem:[#allocation2 + $0x8] sm:$0xff]
        %v2904 = vld [vmem:[#allocation2 + $0x10] sm:$0xff]
        %v2905 = vld [vmem:[#allocation2 + $0x18] sm:$0xff]
        %v2906 = vld [vmem:[#allocation2 + $0x20] sm:$0xff]
        %v2907 = vld [vmem:[#allocation2 + $0x28] sm:$0xff]
        %v2908 = vld [vmem:[#allocation2 + $0x30] sm:$0xff]
        %v2909 = vld [vmem:[#allocation2 + $0x38] sm:$0xff]
        %v2910 = vld [vmem:[#allocation2 + $0x40] sm:$0xff]
        %v2911 = vld [vmem:[#allocation2 + $0x48] sm:$0xff]
        %v2912 = vld [vmem:[#allocation2 + $0x50] sm:$0xff]
        %v2913 = vld [vmem:[#allocation2 + $0x58] sm:$0xff]
        %v2914 = vld [vmem:[#allocation2 + $0x60] sm:$0xff]
        %v2915 = vld [vmem:[#allocation2 + $0x68] sm:$0xff]
        %v2916 = vld [vmem:[#allocation2 + $0x70] sm:$0xff]
        %v2917 = vld [vmem:[#allocation2 + $0x78] sm:$0xff]
        %v2918 = vld [vmem:[#allocation2 + $0x80] sm:$0xff]
        %v2919 = vld [vmem:[#allocation2 + $0x88] sm:$0xff]
        %v2920 = vld [vmem:[#allocation2 + $0x90] sm:$0xff]
        %v2921 = vld [vmem:[#allocation2 + $0x98] sm:$0xff]
        %v2922 = vld [vmem:[#allocation2 + $0xa0] sm:$0xff]
        %v2923 = vld [vmem:[#allocation2 + $0xa8] sm:$0xff]
        %v2924 = vld [vmem:[#allocation2 + $0xb0] sm:$0xff]
        %v2925 = vld [vmem:[#allocation2 + $0xb8] sm:$0xff]
        %v2926 = vld [vmem:[#allocation2 + $0xc0] sm:$0xff]
        %v2927 = vld [vmem:[#allocation2 + $0xc8] sm:$0xff]
        %v2928 = vld [vmem:[#allocation2 + $0xd0] sm:$0xff]
        %v2929 = vld [vmem:[#allocation2 + $0xd8] sm:$0xff]
        %v2930 = vld [vmem:[#allocation2 + $0xe0] sm:$0xff]
        %v2931 = vld [vmem:[#allocation2 + $0xe8] sm:$0xff]
        %v2932 = vld [vmem:[#allocation2 + $0xf0] sm:$0xff]
        %v2933 = vld [vmem:[#allocation2 + $0xf8] sm:$0xff]
        %v2934 = vld [vmem:[#allocation2 + $0x100] sm:$0xff]
        %v2935 = vld [vmem:[#allocation2 + $0x108] sm:$0xff]
        %v2936 = vld [vmem:[#allocation2 + $0x110] sm:$0xff]
        %v2937 = vld [vmem:[#allocation2 + $0x118] sm:$0xff]
        %v2938 = vld [vmem:[#allocation2 + $0x120] sm:$0xff]
        %v2939 = vld [vmem:[#allocation2 + $0x128] sm:$0xff]
        %v2940 = vld [vmem:[#allocation2 + $0x130] sm:$0xff]
        %v2941 = vld [vmem:[#allocation2 + $0x138] sm:$0xff]
        %v2942 = vld [vmem:[#allocation2 + $0x140] sm:$0xff]
        %v2943 = vld [vmem:[#allocation2 + $0x148] sm:$0xff]
        %v2944 = vld [vmem:[#allocation2 + $0x150] sm:$0xff]
        %v2945 = vld [vmem:[#allocation2 + $0x158] sm:$0xff]
        %v2946 = vld [vmem:[#allocation2 + $0x160] sm:$0xff]
        %v2947 = vld [vmem:[#allocation2 + $0x168] sm:$0xff]
        %v2948 = vld [vmem:[#allocation2 + $0x170] sm:$0xff]
        %v2949 = vld [vmem:[#allocation2 + $0x178] sm:$0xff]
        %v2950 = vld [vmem:[#allocation8] sm:$0xf]
        %v2951 = vld [vmem:[#allocation8 + $0x4] sm:$0xf]
        %v2952 = vld [vmem:[#allocation8 + $0x8] sm:$0xf]
        %v2953 = vld [vmem:[#allocation8 + $0xc] sm:$0xf]
        %v2954 = vld [vmem:[#allocation8 + $0x10] sm:$0xf]
        %v2955 = vld [vmem:[#allocation8 + $0x14] sm:$0xf]
        %v2956 = vld [vmem:[#allocation8 + $0x18] sm:$0xf]
        %v2957 = vld [vmem:[#allocation8 + $0x1c] sm:$0xf]
        %v2958 = vld [vmem:[#allocation8 + $0x20] sm:$0xf]
        %v2959 = vld [vmem:[#allocation8 + $0x24] sm:$0xf]
        %v2960 = vld [vmem:[#allocation8 + $0x28] sm:$0xf]
        %v2961 = vld [vmem:[#allocation8 + $0x2c] sm:$0xf]
        %v2962 = vld [vmem:[#allocation8 + $0x30] sm:$0xf]
        %v2963 = vld [vmem:[#allocation8 + $0x34] sm:$0xf]
        %v2964 = vld [vmem:[#allocation8 + $0x38] sm:$0xf]
        %v2965 = vld [vmem:[#allocation8 + $0x3c] sm:$0xf]
        %v2966 = vld [vmem:[#allocation8 + $0x40] sm:$0xf]
        %v2967 = vld [vmem:[#allocation8 + $0x44] sm:$0xf]
        %v2968 = vld [vmem:[#allocation8 + $0x48] sm:$0xf]
        %v2969 = vld [vmem:[#allocation8 + $0x4c] sm:$0xf]
        %v2970 = vld [vmem:[#allocation8 + $0x50] sm:$0xf]
        %v2971 = vld [vmem:[#allocation8 + $0x54] sm:$0xf]
        %v2972 = vld [vmem:[#allocation8 + $0x58] sm:$0xf]
        %v2973 = vld [vmem:[#allocation8 + $0x5c] sm:$0xf]
        %v2974 = vld [vmem:[#allocation8 + $0x60] sm:$0xf]
        %v2975 = vld [vmem:[#allocation8 + $0x64] sm:$0xf]
        %v2976 = vld [vmem:[#allocation8 + $0x68] sm:$0xf]
        %v2977 = vld [vmem:[#allocation8 + $0x6c] sm:$0xf]
        %v2978 = vld [vmem:[#allocation8 + $0x70] sm:$0xf]
        %v2979 = vld [vmem:[#allocation8 + $0x74] sm:$0xf]
        %v2980 = vld [vmem:[#allocation8 + $0x78] sm:$0xf]
        %v2981 = vld [vmem:[#allocation8 + $0x7c] sm:$0xf]
        %v2982 = vld [vmem:[#allocation8 + $0x80] sm:$0xf]
        %v2983 = vld [vmem:[#allocation8 + $0x84] sm:$0xf]
        %v2984 = vld [vmem:[#allocation8 + $0x88] sm:$0xf]
        %v2985 = vld [vmem:[#allocation8 + $0x8c] sm:$0xf]
        %v2986 = vld [vmem:[#allocation8 + $0x90] sm:$0xf]
        %v2987 = vld [vmem:[#allocation8 + $0x94] sm:$0xf]
        %v2988 = vld [vmem:[#allocation8 + $0x98] sm:$0xf]
        %v2989 = vld [vmem:[#allocation8 + $0x9c] sm:$0xf]
        %v2990 = vld [vmem:[#allocation8 + $0xa0] sm:$0xf]
        %v2991 = vld [vmem:[#allocation8 + $0xa4] sm:$0xf]
        %v2992 = vld [vmem:[#allocation8 + $0xa8] sm:$0xf]
        %v2993 = vld [vmem:[#allocation8 + $0xac] sm:$0xf]
        %v2994 = vld [vmem:[#allocation8 + $0xb0] sm:$0xf]
        %v2995 = vld [vmem:[#allocation8 + $0xb4] sm:$0xf]
        %v2996 = vld [vmem:[#allocation8 + $0xb8] sm:$0xf]
        %v2997 = vld [vmem:[#allocation8 + $0xbc] sm:$0xf]
        %v2998 = vld [vmem:[%s321] sm:$0xff]
        %v2999 = vld [vmem:[%s321 + $0x8] sm:$0xff]
        %v3000 = vld [vmem:[%s321 + $0x10] sm:$0xff]
        %v3001 = vld [vmem:[%s321 + $0x18] sm:$0xff]
        %v3002 = vld [vmem:[%s321 + $0x20] sm:$0xff]
        %v3003 = vld [vmem:[%s321 + $0x28] sm:$0xff]
        %v3004 = vld [vmem:[%s321 + $0x30] sm:$0xff]
        %v3005 = vld [vmem:[%s321 + $0x38] sm:$0xff]
        %v3006 = vld [vmem:[%s321 + $0x40] sm:$0xff]
        %v3007 = vld [vmem:[%s321 + $0x48] sm:$0xff]
        %v3008 = vld [vmem:[%s321 + $0x50] sm:$0xff]
        %v3009 = vld [vmem:[%s321 + $0x58] sm:$0xff]
        %v3010 = vld [vmem:[%s321 + $0x60] sm:$0xff]
        %v3011 = vld [vmem:[%s321 + $0x68] sm:$0xff]
        %v3012 = vld [vmem:[%s321 + $0x70] sm:$0xff]
        %v3013 = vld [vmem:[%s321 + $0x78] sm:$0xff]
        %v3014 = vld [vmem:[%s321 + $0x80] sm:$0xff]
        %v3015 = vld [vmem:[%s321 + $0x88] sm:$0xff]
        %v3016 = vld [vmem:[%s321 + $0x90] sm:$0xff]
        %v3017 = vld [vmem:[%s321 + $0x98] sm:$0xff]
        %v3018 = vld [vmem:[%s321 + $0xa0] sm:$0xff]
        %v3019 = vld [vmem:[%s321 + $0xa8] sm:$0xff]
        %v3020 = vld [vmem:[%s321 + $0xb0] sm:$0xff]
        %v3021 = vld [vmem:[%s321 + $0xb8] sm:$0xff]
        %v3022 = vld [vmem:[%s321 + $0xc0] sm:$0xff]
        %v3023 = vld [vmem:[%s321 + $0xc8] sm:$0xff]
        %v3024 = vld [vmem:[%s321 + $0xd0] sm:$0xff]
        %v3025 = vld [vmem:[%s321 + $0xd8] sm:$0xff]
        %v3026 = vld [vmem:[%s321 + $0xe0] sm:$0xff]
        %v3027 = vld [vmem:[%s321 + $0xe8] sm:$0xff]
        %v3028 = vld [vmem:[%s321 + $0xf0] sm:$0xff]
        %v3029 = vld [vmem:[%s321 + $0xf8] sm:$0xff]
        %v3030 = vld [vmem:[%s321 + $0x100] sm:$0xff]
        %v3031 = vld [vmem:[%s321 + $0x108] sm:$0xff]
        %v3032 = vld [vmem:[%s321 + $0x110] sm:$0xff]
        %v3033 = vld [vmem:[%s321 + $0x118] sm:$0xff]
        %v3034 = vld [vmem:[%s321 + $0x120] sm:$0xff]
        %v3035 = vld [vmem:[%s321 + $0x128] sm:$0xff]
        %v3036 = vld [vmem:[%s321 + $0x130] sm:$0xff]
        %v3037 = vld [vmem:[%s321 + $0x138] sm:$0xff]
        %v3038 = vld [vmem:[%s321 + $0x140] sm:$0xff]
        %v3039 = vld [vmem:[%s321 + $0x148] sm:$0xff]
        %v3040 = vld [vmem:[%s321 + $0x150] sm:$0xff]
        %v3041 = vld [vmem:[%s321 + $0x158] sm:$0xff]
        %v3042 = vld [vmem:[%s321 + $0x160] sm:$0xff]
        %v3043 = vld [vmem:[%s321 + $0x168] sm:$0xff]
        %v3044 = vld [vmem:[%s321 + $0x170] sm:$0xff]
        %v3045 = vld [vmem:[%s321 + $0x178] sm:$0xff]
        %s3046 = scalar_lea.vmem [#allocation8], 192
        %v3047 = vld [vmem:[%s3046] sm:$0xf]
        %v3048 = vld [vmem:[%s3046 + $0x4] sm:$0xf]
        %v3049 = vld [vmem:[%s3046 + $0x8] sm:$0xf]
        %v3050 = vld [vmem:[%s3046 + $0xc] sm:$0xf]
        %v3051 = vld [vmem:[%s3046 + $0x10] sm:$0xf]
        %v3052 = vld [vmem:[%s3046 + $0x14] sm:$0xf]
        %v3053 = vld [vmem:[%s3046 + $0x18] sm:$0xf]
        %v3054 = vld [vmem:[%s3046 + $0x1c] sm:$0xf]
        %v3055 = vld [vmem:[%s3046 + $0x20] sm:$0xf]
        %v3056 = vld [vmem:[%s3046 + $0x24] sm:$0xf]
        %v3057 = vld [vmem:[%s3046 + $0x28] sm:$0xf]
        %v3058 = vld [vmem:[%s3046 + $0x2c] sm:$0xf]
        %v3059 = vld [vmem:[%s3046 + $0x30] sm:$0xf]
        %v3060 = vld [vmem:[%s3046 + $0x34] sm:$0xf]
        %v3061 = vld [vmem:[%s3046 + $0x38] sm:$0xf]
        %v3062 = vld [vmem:[%s3046 + $0x3c] sm:$0xf]
        %v3063 = vld [vmem:[%s3046 + $0x40] sm:$0xf]
        %v3064 = vld [vmem:[%s3046 + $0x44] sm:$0xf]
        %v3065 = vld [vmem:[%s3046 + $0x48] sm:$0xf]
        %v3066 = vld [vmem:[%s3046 + $0x4c] sm:$0xf]
        %v3067 = vld [vmem:[%s3046 + $0x50] sm:$0xf]
        %v3068 = vld [vmem:[%s3046 + $0x54] sm:$0xf]
        %v3069 = vld [vmem:[%s3046 + $0x58] sm:$0xf]
        %v3070 = vld [vmem:[%s3046 + $0x5c] sm:$0xf]
        %v3071 = vld [vmem:[%s3046 + $0x60] sm:$0xf]
        %v3072 = vld [vmem:[%s3046 + $0x64] sm:$0xf]
        %v3073 = vld [vmem:[%s3046 + $0x68] sm:$0xf]
        %v3074 = vld [vmem:[%s3046 + $0x6c] sm:$0xf]
        %v3075 = vld [vmem:[%s3046 + $0x70] sm:$0xf]
        %v3076 = vld [vmem:[%s3046 + $0x74] sm:$0xf]
        %v3077 = vld [vmem:[%s3046 + $0x78] sm:$0xf]
        %v3078 = vld [vmem:[%s3046 + $0x7c] sm:$0xf]
        %v3079 = vld [vmem:[%s3046 + $0x80] sm:$0xf]
        %v3080 = vld [vmem:[%s3046 + $0x84] sm:$0xf]
        %v3081 = vld [vmem:[%s3046 + $0x88] sm:$0xf]
        %v3082 = vld [vmem:[%s3046 + $0x8c] sm:$0xf]
        %v3083 = vld [vmem:[%s3046 + $0x90] sm:$0xf]
        %v3084 = vld [vmem:[%s3046 + $0x94] sm:$0xf]
        %v3085 = vld [vmem:[%s3046 + $0x98] sm:$0xf]
        %v3086 = vld [vmem:[%s3046 + $0x9c] sm:$0xf]
        %v3087 = vld [vmem:[%s3046 + $0xa0] sm:$0xf]
        %v3088 = vld [vmem:[%s3046 + $0xa4] sm:$0xf]
        %v3089 = vld [vmem:[%s3046 + $0xa8] sm:$0xf]
        %v3090 = vld [vmem:[%s3046 + $0xac] sm:$0xf]
        %v3091 = vld [vmem:[%s3046 + $0xb0] sm:$0xf]
        %v3092 = vld [vmem:[%s3046 + $0xb4] sm:$0xf]
        %v3093 = vld [vmem:[%s3046 + $0xb8] sm:$0xf]
        %v3094 = vld [vmem:[%s3046 + $0xbc] sm:$0xf]
        %v3143 = vunpack.c.l.b16 %v3047
        %v3144 = vunpack.c.l.b16 %v3048
        %v3145 = vunpack.c.l.b16 %v3049
        %v3146 = vunpack.c.l.b16 %v3050
        %v3147 = vunpack.c.l.b16 %v3051
        %v3148 = vunpack.c.l.b16 %v3052
        %v3149 = vunpack.c.l.b16 %v3053
        %v3150 = vunpack.c.l.b16 %v3054
        %v3151 = vunpack.c.l.b16 %v3055
        %v3152 = vunpack.c.l.b16 %v3056
        %v3153 = vunpack.c.l.b16 %v3057
        %v3154 = vunpack.c.l.b16 %v3058
        %v3155 = vunpack.c.l.b16 %v3059
        %v3156 = vunpack.c.l.b16 %v3060
        %v3157 = vunpack.c.l.b16 %v3061
        %v3158 = vunpack.c.l.b16 %v3062
        %v3159 = vunpack.c.l.b16 %v3063
        %v3160 = vunpack.c.l.b16 %v3064
        %v3161 = vunpack.c.l.b16 %v3065
        %v3162 = vunpack.c.l.b16 %v3066
        %v3163 = vunpack.c.l.b16 %v3067
        %v3164 = vunpack.c.l.b16 %v3068
        %v3165 = vunpack.c.l.b16 %v3069
        %v3166 = vunpack.c.l.b16 %v3070
        %v3167 = vunpack.c.l.b16 %v3071
        %v3168 = vunpack.c.l.b16 %v3072
        %v3169 = vunpack.c.l.b16 %v3073
        %v3170 = vunpack.c.l.b16 %v3074
        %v3171 = vunpack.c.l.b16 %v3075
        %v3172 = vunpack.c.l.b16 %v3076
        %v3173 = vunpack.c.l.b16 %v3077
        %v3174 = vunpack.c.l.b16 %v3078
        %v3175 = vunpack.c.l.b16 %v3079
        %v3176 = vunpack.c.l.b16 %v3080
        %v3177 = vunpack.c.l.b16 %v3081
        %v3178 = vunpack.c.l.b16 %v3082
        %v3179 = vunpack.c.l.b16 %v3083
        %v3180 = vunpack.c.l.b16 %v3084
        %v3181 = vunpack.c.l.b16 %v3085
        %v3182 = vunpack.c.l.b16 %v3086
        %v3183 = vunpack.c.l.b16 %v3087
        %v3184 = vunpack.c.l.b16 %v3088
        %v3185 = vunpack.c.l.b16 %v3089
        %v3186 = vunpack.c.l.b16 %v3090
        %v3187 = vunpack.c.l.b16 %v3091
        %v3188 = vunpack.c.l.b16 %v3092
        %v3189 = vunpack.c.l.b16 %v3093
        %v3190 = vunpack.c.l.b16 %v3094
        %v3191 = vpack.c.b16 %v3144, %v3143
        %v3192 = vpack.c.b16 %v3146, %v3145
        %v3193 = vpack.c.b16 %v3148, %v3147
        %v3194 = vpack.c.b16 %v3150, %v3149
        %v3195 = vpack.c.b16 %v3152, %v3151
        %v3196 = vpack.c.b16 %v3154, %v3153
        %v3197 = vpack.c.b16 %v3156, %v3155
        %v3198 = vpack.c.b16 %v3158, %v3157
        %v3199 = vpack.c.b16 %v3160, %v3159
        %v3200 = vpack.c.b16 %v3162, %v3161
        %v3201 = vpack.c.b16 %v3164, %v3163
        %v3202 = vpack.c.b16 %v3166, %v3165
        %v3203 = vpack.c.b16 %v3168, %v3167
        %v3204 = vpack.c.b16 %v3170, %v3169
        %v3205 = vpack.c.b16 %v3172, %v3171
        %v3206 = vpack.c.b16 %v3174, %v3173
        %v3207 = vpack.c.b16 %v3176, %v3175
        %v3208 = vpack.c.b16 %v3178, %v3177
        %v3209 = vpack.c.b16 %v3180, %v3179
        %v3210 = vpack.c.b16 %v3182, %v3181
        %v3211 = vpack.c.b16 %v3184, %v3183
        %v3212 = vpack.c.b16 %v3186, %v3185
        %v3213 = vpack.c.b16 %v3188, %v3187
        %v3214 = vpack.c.b16 %v3190, %v3189
        %3239 = vmatprep.subr.bf16.mxu0 0
        %3240 = vmatpush1.bf16.msra.mxu0 %v3191
        %3241 = vmatprep.subr.bf16.mxu0 0
        %3242 = vmatpush1.bf16.msra.mxu0 %v3192
        %3243 = vmatprep.subr.bf16.mxu0 0
        %3244 = vmatpush1.bf16.msra.mxu0 %v3193
        %3245 = vmatprep.subr.bf16.mxu0 0
        %3246 = vmatpush1.bf16.msra.mxu0 %v3194
        %3247 = vmatprep.subr.bf16.mxu0 0
        %3248 = vmatpush1.bf16.msra.mxu0 %v3195
        %3249 = vmatprep.subr.bf16.mxu0 0
        %3250 = vmatpush1.bf16.msra.mxu0 %v3196
        %3251 = vmatprep.subr.bf16.mxu0 0
        %3252 = vmatpush1.bf16.msra.mxu0 %v3197
        %3253 = vmatprep.subr.bf16.mxu0 0
        %3254 = vmatpush1.bf16.msra.mxu0 %v3198
        %3255 = vmatprep.subr.bf16.mxu0 0
        %3256 = vmatpush1.bf16.msra.mxu0 %v3199
        %3257 = vmatprep.subr.bf16.mxu0 0
        %3258 = vmatpush1.bf16.msra.mxu0 %v3200
        %3259 = vmatprep.subr.bf16.mxu0 0
        %3260 = vmatpush1.bf16.msra.mxu0 %v3201
        %3261 = vmatprep.subr.bf16.mxu0 0
        %3262 = vmatpush1.bf16.msra.mxu0 %v3202
        %3263 = vmatprep.subr.bf16.mxu0 0
        %3264 = vmatpush1.bf16.msra.mxu0 %v3203
        %3265 = vmatprep.subr.bf16.mxu0 0
        %3266 = vmatpush1.bf16.msra.mxu0 %v3204
        %3267 = vmatprep.subr.bf16.mxu0 0
        %3268 = vmatpush1.bf16.msra.mxu0 %v3205
        %3269 = vmatprep.subr.bf16.mxu0 0
        %3270 = vmatpush1.bf16.msra.mxu0 %v3206
        %3271 = vmatprep.mubr.bf16.mxu0 %v2999
        %3272 = vmatmul.mubr.bf16.gmra.mrb[0].mxu0 %v2998
        %v3273 = vpop.f32.mrb[0].mxu0
        %v3274 = vadd.f32 0.0, %v3273
        %v3275 = vpop.f32.mrb[0].mxu0
        %v3276 = vpop.f32.mrb[0].mxu0
        %v3277 = vadd.f32 0.0, %v3276
        %v3278 = vpop.f32.mrb[0].mxu0
        %3279 = vmatprep.mubr.bf16.mxu0 %v3002
        %3280 = vmatmul.mubr.bf16.gmra.mrb[0].mxu0 %v3001
        %v3281 = vpop.f32.mrb[0].mxu0
        %v3282 = vadd.f32 0.0, %v3281
        %v3283 = vpop.f32.mrb[0].mxu0
        %v3284 = vpop.f32.mrb[0].mxu0
        %v3285 = vadd.f32 0.0, %v3284
        %v3286 = vpop.f32.mrb[0].mxu0
        %3287 = vmatprep.mubr.bf16.mxu0 %v3005
        %3288 = vmatmul.mubr.bf16.gmra.mrb[0].mxu0 %v3004
        %v3289 = vpop.f32.mrb[0].mxu0
        %v3290 = vadd.f32 0.0, %v3289
        %v3291 = vpop.f32.mrb[0].mxu0
        %v3292 = vpop.f32.mrb[0].mxu0
        %v3293 = vadd.f32 0.0, %v3292
        %v3294 = vpop.f32.mrb[0].mxu0
        %3295 = vmatprep.mubr.bf16.mxu0 %v3008
        %3296 = vmatmul.mubr.bf16.gmra.mrb[0].mxu0 %v3007
        %v3297 = vpop.f32.mrb[0].mxu0
        %v3298 = vadd.f32 0.0, %v3297
        %v3299 = vpop.f32.mrb[0].mxu0
        %v3300 = vpop.f32.mrb[0].mxu0
        %v3301 = vadd.f32 0.0, %v3300
        %v3302 = vpop.f32.mrb[0].mxu0
        %3303 = vmatprep.mubr.bf16.mxu0 %v3011
        %3304 = vmatmul.mubr.bf16.gmra.mrb[0].mxu0 %v3010
        %v3305 = vpop.f32.mrb[0].mxu0
        %v3306 = vadd.f32 0.0, %v3305
        %v3307 = vpop.f32.mrb[0].mxu0
        %v3308 = vpop.f32.mrb[0].mxu0
        %v3309 = vadd.f32 0.0, %v3308
        %v3310 = vpop.f32.mrb[0].mxu0
        %3311 = vmatprep.mubr.bf16.mxu0 %v3014
        %3312 = vmatmul.mubr.bf16.gmra.mrb[0].mxu0 %v3013
        %v3313 = vpop.f32.mrb[0].mxu0
        %v3314 = vadd.f32 0.0, %v3313
        %v3315 = vpop.f32.mrb[0].mxu0
        %v3316 = vpop.f32.mrb[0].mxu0
        %v3317 = vadd.f32 0.0, %v3316
        %v3318 = vpop.f32.mrb[0].mxu0
        %3319 = vmatprep.mubr.bf16.mxu0 %v3017
        %3320 = vmatmul.mubr.bf16.gmra.mrb[0].mxu0 %v3016
        %v3321 = vpop.f32.mrb[0].mxu0
        %v3322 = vadd.f32 0.0, %v3321
        %v3323 = vpop.f32.mrb[0].mxu0
        %v3324 = vpop.f32.mrb[0].mxu0
        %v3325 = vadd.f32 0.0, %v3324
        %v3326 = vpop.f32.mrb[0].mxu0
        %3327 = vmatprep.mubr.bf16.mxu0 %v3020
        %3328 = vmatmul.mubr.bf16.gmra.mrb[0].mxu0 %v3019
        %v3329 = vpop.f32.mrb[0].mxu0
        %v3330 = vadd.f32 0.0, %v3329
        %v3331 = vpop.f32.mrb[0].mxu0
        %v3332 = vpop.f32.mrb[0].mxu0
        %v3333 = vadd.f32 0.0, %v3332
        %v3334 = vpop.f32.mrb[0].mxu0
        %3335 = vmatprep.mubr.bf16.mxu0 %v3023
        %3336 = vmatmul.mubr.bf16.gmra.mrb[0].mxu0 %v3022
        %v3337 = vpop.f32.mrb[0].mxu0
        %v3338 = vadd.f32 0.0, %v3337
        %v3339 = vpop.f32.mrb[0].mxu0
        %v3340 = vpop.f32.mrb[0].mxu0
        %v3341 = vadd.f32 0.0, %v3340
        %v3342 = vpop.f32.mrb[0].mxu0
        %3343 = vmatprep.mubr.bf16.mxu0 %v3026
        %3344 = vmatmul.mubr.bf16.gmra.mrb[0].mxu0 %v3025
        %v3345 = vpop.f32.mrb[0].mxu0
        %v3346 = vadd.f32 0.0, %v3345
        %v3347 = vpop.f32.mrb[0].mxu0
        %v3348 = vpop.f32.mrb[0].mxu0
        %v3349 = vadd.f32 0.0, %v3348
        %v3350 = vpop.f32.mrb[0].mxu0
        %3351 = vmatprep.mubr.bf16.mxu0 %v3029
        %3352 = vmatmul.mubr.bf16.gmra.mrb[0].mxu0 %v3028
        %v3353 = vpop.f32.mrb[0].mxu0
        %v3354 = vadd.f32 0.0, %v3353
        %v3355 = vpop.f32.mrb[0].mxu0
        %v3356 = vpop.f32.mrb[0].mxu0
        %v3357 = vadd.f32 0.0, %v3356
        %v3358 = vpop.f32.mrb[0].mxu0
        %3359 = vmatprep.mubr.bf16.mxu0 %v3032
        %3360 = vmatmul.mubr.bf16.gmra.mrb[0].mxu0 %v3031
        %v3361 = vpop.f32.mrb[0].mxu0
        %v3362 = vadd.f32 0.0, %v3361
        %v3363 = vpop.f32.mrb[0].mxu0
        %v3364 = vpop.f32.mrb[0].mxu0
        %v3365 = vadd.f32 0.0, %v3364
        %v3366 = vpop.f32.mrb[0].mxu0
        %3367 = vmatprep.mubr.bf16.mxu0 %v3035
        %3368 = vmatmul.mubr.bf16.gmra.mrb[0].mxu0 %v3034
        %v3369 = vpop.f32.mrb[0].mxu0
        %v3370 = vadd.f32 0.0, %v3369
        %v3371 = vpop.f32.mrb[0].mxu0
        %v3372 = vpop.f32.mrb[0].mxu0
        %v3373 = vadd.f32 0.0, %v3372
        %v3374 = vpop.f32.mrb[0].mxu0
        %3375 = vmatprep.mubr.bf16.mxu0 %v3038
        %3376 = vmatmul.mubr.bf16.gmra.mrb[0].mxu0 %v3037
        %v3377 = vpop.f32.mrb[0].mxu0
        %v3378 = vadd.f32 0.0, %v3377
        %v3379 = vpop.f32.mrb[0].mxu0
        %v3380 = vpop.f32.mrb[0].mxu0
        %v3381 = vadd.f32 0.0, %v3380
        %v3382 = vpop.f32.mrb[0].mxu0
        %3383 = vmatprep.mubr.bf16.mxu0 %v3041
        %3384 = vmatmul.mubr.bf16.gmra.mrb[0].mxu0 %v3040
        %v3385 = vpop.f32.mrb[0].mxu0
        %v3386 = vadd.f32 0.0, %v3385
        %v3387 = vpop.f32.mrb[0].mxu0
        %v3388 = vpop.f32.mrb[0].mxu0
        %v3389 = vadd.f32 0.0, %v3388
        %v3390 = vpop.f32.mrb[0].mxu0
        %3391 = vmatprep.mubr.bf16.mxu0 %v3044
        %3392 = vmatmul.mubr.bf16.gmra.mrb[0].mxu0 %v3043
        %v3393 = vpop.f32.mrb[0].mxu0
        %v3394 = vadd.f32 0.0, %v3393
        %v3395 = vpop.f32.mrb[0].mxu0
        %v3396 = vpop.f32.mrb[0].mxu0
        %v3397 = vadd.f32 0.0, %v3396
        %v3398 = vpop.f32.mrb[0].mxu0
        %3399 = vdwg.mxu0
        %3400 = vmatprep.subr.bf16.mxu0 0
        %3401 = vmatpush1.bf16.msra.mxu0 %v3207
        %3402 = vmatprep.subr.bf16.mxu0 0
        %3403 = vmatpush1.bf16.msra.mxu0 %v3208
        %3404 = vmatprep.subr.bf16.mxu0 0
        %3405 = vmatpush1.bf16.msra.mxu0 %v3209
        %3406 = vmatprep.subr.bf16.mxu0 0
        %3407 = vmatpush1.bf16.msra.mxu0 %v3210
        %3408 = vmatprep.subr.bf16.mxu0 0
        %3409 = vmatpush1.bf16.msra.mxu0 %v3211
        %3410 = vmatprep.subr.bf16.mxu0 0
        %3411 = vmatpush1.bf16.msra.mxu0 %v3212
        %3412 = vmatprep.subr.bf16.mxu0 0
        %3413 = vmatpush1.bf16.msra.mxu0 %v3213
        %3414 = vmatprep.subr.bf16.mxu0 0
        %3415 = vmatpush1.bf16.msra.mxu0 %v3214
        %3416 = vmatprep.subr.bf16.mxu0 0
        %3417 = vmatpush1.bf16.msra.mxu0 0
        %3418 = vmatprep.subr.bf16.mxu0 0
        %3419 = vmatpush1.bf16.msra.mxu0 0
        %3420 = vmatprep.subr.bf16.mxu0 0
        %3421 = vmatpush1.bf16.msra.mxu0 0
        %3422 = vmatprep.subr.bf16.mxu0 0
        %3423 = vmatpush1.bf16.msra.mxu0 0
        %3424 = vmatprep.subr.bf16.mxu0 0
        %3425 = vmatpush1.bf16.msra.mxu0 0
        %3426 = vmatprep.subr.bf16.mxu0 0
        %3427 = vmatpush1.bf16.msra.mxu0 0
        %3428 = vmatprep.subr.bf16.mxu0 0
        %3429 = vmatpush1.bf16.msra.mxu0 0
        %3430 = vmatprep.subr.bf16.mxu0 0
        %3431 = vmatpush1.bf16.msra.mxu0 0
        %3432 = vmatprep.mubr.bf16.mxu0 0
        %3433 = vmatmul.mubr.bf16.gmra.mrb[0].mxu0 %v3000
        %v3434 = vpop.f32.mrb[0].mxu0
        %v3435 = vadd.f32 %v3274, %v3434
        %v3436 = vpop.f32.mrb[0].mxu0
        %v3437 = vpop.f32.mrb[0].mxu0
        %v3438 = vadd.f32 %v3277, %v3437
        %v3439 = vpop.f32.mrb[0].mxu0
        %3440 = vmatprep.mubr.bf16.mxu0 0
        %3441 = vmatmul.mubr.bf16.gmra.mrb[0].mxu0 %v3003
        %v3442 = vpop.f32.mrb[0].mxu0
        %v3443 = vadd.f32 %v3282, %v3442
        %v3444 = vpop.f32.mrb[0].mxu0
        %v3445 = vpop.f32.mrb[0].mxu0
        %v3446 = vadd.f32 %v3285, %v3445
        %v3447 = vpop.f32.mrb[0].mxu0
        %3448 = vmatprep.mubr.bf16.mxu0 0
        %3449 = vmatmul.mubr.bf16.gmra.mrb[0].mxu0 %v3006
        %v3450 = vpop.f32.mrb[0].mxu0
        %v3451 = vadd.f32 %v3290, %v3450
        %v3452 = vpop.f32.mrb[0].mxu0
        %v3453 = vpop.f32.mrb[0].mxu0
        %v3454 = vadd.f32 %v3293, %v3453
        %v3455 = vpop.f32.mrb[0].mxu0
        %3456 = vmatprep.mubr.bf16.mxu0 0
        %3457 = vmatmul.mubr.bf16.gmra.mrb[0].mxu0 %v3009
        %v3458 = vpop.f32.mrb[0].mxu0
        %v3459 = vadd.f32 %v3298, %v3458
        %v3460 = vpop.f32.mrb[0].mxu0
        %v3461 = vpop.f32.mrb[0].mxu0
        %v3462 = vadd.f32 %v3301, %v3461
        %v3463 = vpop.f32.mrb[0].mxu0
        %3464 = vmatprep.mubr.bf16.mxu0 0
        %3465 = vmatmul.mubr.bf16.gmra.mrb[0].mxu0 %v3012
        %v3466 = vpop.f32.mrb[0].mxu0
        %v3467 = vadd.f32 %v3306, %v3466
        %v3468 = vpop.f32.mrb[0].mxu0
        %v3469 = vpop.f32.mrb[0].mxu0
        %v3470 = vadd.f32 %v3309, %v3469
        %v3471 = vpop.f32.mrb[0].mxu0
        %3472 = vmatprep.mubr.bf16.mxu0 0
        %3473 = vmatmul.mubr.bf16.gmra.mrb[0].mxu0 %v3015
        %v3474 = vpop.f32.mrb[0].mxu0
        %v3475 = vadd.f32 %v3314, %v3474
        %v3476 = vpop.f32.mrb[0].mxu0
        %v3477 = vpop.f32.mrb[0].mxu0
        %v3478 = vadd.f32 %v3317, %v3477
        %v3479 = vpop.f32.mrb[0].mxu0
        %3480 = vmatprep.mubr.bf16.mxu0 0
        %3481 = vmatmul.mubr.bf16.gmra.mrb[0].mxu0 %v3018
        %v3482 = vpop.f32.mrb[0].mxu0
        %v3483 = vadd.f32 %v3322, %v3482
        %v3484 = vpop.f32.mrb[0].mxu0
        %v3485 = vpop.f32.mrb[0].mxu0
        %v3486 = vadd.f32 %v3325, %v3485
        %v3487 = vpop.f32.mrb[0].mxu0
        %3488 = vmatprep.mubr.bf16.mxu0 0
        %3489 = vmatmul.mubr.bf16.gmra.mrb[0].mxu0 %v3021
        %v3490 = vpop.f32.mrb[0].mxu0
        %v3491 = vadd.f32 %v3330, %v3490
        %v3492 = vpop.f32.mrb[0].mxu0
        %v3493 = vpop.f32.mrb[0].mxu0
        %v3494 = vadd.f32 %v3333, %v3493
        %v3495 = vpop.f32.mrb[0].mxu0
        %3496 = vmatprep.mubr.bf16.mxu0 0
        %3497 = vmatmul.mubr.bf16.gmra.mrb[0].mxu0 %v3024
        %v3498 = vpop.f32.mrb[0].mxu0
        %v3499 = vadd.f32 %v3338, %v3498
        %v3500 = vpop.f32.mrb[0].mxu0
        %v3501 = vpop.f32.mrb[0].mxu0
        %v3502 = vadd.f32 %v3341, %v3501
        %v3503 = vpop.f32.mrb[0].mxu0
        %3504 = vmatprep.mubr.bf16.mxu0 0
        %3505 = vmatmul.mubr.bf16.gmra.mrb[0].mxu0 %v3027
        %v3506 = vpop.f32.mrb[0].mxu0
        %v3507 = vadd.f32 %v3346, %v3506
        %v3508 = vpop.f32.mrb[0].mxu0
        %v3509 = vpop.f32.mrb[0].mxu0
        %v3510 = vadd.f32 %v3349, %v3509
        %v3511 = vpop.f32.mrb[0].mxu0
        %3512 = vmatprep.mubr.bf16.mxu0 0
        %3513 = vmatmul.mubr.bf16.gmra.mrb[0].mxu0 %v3030
        %v3514 = vpop.f32.mrb[0].mxu0
        %v3515 = vadd.f32 %v3354, %v3514
        %v3516 = vpop.f32.mrb[0].mxu0
        %v3517 = vpop.f32.mrb[0].mxu0
        %v3518 = vadd.f32 %v3357, %v3517
        %v3519 = vpop.f32.mrb[0].mxu0
        %3520 = vmatprep.mubr.bf16.mxu0 0
        %3521 = vmatmul.mubr.bf16.gmra.mrb[0].mxu0 %v3033
        %v3522 = vpop.f32.mrb[0].mxu0
        %v3523 = vadd.f32 %v3362, %v3522
        %v3524 = vpop.f32.mrb[0].mxu0
        %v3525 = vpop.f32.mrb[0].mxu0
        %v3526 = vadd.f32 %v3365, %v3525
        %v3527 = vpop.f32.mrb[0].mxu0
        %3528 = vmatprep.mubr.bf16.mxu0 0
        %3529 = vmatmul.mubr.bf16.gmra.mrb[0].mxu0 %v3036
        %v3530 = vpop.f32.mrb[0].mxu0
        %v3531 = vadd.f32 %v3370, %v3530
        %v3532 = vpop.f32.mrb[0].mxu0
        %v3533 = vpop.f32.mrb[0].mxu0
        %v3534 = vadd.f32 %v3373, %v3533
        %v3535 = vpop.f32.mrb[0].mxu0
        %3536 = vmatprep.mubr.bf16.mxu0 0
        %3537 = vmatmul.mubr.bf16.gmra.mrb[0].mxu0 %v3039
        %v3538 = vpop.f32.mrb[0].mxu0
        %v3539 = vadd.f32 %v3378, %v3538
        %v3540 = vpop.f32.mrb[0].mxu0
        %v3541 = vpop.f32.mrb[0].mxu0
        %v3542 = vadd.f32 %v3381, %v3541
        %v3543 = vpop.f32.mrb[0].mxu0
        %3544 = vmatprep.mubr.bf16.mxu0 0
        %3545 = vmatmul.mubr.bf16.gmra.mrb[0].mxu0 %v3042
        %v3546 = vpop.f32.mrb[0].mxu0
        %v3547 = vadd.f32 %v3386, %v3546
        %v3548 = vpop.f32.mrb[0].mxu0
        %v3549 = vpop.f32.mrb[0].mxu0
        %v3550 = vadd.f32 %v3389, %v3549
        %v3551 = vpop.f32.mrb[0].mxu0
        %3552 = vmatprep.mubr.bf16.mxu0 0
        %3553 = vmatmul.mubr.bf16.gmra.mrb[0].mxu0 %v3045
        %v3554 = vpop.f32.mrb[0].mxu0
        %v3555 = vadd.f32 %v3394, %v3554
        %v3556 = vpop.f32.mrb[0].mxu0
        %v3557 = vpop.f32.mrb[0].mxu0
        %v3558 = vadd.f32 %v3397, %v3557
        %v3559 = vpop.f32.mrb[0].mxu0
        %3560 = vdwg.mxu0
        %v3609 = vunpack.c.l.b16 %v2950
        %v3610 = vunpack.c.l.b16 %v2951
        %v3611 = vunpack.c.l.b16 %v2952
        %v3612 = vunpack.c.l.b16 %v2953
        %v3613 = vunpack.c.l.b16 %v2954
        %v3614 = vunpack.c.l.b16 %v2955
        %v3615 = vunpack.c.l.b16 %v2956
        %v3616 = vunpack.c.l.b16 %v2957
        %v3617 = vunpack.c.l.b16 %v2958
        %v3618 = vunpack.c.l.b16 %v2959
        %v3619 = vunpack.c.l.b16 %v2960
        %v3620 = vunpack.c.l.b16 %v2961
        %v3621 = vunpack.c.l.b16 %v2962
        %v3622 = vunpack.c.l.b16 %v2963
        %v3623 = vunpack.c.l.b16 %v2964
        %v3624 = vunpack.c.l.b16 %v2965
        %v3625 = vunpack.c.l.b16 %v2966
        %v3626 = vunpack.c.l.b16 %v2967
        %v3627 = vunpack.c.l.b16 %v2968
        %v3628 = vunpack.c.l.b16 %v2969
        %v3629 = vunpack.c.l.b16 %v2970
        %v3630 = vunpack.c.l.b16 %v2971
        %v3631 = vunpack.c.l.b16 %v2972
        %v3632 = vunpack.c.l.b16 %v2973
        %v3633 = vunpack.c.l.b16 %v2974
        %v3634 = vunpack.c.l.b16 %v2975
        %v3635 = vunpack.c.l.b16 %v2976
        %v3636 = vunpack.c.l.b16 %v2977
        %v3637 = vunpack.c.l.b16 %v2978
        %v3638 = vunpack.c.l.b16 %v2979
        %v3639 = vunpack.c.l.b16 %v2980
        %v3640 = vunpack.c.l.b16 %v2981
        %v3641 = vunpack.c.l.b16 %v2982
        %v3642 = vunpack.c.l.b16 %v2983
        %v3643 = vunpack.c.l.b16 %v2984
        %v3644 = vunpack.c.l.b16 %v2985
        %v3645 = vunpack.c.l.b16 %v2986
        %v3646 = vunpack.c.l.b16 %v2987
        %v3647 = vunpack.c.l.b16 %v2988
        %v3648 = vunpack.c.l.b16 %v2989
        %v3649 = vunpack.c.l.b16 %v2990
        %v3650 = vunpack.c.l.b16 %v2991
        %v3651 = vunpack.c.l.b16 %v2992
        %v3652 = vunpack.c.l.b16 %v2993
        %v3653 = vunpack.c.l.b16 %v2994
        %v3654 = vunpack.c.l.b16 %v2995
        %v3655 = vunpack.c.l.b16 %v2996
        %v3656 = vunpack.c.l.b16 %v2997
        %v3657 = vpack.c.b16 %v3610, %v3609
        %v3658 = vpack.c.b16 %v3612, %v3611
        %v3659 = vpack.c.b16 %v3614, %v3613
        %v3660 = vpack.c.b16 %v3616, %v3615
        %v3661 = vpack.c.b16 %v3618, %v3617
        %v3662 = vpack.c.b16 %v3620, %v3619
        %v3663 = vpack.c.b16 %v3622, %v3621
        %v3664 = vpack.c.b16 %v3624, %v3623
        %v3665 = vpack.c.b16 %v3626, %v3625
        %v3666 = vpack.c.b16 %v3628, %v3627
        %v3667 = vpack.c.b16 %v3630, %v3629
        %v3668 = vpack.c.b16 %v3632, %v3631
        %v3669 = vpack.c.b16 %v3634, %v3633
        %v3670 = vpack.c.b16 %v3636, %v3635
        %v3671 = vpack.c.b16 %v3638, %v3637
        %v3672 = vpack.c.b16 %v3640, %v3639
        %v3673 = vpack.c.b16 %v3642, %v3641
        %v3674 = vpack.c.b16 %v3644, %v3643
        %v3675 = vpack.c.b16 %v3646, %v3645
        %v3676 = vpack.c.b16 %v3648, %v3647
        %v3677 = vpack.c.b16 %v3650, %v3649
        %v3678 = vpack.c.b16 %v3652, %v3651
        %v3679 = vpack.c.b16 %v3654, %v3653
        %v3680 = vpack.c.b16 %v3656, %v3655
        %3705 = vmatprep.subr.bf16.mxu0 0
        %3706 = vmatpush1.bf16.msra.mxu0 %v3657
        %3707 = vmatprep.subr.bf16.mxu0 0
        %3708 = vmatpush1.bf16.msra.mxu0 %v3658
        %3709 = vmatprep.subr.bf16.mxu0 0
        %3710 = vmatpush1.bf16.msra.mxu0 %v3659
        %3711 = vmatprep.subr.bf16.mxu0 0
        %3712 = vmatpush1.bf16.msra.mxu0 %v3660
        %3713 = vmatprep.subr.bf16.mxu0 0
        %3714 = vmatpush1.bf16.msra.mxu0 %v3661
        %3715 = vmatprep.subr.bf16.mxu0 0
        %3716 = vmatpush1.bf16.msra.mxu0 %v3662
        %3717 = vmatprep.subr.bf16.mxu0 0
        %3718 = vmatpush1.bf16.msra.mxu0 %v3663
        %3719 = vmatprep.subr.bf16.mxu0 0
        %3720 = vmatpush1.bf16.msra.mxu0 %v3664
        %3721 = vmatprep.subr.bf16.mxu0 0
        %3722 = vmatpush1.bf16.msra.mxu0 %v3665
        %3723 = vmatprep.subr.bf16.mxu0 0
        %3724 = vmatpush1.bf16.msra.mxu0 %v3666
        %3725 = vmatprep.subr.bf16.mxu0 0
        %3726 = vmatpush1.bf16.msra.mxu0 %v3667
        %3727 = vmatprep.subr.bf16.mxu0 0
        %3728 = vmatpush1.bf16.msra.mxu0 %v3668
        %3729 = vmatprep.subr.bf16.mxu0 0
        %3730 = vmatpush1.bf16.msra.mxu0 %v3669
        %3731 = vmatprep.subr.bf16.mxu0 0
        %3732 = vmatpush1.bf16.msra.mxu0 %v3670
        %3733 = vmatprep.subr.bf16.mxu0 0
        %3734 = vmatpush1.bf16.msra.mxu0 %v3671
        %3735 = vmatprep.subr.bf16.mxu0 0
        %3736 = vmatpush1.bf16.msra.mxu0 %v3672
        %3737 = vmatprep.mubr.bf16.mxu0 %v2903
        %3738 = vmatmul.mubr.bf16.gmra.mrb[0].mxu0 %v2902
        %v3739 = vpop.f32.mrb[0].mxu0
        %v3740 = vadd.f32 %v3435, %v3739
        %v3741 = vpop.f32.mrb[0].mxu0
        %v3742 = vpop.f32.mrb[0].mxu0
        %v3743 = vadd.f32 %v3438, %v3742
        %v3744 = vpop.f32.mrb[0].mxu0
        %3745 = vmatprep.mubr.bf16.mxu0 %v2906
        %3746 = vmatmul.mubr.bf16.gmra.mrb[0].mxu0 %v2905
        %v3747 = vpop.f32.mrb[0].mxu0
        %v3748 = vadd.f32 %v3443, %v3747
        %v3749 = vpop.f32.mrb[0].mxu0
        %v3750 = vpop.f32.mrb[0].mxu0
        %v3751 = vadd.f32 %v3446, %v3750
        %v3752 = vpop.f32.mrb[0].mxu0
        %3753 = vmatprep.mubr.bf16.mxu0 %v2909
        %3754 = vmatmul.mubr.bf16.gmra.mrb[0].mxu0 %v2908
        %v3755 = vpop.f32.mrb[0].mxu0
        %v3756 = vadd.f32 %v3451, %v3755
        %v3757 = vpop.f32.mrb[0].mxu0
        %v3758 = vpop.f32.mrb[0].mxu0
        %v3759 = vadd.f32 %v3454, %v3758
        %v3760 = vpop.f32.mrb[0].mxu0
        %3761 = vmatprep.mubr.bf16.mxu0 %v2912
        %3762 = vmatmul.mubr.bf16.gmra.mrb[0].mxu0 %v2911
        %v3763 = vpop.f32.mrb[0].mxu0
        %v3764 = vadd.f32 %v3459, %v3763
        %v3765 = vpop.f32.mrb[0].mxu0
        %v3766 = vpop.f32.mrb[0].mxu0
        %v3767 = vadd.f32 %v3462, %v3766
        %v3768 = vpop.f32.mrb[0].mxu0
        %3769 = vmatprep.mubr.bf16.mxu0 %v2915
        %3770 = vmatmul.mubr.bf16.gmra.mrb[0].mxu0 %v2914
        %v3771 = vpop.f32.mrb[0].mxu0
        %v3772 = vadd.f32 %v3467, %v3771
        %v3773 = vpop.f32.mrb[0].mxu0
        %v3774 = vpop.f32.mrb[0].mxu0
        %v3775 = vadd.f32 %v3470, %v3774
        %v3776 = vpop.f32.mrb[0].mxu0
        %3777 = vmatprep.mubr.bf16.mxu0 %v2918
        %3778 = vmatmul.mubr.bf16.gmra.mrb[0].mxu0 %v2917
        %v3779 = vpop.f32.mrb[0].mxu0
        %v3780 = vadd.f32 %v3475, %v3779
        %v3781 = vpop.f32.mrb[0].mxu0
        %v3782 = vpop.f32.mrb[0].mxu0
        %v3783 = vadd.f32 %v3478, %v3782
        %v3784 = vpop.f32.mrb[0].mxu0
        %3785 = vmatprep.mubr.bf16.mxu0 %v2921
        %3786 = vmatmul.mubr.bf16.gmra.mrb[0].mxu0 %v2920
        %v3787 = vpop.f32.mrb[0].mxu0
        %v3788 = vadd.f32 %v3483, %v3787
        %v3789 = vpop.f32.mrb[0].mxu0
        %v3790 = vpop.f32.mrb[0].mxu0
        %v3791 = vadd.f32 %v3486, %v3790
        %v3792 = vpop.f32.mrb[0].mxu0
        %3793 = vmatprep.mubr.bf16.mxu0 %v2924
        %3794 = vmatmul.mubr.bf16.gmra.mrb[0].mxu0 %v2923
        %v3795 = vpop.f32.mrb[0].mxu0
        %v3796 = vadd.f32 %v3491, %v3795
        %v3797 = vpop.f32.mrb[0].mxu0
        %v3798 = vpop.f32.mrb[0].mxu0
        %v3799 = vadd.f32 %v3494, %v3798
        %v3800 = vpop.f32.mrb[0].mxu0
        %3801 = vmatprep.mubr.bf16.mxu0 %v2927
        %3802 = vmatmul.mubr.bf16.gmra.mrb[0].mxu0 %v2926
        %v3803 = vpop.f32.mrb[0].mxu0
        %v3804 = vadd.f32 %v3499, %v3803
        %v3805 = vpop.f32.mrb[0].mxu0
        %v3806 = vpop.f32.mrb[0].mxu0
        %v3807 = vadd.f32 %v3502, %v3806
        %v3808 = vpop.f32.mrb[0].mxu0
        %3809 = vmatprep.mubr.bf16.mxu0 %v2930
        %3810 = vmatmul.mubr.bf16.gmra.mrb[0].mxu0 %v2929
        %v3811 = vpop.f32.mrb[0].mxu0
        %v3812 = vadd.f32 %v3507, %v3811
        %v3813 = vpop.f32.mrb[0].mxu0
        %v3814 = vpop.f32.mrb[0].mxu0
        %v3815 = vadd.f32 %v3510, %v3814
        %v3816 = vpop.f32.mrb[0].mxu0
        %3817 = vmatprep.mubr.bf16.mxu0 %v2933
        %3818 = vmatmul.mubr.bf16.gmra.mrb[0].mxu0 %v2932
        %v3819 = vpop.f32.mrb[0].mxu0
        %v3820 = vadd.f32 %v3515, %v3819
        %v3821 = vpop.f32.mrb[0].mxu0
        %v3822 = vpop.f32.mrb[0].mxu0
        %v3823 = vadd.f32 %v3518, %v3822
        %v3824 = vpop.f32.mrb[0].mxu0
        %3825 = vmatprep.mubr.bf16.mxu0 %v2936
        %3826 = vmatmul.mubr.bf16.gmra.mrb[0].mxu0 %v2935
        %v3827 = vpop.f32.mrb[0].mxu0
        %v3828 = vadd.f32 %v3523, %v3827
        %v3829 = vpop.f32.mrb[0].mxu0
        %v3830 = vpop.f32.mrb[0].mxu0
        %v3831 = vadd.f32 %v3526, %v3830
        %v3832 = vpop.f32.mrb[0].mxu0
        %3833 = vmatprep.mubr.bf16.mxu0 %v2939
        %3834 = vmatmul.mubr.bf16.gmra.mrb[0].mxu0 %v2938
        %v3835 = vpop.f32.mrb[0].mxu0
        %v3836 = vadd.f32 %v3531, %v3835
        %v3837 = vpop.f32.mrb[0].mxu0
        %v3838 = vpop.f32.mrb[0].mxu0
        %v3839 = vadd.f32 %v3534, %v3838
        %v3840 = vpop.f32.mrb[0].mxu0
        %3841 = vmatprep.mubr.bf16.mxu0 %v2942
        %3842 = vmatmul.mubr.bf16.gmra.mrb[0].mxu0 %v2941
        %v3843 = vpop.f32.mrb[0].mxu0
        %v3844 = vadd.f32 %v3539, %v3843
        %v3845 = vpop.f32.mrb[0].mxu0
        %v3846 = vpop.f32.mrb[0].mxu0
        %v3847 = vadd.f32 %v3542, %v3846
        %v3848 = vpop.f32.mrb[0].mxu0
        %3849 = vmatprep.mubr.bf16.mxu0 %v2945
        %3850 = vmatmul.mubr.bf16.gmra.mrb[0].mxu0 %v2944
        %v3851 = vpop.f32.mrb[0].mxu0
        %v3852 = vadd.f32 %v3547, %v3851
        %v3853 = vpop.f32.mrb[0].mxu0
        %v3854 = vpop.f32.mrb[0].mxu0
        %v3855 = vadd.f32 %v3550, %v3854
        %v3856 = vpop.f32.mrb[0].mxu0
        %3857 = vmatprep.mubr.bf16.mxu0 %v2948
        %3858 = vmatmul.mubr.bf16.gmra.mrb[0].mxu0 %v2947
        %v3859 = vpop.f32.mrb[0].mxu0
        %v3860 = vadd.f32 %v3555, %v3859
        %v3861 = vpop.f32.mrb[0].mxu0
        %v3862 = vpop.f32.mrb[0].mxu0
        %v3863 = vadd.f32 %v3558, %v3862
        %v3864 = vpop.f32.mrb[0].mxu0
        %3865 = vdwg.mxu0
        %3866 = vmatprep.subr.bf16.mxu0 0
        %3867 = vmatpush1.bf16.msra.mxu0 %v3673
        %3868 = vmatprep.subr.bf16.mxu0 0
        %3869 = vmatpush1.bf16.msra.mxu0 %v3674
        %3870 = vmatprep.subr.bf16.mxu0 0
        %3871 = vmatpush1.bf16.msra.mxu0 %v3675
        %3872 = vmatprep.subr.bf16.mxu0 0
        %3873 = vmatpush1.bf16.msra.mxu0 %v3676
        %3874 = vmatprep.subr.bf16.mxu0 0
        %3875 = vmatpush1.bf16.msra.mxu0 %v3677
        %3876 = vmatprep.subr.bf16.mxu0 0
        %3877 = vmatpush1.bf16.msra.mxu0 %v3678
        %3878 = vmatprep.subr.bf16.mxu0 0
        %3879 = vmatpush1.bf16.msra.mxu0 %v3679
        %3880 = vmatprep.subr.bf16.mxu0 0
        %3881 = vmatpush1.bf16.msra.mxu0 %v3680
        %3882 = vmatprep.subr.bf16.mxu0 0
        %3883 = vmatpush1.bf16.msra.mxu0 0
        %3884 = vmatprep.subr.bf16.mxu0 0
        %3885 = vmatpush1.bf16.msra.mxu0 0
        %3886 = vmatprep.subr.bf16.mxu0 0
        %3887 = vmatpush1.bf16.msra.mxu0 0
        %3888 = vmatprep.subr.bf16.mxu0 0
        %3889 = vmatpush1.bf16.msra.mxu0 0
        %3890 = vmatprep.subr.bf16.mxu0 0
        %3891 = vmatpush1.bf16.msra.mxu0 0
        %3892 = vmatprep.subr.bf16.mxu0 0
        %3893 = vmatpush1.bf16.msra.mxu0 0
        %3894 = vmatprep.subr.bf16.mxu0 0
        %3895 = vmatpush1.bf16.msra.mxu0 0
        %3896 = vmatprep.subr.bf16.mxu0 0
        %3897 = vmatpush1.bf16.msra.mxu0 0
        %3898 = vmatprep.mubr.bf16.mxu0 0
        %3899 = vmatmul.mubr.bf16.gmra.mrb[0].mxu0 %v2904
        %v3900 = vpop.f32.mrb[0].mxu0
        %v3901 = vadd.f32 %v3740, %v3900
        %v3902 = vpop.f32.mrb[0].mxu0
        %v3903 = vpop.f32.mrb[0].mxu0
        %v3904 = vadd.f32 %v3743, %v3903
        %v3905 = vpop.f32.mrb[0].mxu0
        %3906 = vmatprep.mubr.bf16.mxu0 0
        %3907 = vmatmul.mubr.bf16.gmra.mrb[0].mxu0 %v2907
        %v3908 = vpop.f32.mrb[0].mxu0
        %v3909 = vadd.f32 %v3748, %v3908
        %v3910 = vpop.f32.mrb[0].mxu0
        %v3911 = vpop.f32.mrb[0].mxu0
        %v3912 = vadd.f32 %v3751, %v3911
        %v3913 = vpop.f32.mrb[0].mxu0
        %3914 = vmatprep.mubr.bf16.mxu0 0
        %3915 = vmatmul.mubr.bf16.gmra.mrb[0].mxu0 %v2910
        %v3916 = vpop.f32.mrb[0].mxu0
        %v3917 = vadd.f32 %v3756, %v3916
        %v3918 = vpop.f32.mrb[0].mxu0
        %v3919 = vpop.f32.mrb[0].mxu0
        %v3920 = vadd.f32 %v3759, %v3919
        %v3921 = vpop.f32.mrb[0].mxu0
        %3922 = vmatprep.mubr.bf16.mxu0 0
        %3923 = vmatmul.mubr.bf16.gmra.mrb[0].mxu0 %v2913
        %v3924 = vpop.f32.mrb[0].mxu0
        %v3925 = vadd.f32 %v3764, %v3924
        %v3926 = vpop.f32.mrb[0].mxu0
        %v3927 = vpop.f32.mrb[0].mxu0
        %v3928 = vadd.f32 %v3767, %v3927
        %v3929 = vpop.f32.mrb[0].mxu0
        %3930 = vmatprep.mubr.bf16.mxu0 0
        %3931 = vmatmul.mubr.bf16.gmra.mrb[0].mxu0 %v2916
        %v3932 = vpop.f32.mrb[0].mxu0
        %v3933 = vadd.f32 %v3772, %v3932
        %v3934 = vpop.f32.mrb[0].mxu0
        %v3935 = vpop.f32.mrb[0].mxu0
        %v3936 = vadd.f32 %v3775, %v3935
        %v3937 = vpop.f32.mrb[0].mxu0
        %3938 = vmatprep.mubr.bf16.mxu0 0
        %3939 = vmatmul.mubr.bf16.gmra.mrb[0].mxu0 %v2919
        %v3940 = vpop.f32.mrb[0].mxu0
        %v3941 = vadd.f32 %v3780, %v3940
        %v3942 = vpop.f32.mrb[0].mxu0
        %v3943 = vpop.f32.mrb[0].mxu0
        %v3944 = vadd.f32 %v3783, %v3943
        %v3945 = vpop.f32.mrb[0].mxu0
        %3946 = vmatprep.mubr.bf16.mxu0 0
        %3947 = vmatmul.mubr.bf16.gmra.mrb[0].mxu0 %v2922
        %v3948 = vpop.f32.mrb[0].mxu0
        %v3949 = vadd.f32 %v3788, %v3948
        %v3950 = vpop.f32.mrb[0].mxu0
        %v3951 = vpop.f32.mrb[0].mxu0
        %v3952 = vadd.f32 %v3791, %v3951
        %v3953 = vpop.f32.mrb[0].mxu0
        %3954 = vmatprep.mubr.bf16.mxu0 0
        %3955 = vmatmul.mubr.bf16.gmra.mrb[0].mxu0 %v2925
        %v3956 = vpop.f32.mrb[0].mxu0
        %v3957 = vadd.f32 %v3796, %v3956
        %v3958 = vpop.f32.mrb[0].mxu0
        %v3959 = vpop.f32.mrb[0].mxu0
        %v3960 = vadd.f32 %v3799, %v3959
        %v3961 = vpop.f32.mrb[0].mxu0
        %3962 = vmatprep.mubr.bf16.mxu0 0
        %3963 = vmatmul.mubr.bf16.gmra.mrb[0].mxu0 %v2928
        %v3964 = vpop.f32.mrb[0].mxu0
        %v3965 = vadd.f32 %v3804, %v3964
        %v3966 = vpop.f32.mrb[0].mxu0
        %v3967 = vpop.f32.mrb[0].mxu0
        %v3968 = vadd.f32 %v3807, %v3967
        %v3969 = vpop.f32.mrb[0].mxu0
        %3970 = vmatprep.mubr.bf16.mxu0 0
        %3971 = vmatmul.mubr.bf16.gmra.mrb[0].mxu0 %v2931
        %v3972 = vpop.f32.mrb[0].mxu0
        %v3973 = vadd.f32 %v3812, %v3972
        %v3974 = vpop.f32.mrb[0].mxu0
        %v3975 = vpop.f32.mrb[0].mxu0
        %v3976 = vadd.f32 %v3815, %v3975
        %v3977 = vpop.f32.mrb[0].mxu0
        %3978 = vmatprep.mubr.bf16.mxu0 0
        %3979 = vmatmul.mubr.bf16.gmra.mrb[0].mxu0 %v2934
        %v3980 = vpop.f32.mrb[0].mxu0
        %v3981 = vadd.f32 %v3820, %v3980
        %v3982 = vpop.f32.mrb[0].mxu0
        %v3983 = vpop.f32.mrb[0].mxu0
        %v3984 = vadd.f32 %v3823, %v3983
        %v3985 = vpop.f32.mrb[0].mxu0
        %3986 = vmatprep.mubr.bf16.mxu0 0
        %3987 = vmatmul.mubr.bf16.gmra.mrb[0].mxu0 %v2937
        %v3988 = vpop.f32.mrb[0].mxu0
        %v3989 = vadd.f32 %v3828, %v3988
        %v3990 = vpop.f32.mrb[0].mxu0
        %v3991 = vpop.f32.mrb[0].mxu0
        %v3992 = vadd.f32 %v3831, %v3991
        %v3993 = vpop.f32.mrb[0].mxu0
        %3994 = vmatprep.mubr.bf16.mxu0 0
        %3995 = vmatmul.mubr.bf16.gmra.mrb[0].mxu0 %v2940
        %v3996 = vpop.f32.mrb[0].mxu0
        %v3997 = vadd.f32 %v3836, %v3996
        %v3998 = vpop.f32.mrb[0].mxu0
        %v3999 = vpop.f32.mrb[0].mxu0
        %v4000 = vadd.f32 %v3839, %v3999
        %v4001 = vpop.f32.mrb[0].mxu0
        %4002 = vmatprep.mubr.bf16.mxu0 0
        %4003 = vmatmul.mubr.bf16.gmra.mrb[0].mxu0 %v2943
        %v4004 = vpop.f32.mrb[0].mxu0
        %v4005 = vadd.f32 %v3844, %v4004
        %v4006 = vpop.f32.mrb[0].mxu0
        %v4007 = vpop.f32.mrb[0].mxu0
        %v4008 = vadd.f32 %v3847, %v4007
        %v4009 = vpop.f32.mrb[0].mxu0
        %4010 = vmatprep.mubr.bf16.mxu0 0
        %4011 = vmatmul.mubr.bf16.gmra.mrb[0].mxu0 %v2946
        %v4012 = vpop.f32.mrb[0].mxu0
        %v4013 = vadd.f32 %v3852, %v4012
        %v4014 = vpop.f32.mrb[0].mxu0
        %v4015 = vpop.f32.mrb[0].mxu0
        %v4016 = vadd.f32 %v3855, %v4015
        %v4017 = vpop.f32.mrb[0].mxu0
        %4018 = vmatprep.mubr.bf16.mxu0 0
        %4019 = vmatmul.mubr.bf16.gmra.mrb[0].mxu0 %v2949
        %v4020 = vpop.f32.mrb[0].mxu0
        %v4021 = vadd.f32 %v3860, %v4020
        %v4022 = vpop.f32.mrb[0].mxu0
        %v4023 = vpop.f32.mrb[0].mxu0
        %v4024 = vadd.f32 %v3863, %v4023
        %v4025 = vpop.f32.mrb[0].mxu0
        %4026 = vdwg.mxu0
        %v4027 = vld [vmem:[%s1748] sm:$0xff]
        %v4028 = vld [vmem:[%s1748 + $0x8] sm:$0xff]
        %v4029 = vld [vmem:[%s1748 + $0x10] sm:$0xff]
        %v4030 = vld [vmem:[%s1748 + $0x18] sm:$0xff]
        %v4031 = vld [vmem:[%s1748 + $0x20] sm:$0xff]
        %v4032 = vld [vmem:[%s1748 + $0x28] sm:$0xff]
        %v4033 = vld [vmem:[%s1748 + $0x30] sm:$0xff]
        %v4034 = vld [vmem:[%s1748 + $0x38] sm:$0xff]
        %v4035 = vld [vmem:[%s1748 + $0x40] sm:$0xff]
        %v4036 = vld [vmem:[%s1748 + $0x48] sm:$0xff]
        %v4037 = vld [vmem:[%s1748 + $0x50] sm:$0xff]
        %v4038 = vld [vmem:[%s1748 + $0x58] sm:$0xff]
        %v4039 = vld [vmem:[%s1748 + $0x60] sm:$0xff]
        %v4040 = vld [vmem:[%s1748 + $0x68] sm:$0xff]
        %v4041 = vld [vmem:[%s1748 + $0x70] sm:$0xff]
        %v4042 = vld [vmem:[%s1748 + $0x78] sm:$0xff]
        %v4043 = vld [vmem:[%s1748 + $0x80] sm:$0xff]
        %v4044 = vld [vmem:[%s1748 + $0x88] sm:$0xff]
        %v4045 = vld [vmem:[%s1748 + $0x90] sm:$0xff]
        %v4046 = vld [vmem:[%s1748 + $0x98] sm:$0xff]
        %v4047 = vld [vmem:[%s1748 + $0xa0] sm:$0xff]
        %v4048 = vld [vmem:[%s1748 + $0xa8] sm:$0xff]
        %v4049 = vld [vmem:[%s1748 + $0xb0] sm:$0xff]
        %v4050 = vld [vmem:[%s1748 + $0xb8] sm:$0xff]
        %v4051 = vld [vmem:[%s1748 + $0xc0] sm:$0xff]
        %v4052 = vld [vmem:[%s1748 + $0xc8] sm:$0xff]
        %v4053 = vld [vmem:[%s1748 + $0xd0] sm:$0xff]
        %v4054 = vld [vmem:[%s1748 + $0xd8] sm:$0xff]
        %v4055 = vld [vmem:[%s1748 + $0xe0] sm:$0xff]
        %v4056 = vld [vmem:[%s1748 + $0xe8] sm:$0xff]
        %v4057 = vld [vmem:[%s1748 + $0xf0] sm:$0xff]
        %v4058 = vld [vmem:[%s1748 + $0xf8] sm:$0xff]
        %v4059 = vld [vmem:[%s1748 + $0x100] sm:$0xff]
        %v4060 = vld [vmem:[%s1748 + $0x108] sm:$0xff]
        %v4061 = vld [vmem:[%s1748 + $0x110] sm:$0xff]
        %v4062 = vld [vmem:[%s1748 + $0x118] sm:$0xff]
        %v4063 = vld [vmem:[%s1748 + $0x120] sm:$0xff]
        %v4064 = vld [vmem:[%s1748 + $0x128] sm:$0xff]
        %v4065 = vld [vmem:[%s1748 + $0x130] sm:$0xff]
        %v4066 = vld [vmem:[%s1748 + $0x138] sm:$0xff]
        %v4067 = vld [vmem:[%s1748 + $0x140] sm:$0xff]
        %v4068 = vld [vmem:[%s1748 + $0x148] sm:$0xff]
        %v4069 = vld [vmem:[%s1748 + $0x150] sm:$0xff]
        %v4070 = vld [vmem:[%s1748 + $0x158] sm:$0xff]
        %v4071 = vld [vmem:[%s1748 + $0x160] sm:$0xff]
        %v4072 = vld [vmem:[%s1748 + $0x168] sm:$0xff]
        %v4073 = vld [vmem:[%s1748 + $0x170] sm:$0xff]
        %v4074 = vld [vmem:[%s1748 + $0x178] sm:$0xff]
        %s4075 = scalar_lea.vmem [#allocation8], 384
        %v4076 = vld [vmem:[%s4075] sm:$0xf]
        %v4077 = vld [vmem:[%s4075 + $0x4] sm:$0xf]
        %v4078 = vld [vmem:[%s4075 + $0x8] sm:$0xf]
        %v4079 = vld [vmem:[%s4075 + $0xc] sm:$0xf]
        %v4080 = vld [vmem:[%s4075 + $0x10] sm:$0xf]
        %v4081 = vld [vmem:[%s4075 + $0x14] sm:$0xf]
        %v4082 = vld [vmem:[%s4075 + $0x18] sm:$0xf]
        %v4083 = vld [vmem:[%s4075 + $0x1c] sm:$0xf]
        %v4084 = vld [vmem:[%s4075 + $0x20] sm:$0xf]
        %v4085 = vld [vmem:[%s4075 + $0x24] sm:$0xf]
        %v4086 = vld [vmem:[%s4075 + $0x28] sm:$0xf]
        %v4087 = vld [vmem:[%s4075 + $0x2c] sm:$0xf]
        %v4088 = vld [vmem:[%s4075 + $0x30] sm:$0xf]
        %v4089 = vld [vmem:[%s4075 + $0x34] sm:$0xf]
        %v4090 = vld [vmem:[%s4075 + $0x38] sm:$0xf]
        %v4091 = vld [vmem:[%s4075 + $0x3c] sm:$0xf]
        %v4092 = vld [vmem:[%s4075 + $0x40] sm:$0xf]
        %v4093 = vld [vmem:[%s4075 + $0x44] sm:$0xf]
        %v4094 = vld [vmem:[%s4075 + $0x48] sm:$0xf]
        %v4095 = vld [vmem:[%s4075 + $0x4c] sm:$0xf]
        %v4096 = vld [vmem:[%s4075 + $0x50] sm:$0xf]
        %v4097 = vld [vmem:[%s4075 + $0x54] sm:$0xf]
        %v4098 = vld [vmem:[%s4075 + $0x58] sm:$0xf]
        %v4099 = vld [vmem:[%s4075 + $0x5c] sm:$0xf]
        %v4100 = vld [vmem:[%s4075 + $0x60] sm:$0xf]
        %v4101 = vld [vmem:[%s4075 + $0x64] sm:$0xf]
        %v4102 = vld [vmem:[%s4075 + $0x68] sm:$0xf]
        %v4103 = vld [vmem:[%s4075 + $0x6c] sm:$0xf]
        %v4104 = vld [vmem:[%s4075 + $0x70] sm:$0xf]
        %v4105 = vld [vmem:[%s4075 + $0x74] sm:$0xf]
        %v4106 = vld [vmem:[%s4075 + $0x78] sm:$0xf]
        %v4107 = vld [vmem:[%s4075 + $0x7c] sm:$0xf]
        %v4108 = vld [vmem:[%s4075 + $0x80] sm:$0xf]
        %v4109 = vld [vmem:[%s4075 + $0x84] sm:$0xf]
        %v4110 = vld [vmem:[%s4075 + $0x88] sm:$0xf]
        %v4111 = vld [vmem:[%s4075 + $0x8c] sm:$0xf]
        %v4112 = vld [vmem:[%s4075 + $0x90] sm:$0xf]
        %v4113 = vld [vmem:[%s4075 + $0x94] sm:$0xf]
        %v4114 = vld [vmem:[%s4075 + $0x98] sm:$0xf]
        %v4115 = vld [vmem:[%s4075 + $0x9c] sm:$0xf]
        %v4116 = vld [vmem:[%s4075 + $0xa0] sm:$0xf]
        %v4117 = vld [vmem:[%s4075 + $0xa4] sm:$0xf]
        %v4118 = vld [vmem:[%s4075 + $0xa8] sm:$0xf]
        %v4119 = vld [vmem:[%s4075 + $0xac] sm:$0xf]
        %v4120 = vld [vmem:[%s4075 + $0xb0] sm:$0xf]
        %v4121 = vld [vmem:[%s4075 + $0xb4] sm:$0xf]
        %v4122 = vld [vmem:[%s4075 + $0xb8] sm:$0xf]
        %v4123 = vld [vmem:[%s4075 + $0xbc] sm:$0xf]
        %v4172 = vunpack.c.l.b16 %v4076
        %v4173 = vunpack.c.l.b16 %v4077
        %v4174 = vunpack.c.l.b16 %v4078
        %v4175 = vunpack.c.l.b16 %v4079
        %v4176 = vunpack.c.l.b16 %v4080
        %v4177 = vunpack.c.l.b16 %v4081
        %v4178 = vunpack.c.l.b16 %v4082
        %v4179 = vunpack.c.l.b16 %v4083
        %v4180 = vunpack.c.l.b16 %v4084
        %v4181 = vunpack.c.l.b16 %v4085
        %v4182 = vunpack.c.l.b16 %v4086
        %v4183 = vunpack.c.l.b16 %v4087
        %v4184 = vunpack.c.l.b16 %v4088
        %v4185 = vunpack.c.l.b16 %v4089
        %v4186 = vunpack.c.l.b16 %v4090
        %v4187 = vunpack.c.l.b16 %v4091
        %v4188 = vunpack.c.l.b16 %v4092
        %v4189 = vunpack.c.l.b16 %v4093
        %v4190 = vunpack.c.l.b16 %v4094
        %v4191 = vunpack.c.l.b16 %v4095
        %v4192 = vunpack.c.l.b16 %v4096
        %v4193 = vunpack.c.l.b16 %v4097
        %v4194 = vunpack.c.l.b16 %v4098
        %v4195 = vunpack.c.l.b16 %v4099
        %v4196 = vunpack.c.l.b16 %v4100
        %v4197 = vunpack.c.l.b16 %v4101
        %v4198 = vunpack.c.l.b16 %v4102
        %v4199 = vunpack.c.l.b16 %v4103
        %v4200 = vunpack.c.l.b16 %v4104
        %v4201 = vunpack.c.l.b16 %v4105
        %v4202 = vunpack.c.l.b16 %v4106
        %v4203 = vunpack.c.l.b16 %v4107
        %v4204 = vunpack.c.l.b16 %v4108
        %v4205 = vunpack.c.l.b16 %v4109
        %v4206 = vunpack.c.l.b16 %v4110
        %v4207 = vunpack.c.l.b16 %v4111
        %v4208 = vunpack.c.l.b16 %v4112
        %v4209 = vunpack.c.l.b16 %v4113
        %v4210 = vunpack.c.l.b16 %v4114
        %v4211 = vunpack.c.l.b16 %v4115
        %v4212 = vunpack.c.l.b16 %v4116
        %v4213 = vunpack.c.l.b16 %v4117
        %v4214 = vunpack.c.l.b16 %v4118
        %v4215 = vunpack.c.l.b16 %v4119
        %v4216 = vunpack.c.l.b16 %v4120
        %v4217 = vunpack.c.l.b16 %v4121
        %v4218 = vunpack.c.l.b16 %v4122
        %v4219 = vunpack.c.l.b16 %v4123
        %v4220 = vpack.c.b16 %v4173, %v4172
        %v4221 = vpack.c.b16 %v4175, %v4174
        %v4222 = vpack.c.b16 %v4177, %v4176
        %v4223 = vpack.c.b16 %v4179, %v4178
        %v4224 = vpack.c.b16 %v4181, %v4180
        %v4225 = vpack.c.b16 %v4183, %v4182
        %v4226 = vpack.c.b16 %v4185, %v4184
        %v4227 = vpack.c.b16 %v4187, %v4186
        %v4228 = vpack.c.b16 %v4189, %v4188
        %v4229 = vpack.c.b16 %v4191, %v4190
        %v4230 = vpack.c.b16 %v4193, %v4192
        %v4231 = vpack.c.b16 %v4195, %v4194
        %v4232 = vpack.c.b16 %v4197, %v4196
        %v4233 = vpack.c.b16 %v4199, %v4198
        %v4234 = vpack.c.b16 %v4201, %v4200
        %v4235 = vpack.c.b16 %v4203, %v4202
        %v4236 = vpack.c.b16 %v4205, %v4204
        %v4237 = vpack.c.b16 %v4207, %v4206
        %v4238 = vpack.c.b16 %v4209, %v4208
        %v4239 = vpack.c.b16 %v4211, %v4210
        %v4240 = vpack.c.b16 %v4213, %v4212
        %v4241 = vpack.c.b16 %v4215, %v4214
        %v4242 = vpack.c.b16 %v4217, %v4216
        %v4243 = vpack.c.b16 %v4219, %v4218
        %4268 = vmatprep.subr.bf16.mxu0 0
        %4269 = vmatpush1.bf16.msra.mxu0 %v4220
        %4270 = vmatprep.subr.bf16.mxu0 0
        %4271 = vmatpush1.bf16.msra.mxu0 %v4221
        %4272 = vmatprep.subr.bf16.mxu0 0
        %4273 = vmatpush1.bf16.msra.mxu0 %v4222
        %4274 = vmatprep.subr.bf16.mxu0 0
        %4275 = vmatpush1.bf16.msra.mxu0 %v4223
        %4276 = vmatprep.subr.bf16.mxu0 0
        %4277 = vmatpush1.bf16.msra.mxu0 %v4224
        %4278 = vmatprep.subr.bf16.mxu0 0
        %4279 = vmatpush1.bf16.msra.mxu0 %v4225
        %4280 = vmatprep.subr.bf16.mxu0 0
        %4281 = vmatpush1.bf16.msra.mxu0 %v4226
        %4282 = vmatprep.subr.bf16.mxu0 0
        %4283 = vmatpush1.bf16.msra.mxu0 %v4227
        %4284 = vmatprep.subr.bf16.mxu0 0
        %4285 = vmatpush1.bf16.msra.mxu0 %v4228
        %4286 = vmatprep.subr.bf16.mxu0 0
        %4287 = vmatpush1.bf16.msra.mxu0 %v4229
        %4288 = vmatprep.subr.bf16.mxu0 0
        %4289 = vmatpush1.bf16.msra.mxu0 %v4230
        %4290 = vmatprep.subr.bf16.mxu0 0
        %4291 = vmatpush1.bf16.msra.mxu0 %v4231
        %4292 = vmatprep.subr.bf16.mxu0 0
        %4293 = vmatpush1.bf16.msra.mxu0 %v4232
        %4294 = vmatprep.subr.bf16.mxu0 0
        %4295 = vmatpush1.bf16.msra.mxu0 %v4233
        %4296 = vmatprep.subr.bf16.mxu0 0
        %4297 = vmatpush1.bf16.msra.mxu0 %v4234
        %4298 = vmatprep.subr.bf16.mxu0 0
        %4299 = vmatpush1.bf16.msra.mxu0 %v4235
        %4300 = vmatprep.mubr.bf16.mxu0 %v4028
        %4301 = vmatmul.mubr.bf16.gmra.mrb[0].mxu0 %v4027
        %v4302 = vpop.f32.mrb[0].mxu0
        %v4303 = vadd.f32 0.0, %v4302
        %v4304 = vpop.f32.mrb[0].mxu0
        %v4305 = vpop.f32.mrb[0].mxu0
        %v4306 = vadd.f32 0.0, %v4305
        %v4307 = vpop.f32.mrb[0].mxu0
        %4308 = vmatprep.mubr.bf16.mxu0 %v4031
        %4309 = vmatmul.mubr.bf16.gmra.mrb[0].mxu0 %v4030
        %v4310 = vpop.f32.mrb[0].mxu0
        %v4311 = vadd.f32 0.0, %v4310
        %v4312 = vpop.f32.mrb[0].mxu0
        %v4313 = vpop.f32.mrb[0].mxu0
        %v4314 = vadd.f32 0.0, %v4313
        %v4315 = vpop.f32.mrb[0].mxu0
        %4316 = vmatprep.mubr.bf16.mxu0 %v4034
        %4317 = vmatmul.mubr.bf16.gmra.mrb[0].mxu0 %v4033
        %v4318 = vpop.f32.mrb[0].mxu0
        %v4319 = vadd.f32 0.0, %v4318
        %v4320 = vpop.f32.mrb[0].mxu0
        %v4321 = vpop.f32.mrb[0].mxu0
        %v4322 = vadd.f32 0.0, %v4321
        %v4323 = vpop.f32.mrb[0].mxu0
        %4324 = vmatprep.mubr.bf16.mxu0 %v4037
        %4325 = vmatmul.mubr.bf16.gmra.mrb[0].mxu0 %v4036
        %v4326 = vpop.f32.mrb[0].mxu0
        %v4327 = vadd.f32 0.0, %v4326
        %v4328 = vpop.f32.mrb[0].mxu0
        %v4329 = vpop.f32.mrb[0].mxu0
        %v4330 = vadd.f32 0.0, %v4329
        %v4331 = vpop.f32.mrb[0].mxu0
        %4332 = vmatprep.mubr.bf16.mxu0 %v4040
        %4333 = vmatmul.mubr.bf16.gmra.mrb[0].mxu0 %v4039
        %v4334 = vpop.f32.mrb[0].mxu0
        %v4335 = vadd.f32 0.0, %v4334
        %v4336 = vpop.f32.mrb[0].mxu0
        %v4337 = vpop.f32.mrb[0].mxu0
        %v4338 = vadd.f32 0.0, %v4337
        %v4339 = vpop.f32.mrb[0].mxu0
        %4340 = vmatprep.mubr.bf16.mxu0 %v4043
        %4341 = vmatmul.mubr.bf16.gmra.mrb[0].mxu0 %v4042
        %v4342 = vpop.f32.mrb[0].mxu0
        %v4343 = vadd.f32 0.0, %v4342
        %v4344 = vpop.f32.mrb[0].mxu0
        %v4345 = vpop.f32.mrb[0].mxu0
        %v4346 = vadd.f32 0.0, %v4345
        %v4347 = vpop.f32.mrb[0].mxu0
        %4348 = vmatprep.mubr.bf16.mxu0 %v4046
        %4349 = vmatmul.mubr.bf16.gmra.mrb[0].mxu0 %v4045
        %v4350 = vpop.f32.mrb[0].mxu0
        %v4351 = vadd.f32 0.0, %v4350
        %v4352 = vpop.f32.mrb[0].mxu0
        %v4353 = vpop.f32.mrb[0].mxu0
        %v4354 = vadd.f32 0.0, %v4353
        %v4355 = vpop.f32.mrb[0].mxu0
        %4356 = vmatprep.mubr.bf16.mxu0 %v4049
        %4357 = vmatmul.mubr.bf16.gmra.mrb[0].mxu0 %v4048
        %v4358 = vpop.f32.mrb[0].mxu0
        %v4359 = vadd.f32 0.0, %v4358
        %v4360 = vpop.f32.mrb[0].mxu0
        %v4361 = vpop.f32.mrb[0].mxu0
        %v4362 = vadd.f32 0.0, %v4361
        %v4363 = vpop.f32.mrb[0].mxu0
        %4364 = vmatprep.mubr.bf16.mxu0 %v4052
        %4365 = vmatmul.mubr.bf16.gmra.mrb[0].mxu0 %v4051
        %v4366 = vpop.f32.mrb[0].mxu0
        %v4367 = vadd.f32 0.0, %v4366
        %v4368 = vpop.f32.mrb[0].mxu0
        %v4369 = vpop.f32.mrb[0].mxu0
        %v4370 = vadd.f32 0.0, %v4369
        %v4371 = vpop.f32.mrb[0].mxu0
        %4372 = vmatprep.mubr.bf16.mxu0 %v4055
        %4373 = vmatmul.mubr.bf16.gmra.mrb[0].mxu0 %v4054
        %v4374 = vpop.f32.mrb[0].mxu0
        %v4375 = vadd.f32 0.0, %v4374
        %v4376 = vpop.f32.mrb[0].mxu0
        %v4377 = vpop.f32.mrb[0].mxu0
        %v4378 = vadd.f32 0.0, %v4377
        %v4379 = vpop.f32.mrb[0].mxu0
        %4380 = vmatprep.mubr.bf16.mxu0 %v4058
        %4381 = vmatmul.mubr.bf16.gmra.mrb[0].mxu0 %v4057
        %v4382 = vpop.f32.mrb[0].mxu0
        %v4383 = vadd.f32 0.0, %v4382
        %v4384 = vpop.f32.mrb[0].mxu0
        %v4385 = vpop.f32.mrb[0].mxu0
        %v4386 = vadd.f32 0.0, %v4385
        %v4387 = vpop.f32.mrb[0].mxu0
        %4388 = vmatprep.mubr.bf16.mxu0 %v4061
        %4389 = vmatmul.mubr.bf16.gmra.mrb[0].mxu0 %v4060
        %v4390 = vpop.f32.mrb[0].mxu0
        %v4391 = vadd.f32 0.0, %v4390
        %v4392 = vpop.f32.mrb[0].mxu0
        %v4393 = vpop.f32.mrb[0].mxu0
        %v4394 = vadd.f32 0.0, %v4393
        %v4395 = vpop.f32.mrb[0].mxu0
        %4396 = vmatprep.mubr.bf16.mxu0 %v4064
        %4397 = vmatmul.mubr.bf16.gmra.mrb[0].mxu0 %v4063
        %v4398 = vpop.f32.mrb[0].mxu0
        %v4399 = vadd.f32 0.0, %v4398
        %v4400 = vpop.f32.mrb[0].mxu0
        %v4401 = vpop.f32.mrb[0].mxu0
        %v4402 = vadd.f32 0.0, %v4401
        %v4403 = vpop.f32.mrb[0].mxu0
        %4404 = vmatprep.mubr.bf16.mxu0 %v4067
        %4405 = vmatmul.mubr.bf16.gmra.mrb[0].mxu0 %v4066
        %v4406 = vpop.f32.mrb[0].mxu0
        %v4407 = vadd.f32 0.0, %v4406
        %v4408 = vpop.f32.mrb[0].mxu0
        %v4409 = vpop.f32.mrb[0].mxu0
        %v4410 = vadd.f32 0.0, %v4409
        %v4411 = vpop.f32.mrb[0].mxu0
        %4412 = vmatprep.mubr.bf16.mxu0 %v4070
        %4413 = vmatmul.mubr.bf16.gmra.mrb[0].mxu0 %v4069
        %v4414 = vpop.f32.mrb[0].mxu0
        %v4415 = vadd.f32 0.0, %v4414
        %v4416 = vpop.f32.mrb[0].mxu0
        %v4417 = vpop.f32.mrb[0].mxu0
        %v4418 = vadd.f32 0.0, %v4417
        %v4419 = vpop.f32.mrb[0].mxu0
        %4420 = vmatprep.mubr.bf16.mxu0 %v4073
        %4421 = vmatmul.mubr.bf16.gmra.mrb[0].mxu0 %v4072
        %v4422 = vpop.f32.mrb[0].mxu0
        %v4423 = vadd.f32 0.0, %v4422
        %v4424 = vpop.f32.mrb[0].mxu0
        %v4425 = vpop.f32.mrb[0].mxu0
        %v4426 = vadd.f32 0.0, %v4425
        %v4427 = vpop.f32.mrb[0].mxu0
        %4428 = vdwg.mxu0
        %4429 = vmatprep.subr.bf16.mxu0 0
        %4430 = vmatpush1.bf16.msra.mxu0 %v4236
        %4431 = vmatprep.subr.bf16.mxu0 0
        %4432 = vmatpush1.bf16.msra.mxu0 %v4237
        %4433 = vmatprep.subr.bf16.mxu0 0
        %4434 = vmatpush1.bf16.msra.mxu0 %v4238
        %4435 = vmatprep.subr.bf16.mxu0 0
        %4436 = vmatpush1.bf16.msra.mxu0 %v4239
        %4437 = vmatprep.subr.bf16.mxu0 0
        %4438 = vmatpush1.bf16.msra.mxu0 %v4240
        %4439 = vmatprep.subr.bf16.mxu0 0
        %4440 = vmatpush1.bf16.msra.mxu0 %v4241
        %4441 = vmatprep.subr.bf16.mxu0 0
        %4442 = vmatpush1.bf16.msra.mxu0 %v4242
        %4443 = vmatprep.subr.bf16.mxu0 0
        %4444 = vmatpush1.bf16.msra.mxu0 %v4243
        %4445 = vmatprep.subr.bf16.mxu0 0
        %4446 = vmatpush1.bf16.msra.mxu0 0
        %4447 = vmatprep.subr.bf16.mxu0 0
        %4448 = vmatpush1.bf16.msra.mxu0 0
        %4449 = vmatprep.subr.bf16.mxu0 0
        %4450 = vmatpush1.bf16.msra.mxu0 0
        %4451 = vmatprep.subr.bf16.mxu0 0
        %4452 = vmatpush1.bf16.msra.mxu0 0
        %4453 = vmatprep.subr.bf16.mxu0 0
        %4454 = vmatpush1.bf16.msra.mxu0 0
        %4455 = vmatprep.subr.bf16.mxu0 0
        %4456 = vmatpush1.bf16.msra.mxu0 0
        %4457 = vmatprep.subr.bf16.mxu0 0
        %4458 = vmatpush1.bf16.msra.mxu0 0
        %4459 = vmatprep.subr.bf16.mxu0 0
        %4460 = vmatpush1.bf16.msra.mxu0 0
        %4461 = vmatprep.mubr.bf16.mxu0 0
        %4462 = vmatmul.mubr.bf16.gmra.mrb[0].mxu0 %v4029
        %v4463 = vpop.f32.mrb[0].mxu0
        %v4464 = vadd.f32 %v4303, %v4463
        %v4465 = vpop.f32.mrb[0].mxu0
        %v4466 = vpop.f32.mrb[0].mxu0
        %v4467 = vadd.f32 %v4306, %v4466
        %v4468 = vpop.f32.mrb[0].mxu0
        %4469 = vmatprep.mubr.bf16.mxu0 0
        %4470 = vmatmul.mubr.bf16.gmra.mrb[0].mxu0 %v4032
        %v4471 = vpop.f32.mrb[0].mxu0
        %v4472 = vadd.f32 %v4311, %v4471
        %v4473 = vpop.f32.mrb[0].mxu0
        %v4474 = vpop.f32.mrb[0].mxu0
        %v4475 = vadd.f32 %v4314, %v4474
        %v4476 = vpop.f32.mrb[0].mxu0
        %4477 = vmatprep.mubr.bf16.mxu0 0
        %4478 = vmatmul.mubr.bf16.gmra.mrb[0].mxu0 %v4035
        %v4479 = vpop.f32.mrb[0].mxu0
        %v4480 = vadd.f32 %v4319, %v4479
        %v4481 = vpop.f32.mrb[0].mxu0
        %v4482 = vpop.f32.mrb[0].mxu0
        %v4483 = vadd.f32 %v4322, %v4482
        %v4484 = vpop.f32.mrb[0].mxu0
        %4485 = vmatprep.mubr.bf16.mxu0 0
        %4486 = vmatmul.mubr.bf16.gmra.mrb[0].mxu0 %v4038
        %v4487 = vpop.f32.mrb[0].mxu0
        %v4488 = vadd.f32 %v4327, %v4487
        %v4489 = vpop.f32.mrb[0].mxu0
        %v4490 = vpop.f32.mrb[0].mxu0
        %v4491 = vadd.f32 %v4330, %v4490
        %v4492 = vpop.f32.mrb[0].mxu0
        %4493 = vmatprep.mubr.bf16.mxu0 0
        %4494 = vmatmul.mubr.bf16.gmra.mrb[0].mxu0 %v4041
        %v4495 = vpop.f32.mrb[0].mxu0
        %v4496 = vadd.f32 %v4335, %v4495
        %v4497 = vpop.f32.mrb[0].mxu0
        %v4498 = vpop.f32.mrb[0].mxu0
        %v4499 = vadd.f32 %v4338, %v4498
        %v4500 = vpop.f32.mrb[0].mxu0
        %4501 = vmatprep.mubr.bf16.mxu0 0
        %4502 = vmatmul.mubr.bf16.gmra.mrb[0].mxu0 %v4044
        %v4503 = vpop.f32.mrb[0].mxu0
        %v4504 = vadd.f32 %v4343, %v4503
        %v4505 = vpop.f32.mrb[0].mxu0
        %v4506 = vpop.f32.mrb[0].mxu0
        %v4507 = vadd.f32 %v4346, %v4506
        %v4508 = vpop.f32.mrb[0].mxu0
        %4509 = vmatprep.mubr.bf16.mxu0 0
        %4510 = vmatmul.mubr.bf16.gmra.mrb[0].mxu0 %v4047
        %v4511 = vpop.f32.mrb[0].mxu0
        %v4512 = vadd.f32 %v4351, %v4511
        %v4513 = vpop.f32.mrb[0].mxu0
        %v4514 = vpop.f32.mrb[0].mxu0
        %v4515 = vadd.f32 %v4354, %v4514
        %v4516 = vpop.f32.mrb[0].mxu0
        %4517 = vmatprep.mubr.bf16.mxu0 0
        %4518 = vmatmul.mubr.bf16.gmra.mrb[0].mxu0 %v4050
        %v4519 = vpop.f32.mrb[0].mxu0
        %v4520 = vadd.f32 %v4359, %v4519
        %v4521 = vpop.f32.mrb[0].mxu0
        %v4522 = vpop.f32.mrb[0].mxu0
        %v4523 = vadd.f32 %v4362, %v4522
        %v4524 = vpop.f32.mrb[0].mxu0
        %4525 = vmatprep.mubr.bf16.mxu0 0
        %4526 = vmatmul.mubr.bf16.gmra.mrb[0].mxu0 %v4053
        %v4527 = vpop.f32.mrb[0].mxu0
        %v4528 = vadd.f32 %v4367, %v4527
        %v4529 = vpop.f32.mrb[0].mxu0
        %v4530 = vpop.f32.mrb[0].mxu0
        %v4531 = vadd.f32 %v4370, %v4530
        %v4532 = vpop.f32.mrb[0].mxu0
        %4533 = vmatprep.mubr.bf16.mxu0 0
        %4534 = vmatmul.mubr.bf16.gmra.mrb[0].mxu0 %v4056
        %v4535 = vpop.f32.mrb[0].mxu0
        %v4536 = vadd.f32 %v4375, %v4535
        %v4537 = vpop.f32.mrb[0].mxu0
        %v4538 = vpop.f32.mrb[0].mxu0
        %v4539 = vadd.f32 %v4378, %v4538
        %v4540 = vpop.f32.mrb[0].mxu0
        %4541 = vmatprep.mubr.bf16.mxu0 0
        %4542 = vmatmul.mubr.bf16.gmra.mrb[0].mxu0 %v4059
        %v4543 = vpop.f32.mrb[0].mxu0
        %v4544 = vadd.f32 %v4383, %v4543
        %v4545 = vpop.f32.mrb[0].mxu0
        %v4546 = vpop.f32.mrb[0].mxu0
        %v4547 = vadd.f32 %v4386, %v4546
        %v4548 = vpop.f32.mrb[0].mxu0
        %4549 = vmatprep.mubr.bf16.mxu0 0
        %4550 = vmatmul.mubr.bf16.gmra.mrb[0].mxu0 %v4062
        %v4551 = vpop.f32.mrb[0].mxu0
        %v4552 = vadd.f32 %v4391, %v4551
        %v4553 = vpop.f32.mrb[0].mxu0
        %v4554 = vpop.f32.mrb[0].mxu0
        %v4555 = vadd.f32 %v4394, %v4554
        %v4556 = vpop.f32.mrb[0].mxu0
        %4557 = vmatprep.mubr.bf16.mxu0 0
        %4558 = vmatmul.mubr.bf16.gmra.mrb[0].mxu0 %v4065
        %v4559 = vpop.f32.mrb[0].mxu0
        %v4560 = vadd.f32 %v4399, %v4559
        %v4561 = vpop.f32.mrb[0].mxu0
        %v4562 = vpop.f32.mrb[0].mxu0
        %v4563 = vadd.f32 %v4402, %v4562
        %v4564 = vpop.f32.mrb[0].mxu0
        %4565 = vmatprep.mubr.bf16.mxu0 0
        %4566 = vmatmul.mubr.bf16.gmra.mrb[0].mxu0 %v4068
        %v4567 = vpop.f32.mrb[0].mxu0
        %v4568 = vadd.f32 %v4407, %v4567
        %v4569 = vpop.f32.mrb[0].mxu0
        %v4570 = vpop.f32.mrb[0].mxu0
        %v4571 = vadd.f32 %v4410, %v4570
        %v4572 = vpop.f32.mrb[0].mxu0
        %4573 = vmatprep.mubr.bf16.mxu0 0
        %4574 = vmatmul.mubr.bf16.gmra.mrb[0].mxu0 %v4071
        %v4575 = vpop.f32.mrb[0].mxu0
        %v4576 = vadd.f32 %v4415, %v4575
        %v4577 = vpop.f32.mrb[0].mxu0
        %v4578 = vpop.f32.mrb[0].mxu0
        %v4579 = vadd.f32 %v4418, %v4578
        %v4580 = vpop.f32.mrb[0].mxu0
        %4581 = vmatprep.mubr.bf16.mxu0 0
        %4582 = vmatmul.mubr.bf16.gmra.mrb[0].mxu0 %v4074
        %v4583 = vpop.f32.mrb[0].mxu0
        %v4584 = vadd.f32 %v4423, %v4583
        %v4585 = vpop.f32.mrb[0].mxu0
        %v4586 = vpop.f32.mrb[0].mxu0
        %v4587 = vadd.f32 %v4426, %v4586
        %v4588 = vpop.f32.mrb[0].mxu0
        %4589 = vdwg.mxu0
        %v4590 = vadd.f32 %v3901, %v4464
        %v4591 = vadd.f32 %v3904, %v4467
        %v4592 = vadd.f32 %v3909, %v4472
        %v4593 = vadd.f32 %v3912, %v4475
        %v4594 = vadd.f32 %v3917, %v4480
        %v4595 = vadd.f32 %v3920, %v4483
        %v4596 = vadd.f32 %v3925, %v4488
        %v4597 = vadd.f32 %v3928, %v4491
        %v4598 = vadd.f32 %v3933, %v4496
        %v4599 = vadd.f32 %v3936, %v4499
        %v4600 = vadd.f32 %v3941, %v4504
        %v4601 = vadd.f32 %v3944, %v4507
        %v4602 = vadd.f32 %v3949, %v4512
        %v4603 = vadd.f32 %v3952, %v4515
        %v4604 = vadd.f32 %v3957, %v4520
        %v4605 = vadd.f32 %v3960, %v4523
        %v4606 = vadd.f32 %v3965, %v4528
        %v4607 = vadd.f32 %v3968, %v4531
        %v4608 = vadd.f32 %v3973, %v4536
        %v4609 = vadd.f32 %v3976, %v4539
        %v4610 = vadd.f32 %v3981, %v4544
        %v4611 = vadd.f32 %v3984, %v4547
        %v4612 = vadd.f32 %v3989, %v4552
        %v4613 = vadd.f32 %v3992, %v4555
        %v4614 = vadd.f32 %v3997, %v4560
        %v4615 = vadd.f32 %v4000, %v4563
        %v4616 = vadd.f32 %v4005, %v4568
        %v4617 = vadd.f32 %v4008, %v4571
        %v4618 = vadd.f32 %v4013, %v4576
        %v4619 = vadd.f32 %v4016, %v4579
        %v4620 = vadd.f32 %v4021, %v4584
        %v4621 = vadd.f32 %v4024, %v4587
        %v4622 = vld [vmem:[%s4] sm:$0x1]
        %v4624 = vlaneseq
        %v4625 = vshrl.u32 %v4624, 7
        %v4626 = vsub.s32 0, %v4625
        %v4627 = vrot.slane %v4622, %v4626
        %v4629 = vadd.f32 %v4590, %v4627
        %v4630 = vadd.f32 %v4591, %v4627
        %v4631 = vadd.f32 %v4592, %v4627
        %v4632 = vadd.f32 %v4593, %v4627
        %v4633 = vadd.f32 %v4594, %v4627
        %v4634 = vadd.f32 %v4595, %v4627
        %v4635 = vadd.f32 %v4596, %v4627
        %v4636 = vadd.f32 %v4597, %v4627
        %v4637 = vadd.f32 %v4598, %v4627
        %v4638 = vadd.f32 %v4599, %v4627
        %v4639 = vadd.f32 %v4600, %v4627
        %v4640 = vadd.f32 %v4601, %v4627
        %v4641 = vadd.f32 %v4602, %v4627
        %v4642 = vadd.f32 %v4603, %v4627
        %v4643 = vadd.f32 %v4604, %v4627
        %v4644 = vadd.f32 %v4605, %v4627
        %v4645 = vadd.f32 %v4606, %v4627
        %v4646 = vadd.f32 %v4607, %v4627
        %v4647 = vadd.f32 %v4608, %v4627
        %v4648 = vadd.f32 %v4609, %v4627
        %v4649 = vadd.f32 %v4610, %v4627
        %v4650 = vadd.f32 %v4611, %v4627
        %v4651 = vadd.f32 %v4612, %v4627
        %v4652 = vadd.f32 %v4613, %v4627
        %v4653 = vadd.f32 %v4614, %v4627
        %v4654 = vadd.f32 %v4615, %v4627
        %v4655 = vadd.f32 %v4616, %v4627
        %v4656 = vadd.f32 %v4617, %v4627
        %v4657 = vadd.f32 %v4618, %v4627
        %v4658 = vadd.f32 %v4619, %v4627
        %v4659 = vadd.f32 %v4620, %v4627
        %v4660 = vadd.f32 %v4621, %v4627
        %v4661 = vadd.f32 %v4629, %v4630
        %v4662 = vadd.f32 %v4661, %v4631
        %v4663 = vadd.f32 %v4662, %v4632
        %v4664 = vadd.f32 %v4663, %v4633
        %v4665 = vadd.f32 %v4664, %v4634
        %v4666 = vadd.f32 %v4665, %v4635
        %v4667 = vadd.f32 %v4666, %v4636
        %v4668 = vadd.f32 %v4667, %v4637
        %v4669 = vadd.f32 %v4668, %v4638
        %v4670 = vadd.f32 %v4669, %v4639
        %v4671 = vadd.f32 %v4670, %v4640
        %v4672 = vadd.f32 %v4671, %v4641
        %v4673 = vadd.f32 %v4672, %v4642
        %v4674 = vadd.f32 %v4673, %v4643
        %v4675 = vadd.f32 %v4674, %v4644
        %v4676 = vadd.f32 %v4675, %v4645
        %v4677 = vadd.f32 %v4676, %v4646
        %v4678 = vadd.f32 %v4677, %v4647
        %v4679 = vadd.f32 %v4678, %v4648
        %v4680 = vadd.f32 %v4679, %v4649
        %v4681 = vadd.f32 %v4680, %v4650
        %v4682 = vadd.f32 %v4681, %v4651
        %v4683 = vadd.f32 %v4682, %v4652
        %v4684 = vadd.f32 %v4683, %v4653
        %v4685 = vadd.f32 %v4684, %v4654
        %v4686 = vadd.f32 %v4685, %v4655
        %v4687 = vadd.f32 %v4686, %v4656
        %v4688 = vadd.f32 %v4687, %v4657
        %v4689 = vadd.f32 %v4688, %v4658
        %v4690 = vadd.f32 %v4689, %v4659
        %v4691 = vadd.f32 %v4690, %v4660
        %v4692 = vrot.slane %v4691, 4
        %v4693 = vadd.f32 %v4691, %v4692
        %v4694 = vrot.slane %v4693, 2
        %v4695 = vadd.f32 %v4693, %v4694
        %v4696 = vrot.slane %v4695, 1
        %v4697 = vadd.f32 %v4695, %v4696
        %v4698 = vmul.f32 %v4697, 0.00390625
        %v4699 = vmul.f32 %v4629, %v4629
        %v4700 = vmul.f32 %v4630, %v4630
        %v4701 = vmul.f32 %v4631, %v4631
        %v4702 = vmul.f32 %v4632, %v4632
        %v4703 = vmul.f32 %v4633, %v4633
        %v4704 = vmul.f32 %v4634, %v4634
        %v4705 = vmul.f32 %v4635, %v4635
        %v4706 = vmul.f32 %v4636, %v4636
        %v4707 = vmul.f32 %v4637, %v4637
        %v4708 = vmul.f32 %v4638, %v4638
        %v4709 = vmul.f32 %v4639, %v4639
        %v4710 = vmul.f32 %v4640, %v4640
        %v4711 = vmul.f32 %v4641, %v4641
        %v4712 = vmul.f32 %v4642, %v4642
        %v4713 = vmul.f32 %v4643, %v4643
        %v4714 = vmul.f32 %v4644, %v4644
        %v4715 = vmul.f32 %v4645, %v4645
        %v4716 = vmul.f32 %v4646, %v4646
        %v4717 = vmul.f32 %v4647, %v4647
        %v4718 = vmul.f32 %v4648, %v4648
        %v4719 = vmul.f32 %v4649, %v4649
        %v4720 = vmul.f32 %v4650, %v4650
        %v4721 = vmul.f32 %v4651, %v4651
        %v4722 = vmul.f32 %v4652, %v4652
        %v4723 = vmul.f32 %v4653, %v4653
        %v4724 = vmul.f32 %v4654, %v4654
        %v4725 = vmul.f32 %v4655, %v4655
        %v4726 = vmul.f32 %v4656, %v4656
        %v4727 = vmul.f32 %v4657, %v4657
        %v4728 = vmul.f32 %v4658, %v4658
        %v4729 = vmul.f32 %v4659, %v4659
        %v4730 = vmul.f32 %v4660, %v4660
        %v4731 = vadd.f32 %v4699, %v4700
        %v4732 = vadd.f32 %v4731, %v4701
        %v4733 = vadd.f32 %v4732, %v4702
        %v4734 = vadd.f32 %v4733, %v4703
        %v4735 = vadd.f32 %v4734, %v4704
        %v4736 = vadd.f32 %v4735, %v4705
        %v4737 = vadd.f32 %v4736, %v4706
        %v4738 = vadd.f32 %v4737, %v4707
        %v4739 = vadd.f32 %v4738, %v4708
        %v4740 = vadd.f32 %v4739, %v4709
        %v4741 = vadd.f32 %v4740, %v4710
        %v4742 = vadd.f32 %v4741, %v4711
        %v4743 = vadd.f32 %v4742, %v4712
        %v4744 = vadd.f32 %v4743, %v4713
        %v4745 = vadd.f32 %v4744, %v4714
        %v4746 = vadd.f32 %v4745, %v4715
        %v4747 = vadd.f32 %v4746, %v4716
        %v4748 = vadd.f32 %v4747, %v4717
        %v4749 = vadd.f32 %v4748, %v4718
        %v4750 = vadd.f32 %v4749, %v4719
        %v4751 = vadd.f32 %v4750, %v4720
        %v4752 = vadd.f32 %v4751, %v4721
        %v4753 = vadd.f32 %v4752, %v4722
        %v4754 = vadd.f32 %v4753, %v4723
        %v4755 = vadd.f32 %v4754, %v4724
        %v4756 = vadd.f32 %v4755, %v4725
        %v4757 = vadd.f32 %v4756, %v4726
        %v4758 = vadd.f32 %v4757, %v4727
        %v4759 = vadd.f32 %v4758, %v4728
        %v4760 = vadd.f32 %v4759, %v4729
        %v4761 = vadd.f32 %v4760, %v4730
        %v4762 = vrot.slane %v4761, 4
        %v4763 = vadd.f32 %v4761, %v4762
        %v4764 = vrot.slane %v4763, 2
        %v4765 = vadd.f32 %v4763, %v4764
        %v4766 = vrot.slane %v4765, 1
        %v4767 = vadd.f32 %v4765, %v4766
        %v4768 = vmul.f32 %v4767, 0.00390625
        %v4769 = vmul.f32 %v4698, %v4698
        %v4770 = vsub.f32 %v4768, %v4769
        %v4771 = vmax.f32 %v4770, 0.0
        %v4772 = vsub.f32 %v4629, %v4698
        %v4773 = vsub.f32 %v4630, %v4698
        %v4774 = vsub.f32 %v4631, %v4698
        %v4775 = vsub.f32 %v4632, %v4698
        %v4776 = vsub.f32 %v4633, %v4698
        %v4777 = vsub.f32 %v4634, %v4698
        %v4778 = vsub.f32 %v4635, %v4698
        %v4779 = vsub.f32 %v4636, %v4698
        %v4780 = vsub.f32 %v4637, %v4698
        %v4781 = vsub.f32 %v4638, %v4698
        %v4782 = vsub.f32 %v4639, %v4698
        %v4783 = vsub.f32 %v4640, %v4698
        %v4784 = vsub.f32 %v4641, %v4698
        %v4785 = vsub.f32 %v4642, %v4698
        %v4786 = vsub.f32 %v4643, %v4698
        %v4787 = vsub.f32 %v4644, %v4698
        %v4788 = vsub.f32 %v4645, %v4698
        %v4789 = vsub.f32 %v4646, %v4698
        %v4790 = vsub.f32 %v4647, %v4698
        %v4791 = vsub.f32 %v4648, %v4698
        %v4792 = vsub.f32 %v4649, %v4698
        %v4793 = vsub.f32 %v4650, %v4698
        %v4794 = vsub.f32 %v4651, %v4698
        %v4795 = vsub.f32 %v4652, %v4698
        %v4796 = vsub.f32 %v4653, %v4698
        %v4797 = vsub.f32 %v4654, %v4698
        %v4798 = vsub.f32 %v4655, %v4698
        %v4799 = vsub.f32 %v4656, %v4698
        %v4800 = vsub.f32 %v4657, %v4698
        %v4801 = vsub.f32 %v4658, %v4698
        %v4802 = vsub.f32 %v4659, %v4698
        %v4803 = vsub.f32 %v4660, %v4698
        %v4804 = vadd.f32 %v4771, 1e-05
        %v4805 = vrsqrt.pop %v4804
        %v4806 = vmul.f32 %v4772, %v4805
        %v4807 = vmul.f32 %v4773, %v4805
        %v4808 = vmul.f32 %v4774, %v4805
        %v4809 = vmul.f32 %v4775, %v4805
        %v4810 = vmul.f32 %v4776, %v4805
        %v4811 = vmul.f32 %v4777, %v4805
        %v4812 = vmul.f32 %v4778, %v4805
        %v4813 = vmul.f32 %v4779, %v4805
        %v4814 = vmul.f32 %v4780, %v4805
        %v4815 = vmul.f32 %v4781, %v4805
        %v4816 = vmul.f32 %v4782, %v4805
        %v4817 = vmul.f32 %v4783, %v4805
        %v4818 = vmul.f32 %v4784, %v4805
        %v4819 = vmul.f32 %v4785, %v4805
        %v4820 = vmul.f32 %v4786, %v4805
        %v4821 = vmul.f32 %v4787, %v4805
        %v4822 = vmul.f32 %v4788, %v4805
        %v4823 = vmul.f32 %v4789, %v4805
        %v4824 = vmul.f32 %v4790, %v4805
        %v4825 = vmul.f32 %v4791, %v4805
        %v4826 = vmul.f32 %v4792, %v4805
        %v4827 = vmul.f32 %v4793, %v4805
        %v4828 = vmul.f32 %v4794, %v4805
        %v4829 = vmul.f32 %v4795, %v4805
        %v4830 = vmul.f32 %v4796, %v4805
        %v4831 = vmul.f32 %v4797, %v4805
        %v4832 = vmul.f32 %v4798, %v4805
        %v4833 = vmul.f32 %v4799, %v4805
        %v4834 = vmul.f32 %v4800, %v4805
        %v4835 = vmul.f32 %v4801, %v4805
        %v4836 = vmul.f32 %v4802, %v4805
        %v4837 = vmul.f32 %v4803, %v4805
        %v4838 = vld [vmem:[%s237] sm:$0xff]
        %v4839 = vld [vmem:[%s237 + $0x8] sm:$0xff]
        %v4840 = vld [vmem:[%s237 + $0x10] sm:$0xff]
        %v4841 = vld [vmem:[%s237 + $0x18] sm:$0xff]
        %v4842 = vld [vmem:[%s237 + $0x20] sm:$0xff]
        %v4843 = vld [vmem:[%s237 + $0x28] sm:$0xff]
        %v4844 = vld [vmem:[%s237 + $0x30] sm:$0xff]
        %v4845 = vld [vmem:[%s237 + $0x38] sm:$0xff]
        %v4846 = vld [vmem:[%s237 + $0x40] sm:$0xff]
        %v4847 = vld [vmem:[%s237 + $0x48] sm:$0xff]
        %v4848 = vld [vmem:[%s237 + $0x50] sm:$0xff]
        %v4849 = vld [vmem:[%s237 + $0x58] sm:$0xff]
        %v4850 = vld [vmem:[%s237 + $0x60] sm:$0xff]
        %v4851 = vld [vmem:[%s237 + $0x68] sm:$0xff]
        %v4852 = vld [vmem:[%s237 + $0x70] sm:$0xff]
        %v4853 = vld [vmem:[%s237 + $0x78] sm:$0xff]
        %v4854 = vld [vmem:[%s237 + $0x80] sm:$0xff]
        %v4855 = vld [vmem:[%s237 + $0x88] sm:$0xff]
        %v4856 = vld [vmem:[%s237 + $0x90] sm:$0xff]
        %v4857 = vld [vmem:[%s237 + $0x98] sm:$0xff]
        %v4858 = vld [vmem:[%s237 + $0xa0] sm:$0xff]
        %v4859 = vld [vmem:[%s237 + $0xa8] sm:$0xff]
        %v4860 = vld [vmem:[%s237 + $0xb0] sm:$0xff]
        %v4861 = vld [vmem:[%s237 + $0xb8] sm:$0xff]
        %v4862 = vld [vmem:[%s237 + $0xc0] sm:$0xff]
        %v4863 = vld [vmem:[%s237 + $0xc8] sm:$0xff]
        %v4864 = vld [vmem:[%s237 + $0xd0] sm:$0xff]
        %v4865 = vld [vmem:[%s237 + $0xd8] sm:$0xff]
        %v4866 = vld [vmem:[%s237 + $0xe0] sm:$0xff]
        %v4867 = vld [vmem:[%s237 + $0xe8] sm:$0xff]
        %v4868 = vld [vmem:[%s237 + $0xf0] sm:$0xff]
        %v4869 = vld [vmem:[%s237 + $0xf8] sm:$0xff]
        %v4870 = vadd.f32 %v4838, %v4806
        %v4871 = vadd.f32 %v4839, %v4807
        %v4872 = vadd.f32 %v4840, %v4808
        %v4873 = vadd.f32 %v4841, %v4809
        %v4874 = vadd.f32 %v4842, %v4810
        %v4875 = vadd.f32 %v4843, %v4811
        %v4876 = vadd.f32 %v4844, %v4812
        %v4877 = vadd.f32 %v4845, %v4813
        %v4878 = vadd.f32 %v4846, %v4814
        %v4879 = vadd.f32 %v4847, %v4815
        %v4880 = vadd.f32 %v4848, %v4816
        %v4881 = vadd.f32 %v4849, %v4817
        %v4882 = vadd.f32 %v4850, %v4818
        %v4883 = vadd.f32 %v4851, %v4819
        %v4884 = vadd.f32 %v4852, %v4820
        %v4885 = vadd.f32 %v4853, %v4821
        %v4886 = vadd.f32 %v4854, %v4822
        %v4887 = vadd.f32 %v4855, %v4823
        %v4888 = vadd.f32 %v4856, %v4824
        %v4889 = vadd.f32 %v4857, %v4825
        %v4890 = vadd.f32 %v4858, %v4826
        %v4891 = vadd.f32 %v4859, %v4827
        %v4892 = vadd.f32 %v4860, %v4828
        %v4893 = vadd.f32 %v4861, %v4829
        %v4894 = vadd.f32 %v4862, %v4830
        %v4895 = vadd.f32 %v4863, %v4831
        %v4896 = vadd.f32 %v4864, %v4832
        %v4897 = vadd.f32 %v4865, %v4833
        %v4898 = vadd.f32 %v4866, %v4834
        %v4899 = vadd.f32 %v4867, %v4835
        %v4900 = vadd.f32 %v4868, %v4836
        %v4901 = vadd.f32 %v4869, %v4837
        %4902 = vst [vmem:[%s271] sm:$0xff] %v4870
        %4903 = vst [vmem:[%s271 + $0x8] sm:$0xff] %v4871
        %4904 = vst [vmem:[%s271 + $0x10] sm:$0xff] %v4872
        %4905 = vst [vmem:[%s271 + $0x18] sm:$0xff] %v4873
        %4906 = vst [vmem:[%s271 + $0x20] sm:$0xff] %v4874
        %4907 = vst [vmem:[%s271 + $0x28] sm:$0xff] %v4875
        %4908 = vst [vmem:[%s271 + $0x30] sm:$0xff] %v4876
        %4909 = vst [vmem:[%s271 + $0x38] sm:$0xff] %v4877
        %4910 = vst [vmem:[%s271 + $0x40] sm:$0xff] %v4878
        %4911 = vst [vmem:[%s271 + $0x48] sm:$0xff] %v4879
        %4912 = vst [vmem:[%s271 + $0x50] sm:$0xff] %v4880
        %4913 = vst [vmem:[%s271 + $0x58] sm:$0xff] %v4881
        %4914 = vst [vmem:[%s271 + $0x60] sm:$0xff] %v4882
        %4915 = vst [vmem:[%s271 + $0x68] sm:$0xff] %v4883
        %4916 = vst [vmem:[%s271 + $0x70] sm:$0xff] %v4884
        %4917 = vst [vmem:[%s271 + $0x78] sm:$0xff] %v4885
        %4918 = vst [vmem:[%s271 + $0x80] sm:$0xff] %v4886
        %4919 = vst [vmem:[%s271 + $0x88] sm:$0xff] %v4887
        %4920 = vst [vmem:[%s271 + $0x90] sm:$0xff] %v4888
        %4921 = vst [vmem:[%s271 + $0x98] sm:$0xff] %v4889
        %4922 = vst [vmem:[%s271 + $0xa0] sm:$0xff] %v4890
        %4923 = vst [vmem:[%s271 + $0xa8] sm:$0xff] %v4891
        %4924 = vst [vmem:[%s271 + $0xb0] sm:$0xff] %v4892
        %4925 = vst [vmem:[%s271 + $0xb8] sm:$0xff] %v4893
        %4926 = vst [vmem:[%s271 + $0xc0] sm:$0xff] %v4894
        %4927 = vst [vmem:[%s271 + $0xc8] sm:$0xff] %v4895
        %4928 = vst [vmem:[%s271 + $0xd0] sm:$0xff] %v4896
        %4929 = vst [vmem:[%s271 + $0xd8] sm:$0xff] %v4897
        %4930 = vst [vmem:[%s271 + $0xe0] sm:$0xff] %v4898
        %4931 = vst [vmem:[%s271 + $0xe8] sm:$0xff] %v4899
        %4932 = vst [vmem:[%s271 + $0xf0] sm:$0xff] %v4900
        %4933 = vst [vmem:[%s271 + $0xf8] sm:$0xff] %v4901
        %s4934 = sand.u32 %s141, 1
        %s4935 = scalar_lea.sflag [#allocation5], %s4934
        %s4936 = sand.u32 %s141, 1
        %s4937 = smul.addr %s4936, 256
        %s4938 = scalar_lea.vmem [#allocation9], %s4937
        // Predicated region
        $region53: #{tpu_custom_call.1} parent=39 // pred_check
          %p4939 = pneg %p151
        $region54: #{tpu_custom_call.1} parent=39 // pred_check_branch
          %4941 = sbr.rel (%p4939) target = $region56
        $region55: #{tpu_custom_call.1} parent=39 // pred_region
          %s4943 = ssub.s32 4096, 4096
          %4944 = vsyncadd %s4935, %s4943
          %s4945 = smul.addr %s23, 32
          %s4946 = smul.addr %s4945, 128
          %s4947 = scalar_lea.hbm %s5, %s4946
          %s4948 = sshll.u32 %s4938, 4
          %s4949 = int_to_ptr.vmem [resolvable:$true] %s4948
          %4954 = dma.vmem_to_hbm [thread:$0]  %s4949, 4096, %s4947, %s4935, 128, 128, 8
        $region56: #{tpu_custom_call.1} parent=39 // pred_fallthru
          _
      $region40: #{tpu_custom_call.1} parent=5 // pred_fallthru
        _
      %p4955 = scmp.le.s32.totalorder 2, %s18
      // Predicated region
      $region57: #{tpu_custom_call.1} parent=5 // pred_check
        %p4956 = pneg %p4955
      $region58: #{tpu_custom_call.1} parent=5 // pred_check_branch
        %4958 = sbr.rel (%p4956) target = $region60
      $region59: #{tpu_custom_call.1} parent=5 // pred_region
        %s4959 = ssub.s32 %s18, 2
        // Predicated region
        $region61: #{tpu_custom_call.1} parent=59 // pred_check
          %p4960 = pneg %p157
        $region62: #{tpu_custom_call.1} parent=59 // pred_check_branch
          %4962 = sbr.rel (%p4960) target = $region64
        $region63: #{tpu_custom_call.1} parent=59 // pred_region
          %s4963 = sand.u32 %s142, 1
          %s4964 = scalar_lea.sflag [#allocation5], %s4963
          %s4965 = sand.u32 %s142, 1
          %s4966 = smul.addr %s4965, 256
          %s4967 = scalar_lea.vmem [#allocation9], %s4966
          %4968 = dma.done %s4964, 4096
        $region64: #{tpu_custom_call.1} parent=59 // pred_fallthru
          _
      $region60: #{tpu_custom_call.1} parent=5 // pred_fallthru
        _
    $region6: #{tpu_custom_call.1} parent=1 // loop_footer
      %s22 = sadd.s32 1, %s18
    $region7: #{tpu_custom_call.1} parent=1 // loop_footer_branch
      %17 = sbr.rel target = $region3
    $region8: #{tpu_custom_call.1} parent=1 // loop_exit
      _
    %4969 = vsyncpa [#allocation4], 1
    %s4970 = scalar_lea.sflag [#allocation4], 1
    %4971 = vsyncpa %s4970, 1
    %4972 = vsyncpa [#allocation7], 1
    %4973 = vsyncpa [#allocation5], 1
    %s4974 = scalar_lea.sflag [#allocation5], 1
    %4975 = vsyncpa %s4974, 1

</llo_original>
